<compile_context>
chip_gen: v6e
topology: v6e:2x2x1
jax: 0.10.0
libtpu: 0.0.40
codegen_flags: <defaults>
</compile_context>

<pallas_src>
import functools

import jax
import jax.numpy as jnp
from jax.experimental import pallas as pl
from jax.experimental.pallas import tpu as pltpu


def _softplus(x):
    # numerically stable softplus = log(1 + exp(x))
    return jnp.logaddexp(x, 0.0)


def _round_up(n, m):
    return ((n + m - 1) // m) * m


def _tpu_geometry():
    """Best-effort chip geometry: (tensorcores per chip, MXU M width)."""
    num_cores, mxu_m = 1, 256
    try:
        kind = jax.devices()[0].device_kind.lower()
        if "lite" in kind or "v5e" in kind or "v2" in kind or "v3" in kind or "v4" in kind:
            mxu_m = 128           # 128-wide MXU generations
        if "v7" in kind:
            num_cores = 2         # 2 TensorCores per chip on v7x
    except Exception:
        pass
    return num_cores, mxu_m


def _pick_batch_tile(B, *, num_cores=1, mxu_m=256):
    # Priority 1: >= 2 grid steps per TensorCore so the x/eps DMAs are software
    #             pipelined (worth more than M-fill for this memory-bound kernel).
    # Priority 2: largest tile that fills, but does not over-fill, the MXU M axis
    #             (256 on v6e/v7x, 128 on v5e).  512-row tiles only add vreg/VMEM
    #             pressure and spill traffic.
    min_steps = 2 * max(num_cores, 1)
    cap = 256 if mxu_m >= 256 else 128
    candidates = [t for t in (256, 128, 64, 32, 16, 8) if t <= cap]
    for t in candidates:
        if B % t == 0 and B // t >= min_steps:
            return t
    for t in candidates:
        if B % t == 0:
            return t
    return B


# ---------------------------------------------------------------------------
# Kernel
# ---------------------------------------------------------------------------
def causal_vae_kernel(
    x_ref, eps_ref,
    w1_ref, b1_ref,          # encoder.fc1           (bf16 weight, f32 bias)
    wmulv_ref, bmulv_ref,    # fused fc_mu | fc_logvar, padded to [HP, 2*ZP]
    wd1_ref, bd1_ref,        # decoder.fc1, K padded to ZP
    wout_ref, bout_ref,      # decoder.fc_out
    xr_ref, zmulv_ref,       # outputs: x_recon [B, IP], packed [z | mu | logvar] [B, 3*ZP]
):
    bf16 = jnp.bfloat16
    x = x_ref[...]            # already bf16 (cast + zero-padded in the wrapper)
    eps = eps_ref[...]        # f32, zero-padded to ZP lanes

    # ---- Encoder fc1: bf16 operands, f32 accumulation on the MXU ----
    h = _softplus(
        jnp.dot(x, w1_ref[...], preferred_element_type=jnp.float32) + b1_ref[...]
    )

    # ---- Fused mu|logvar projection: single lane-dense N = 2*ZP matmul ----
    mulv = (
        jnp.dot(h.astype(bf16), wmulv_ref[...], preferred_element_type=jnp.float32)
        + bmulv_ref[...]
    )
    zp = mulv.shape[-1] // 2           # static; 128-aligned lane boundary
    mu = mulv[:, :zp]
    lv = mulv[:, zp:]

    # ---- Reparameterize: z = mu + eps * exp(0.5 * logvar) ----
    # Padded lanes stay exactly zero: mu_pad = 0, lv_pad = 0 (exp(0)=1), eps_pad = 0.
    z = mu + eps * jnp.exp(0.5 * lv)

    # ---- Decoder ----
    hd = _softplus(
        jnp.dot(z.astype(bf16), wd1_ref[...], preferred_element_type=jnp.float32)
        + bd1_ref[...]
    )
    xr = jax.nn.sigmoid(
        jnp.dot(hd.astype(bf16), wout_ref[...], preferred_element_type=jnp.float32)
        + bout_ref[...]
    )

    xr_ref[...] = xr
    # Packed lane-dense store: [z | mu | logvar], each slice a multiple of 128 lanes,
    # so every store is a full-width unmasked vst.
    zmulv_ref[:, :zp] = z
    zmulv_ref[:, zp:2 * zp] = mu
    zmulv_ref[:, 2 * zp:] = lv


# ---------------------------------------------------------------------------
# One-time weight packing (outside the jitted forward)
# ---------------------------------------------------------------------------
def prepare_params(params):
    """Pack / pad / bf16-cast the weights once.  Returns (prepped, dims)."""
    f32, bf16 = jnp.float32, jnp.bfloat16
    input_dim, hidden_dim = params["w1"].shape
    z_dim = params["wmu"].shape[1]
    ip = _round_up(input_dim, 128)
    hp = _round_up(hidden_dim, 128)
    zp = _round_up(z_dim, 128)

    w1 = jnp.zeros((ip, hp), bf16).at[:input_dim, :hidden_dim].set(params["w1"].astype(bf16))
    b1 = jnp.zeros((1, hp), f32).at[:, :hidden_dim].set(params["b1"].reshape(1, -1).astype(f32))

    wmulv = jnp.zeros((hp, 2 * zp), bf16)
    wmulv = wmulv.at[:hidden_dim, :z_dim].set(params["wmu"].astype(bf16))
    wmulv = wmulv.at[:hidden_dim, zp:zp + z_dim].set(params["wlv"].astype(bf16))
    bmulv = jnp.zeros((1, 2 * zp), f32)
    bmulv = bmulv.at[:, :z_dim].set(params["bmu"].reshape(1, -1).astype(f32))
    bmulv = bmulv.at[:, zp:zp + z_dim].set(params["blv"].reshape(1, -1).astype(f32))

    wd1 = jnp.zeros((zp, hp), bf16).at[:z_dim, :hidden_dim].set(params["wd1"].astype(bf16))
    bd1 = jnp.zeros((1, hp), f32).at[:, :hidden_dim].set(params["bd1"].reshape(1, -1).astype(f32))

    wout = jnp.zeros((hp, ip), bf16).at[:hidden_dim, :input_dim].set(params["wout"].astype(bf16))
    bout = jnp.zeros((1, ip), f32).at[:, :input_dim].set(params["bout"].reshape(1, -1).astype(f32))

    prepped = dict(w1=w1, b1=b1, wmulv=wmulv, bmulv=bmulv,
                   wd1=wd1, bd1=bd1, wout=wout, bout=bout)
    dims = dict(input_dim=input_dim, hidden_dim=hidden_dim, z_dim=z_dim,
                ip=ip, hp=hp, zp=zp)
    return prepped, dims


# ---------------------------------------------------------------------------
# Forward
# ---------------------------------------------------------------------------
@functools.partial(jax.jit, static_argnames=("input_dim", "z_dim", "batch_tile"))
def _causal_vae_forward_impl(x, eps, prepped, *, input_dim, z_dim, batch_tile):
    B = x.shape[0]
    ip, hp = prepped["w1"].shape
    zp = prepped["wmulv"].shape[1] // 2
    f32, bf16 = jnp.float32, jnp.bfloat16

    assert B % batch_tile == 0

    # Per-call layout plumbing only: cast x to bf16 (halves its DMA stream) and
    # zero-pad x / eps to lane-dense widths.
    x_pad = jnp.zeros((B, ip), bf16).at[:, :input_dim].set(x.astype(bf16))
    eps_pad = jnp.zeros((B, zp), f32).at[:, :z_dim].set(eps.astype(f32))

    grid = (B // batch_tile,)

    def batch_spec(feat):
        return pl.BlockSpec((batch_tile, feat), lambda i: (i, 0))

    def full_spec(shape):
        # Block-invariant operand: same (0, 0) block every grid step -> fetched once,
        # stays resident in VMEM.
        return pl.BlockSpec(shape, lambda i: (0, 0))

    out_shape = (
        jax.ShapeDtypeStruct((B, ip), f32),          # x_recon (padded lanes sliced off)
        jax.ShapeDtypeStruct((B, 3 * zp), f32),      # packed [z | mu | logvar]
    )

    flops = 2 * B * (ip * hp + hp * 2 * zp + zp * hp + hp * ip)
    # softplus = exp + log (x2 layers), exp for reparam, sigmoid = exp + reciprocal.
    transcendentals = B * (4 * hp + zp + 2 * ip)
    bytes_accessed = (
        x_pad.size * 2 + eps_pad.size * 4
        + sum(prepped[k].size * 2 for k in ("w1", "wmulv", "wd1", "wout"))
        + sum(prepped[k].size * 4 for k in ("b1", "bmulv", "bd1", "bout"))
        + B * ip * 4 + B * 3 * zp * 4
    )

    xr_pad, zmulv = pl.pallas_call(
        causal_vae_kernel,
        out_shape=out_shape,
        grid_spec=pltpu.PrefetchScalarGridSpec(
            num_scalar_prefetch=0,
            grid=grid,
            in_specs=[
                batch_spec(ip),                     # x (bf16, padded)
                batch_spec(zp),                     # eps (f32, padded)
                full_spec((ip, hp)),                # w1
                full_spec((1, hp)),                 # b1
                full_spec((hp, 2 * zp)),            # wmulv (fused mu|logvar)
                full_spec((1, 2 * zp)),             # bmulv
                full_spec((zp, hp)),                # wd1 (K padded to ZP)
                full_spec((1, hp)),                 # bd1
                full_spec((hp, ip)),                # wout
                full_spec((1, ip)),                 # bout
            ],
            out_specs=[
                batch_spec(ip),
                batch_spec(3 * zp),
            ],
        ),
        compiler_params=pltpu.CompilerParams(
            dimension_semantics=("parallel",),
        ),
        cost_estimate=pl.CostEstimate(
            flops=flops,
            transcendentals=transcendentals,
            bytes_accessed=bytes_accessed,
        ),
    )(x_pad, eps_pad,
      prepped["w1"], prepped["b1"], prepped["wmulv"], prepped["bmulv"],
      prepped["wd1"], prepped["bd1"], prepped["wout"], prepped["bout"])

    # Slice padded lanes back (free layout plumbing in the wrapper).
    xr = xr_pad[:, :input_dim]
    z = zmulv[:, :z_dim]
    mu = zmulv[:, zp:zp + z_dim]
    lv = zmulv[:, 2 * zp:2 * zp + z_dim]
    return xr, z, mu, lv


def causal_vae_forward(x, eps, prepped, dims, *, batch_tile=None):
    if batch_tile is None:
        num_cores, mxu_m = _tpu_geometry()
        batch_tile = _pick_batch_tile(x.shape[0], num_cores=num_cores, mxu_m=mxu_m)
    return _causal_vae_forward_impl(
        x, eps, prepped,
        input_dim=dims["input_dim"], z_dim=dims["z_dim"], batch_tile=batch_tile)


# ---------------------------------------------------------------------------
# Params / reference
# ---------------------------------------------------------------------------
def init_params(key, input_dim, z_dim, hidden_dim):
    ks = jax.random.split(key, 10)
    s = 0.05
    return {
        "w1":   s * jax.random.normal(ks[0], (input_dim, hidden_dim), jnp.float32),
        "b1":   s * jax.random.normal(ks[1], (hidden_dim,), jnp.float32),
        "wmu":  s * jax.random.normal(ks[2], (hidden_dim, z_dim), jnp.float32),
        "bmu":  s * jax.random.normal(ks[3], (z_dim,), jnp.float32),
        "wlv":  s * jax.random.normal(ks[4], (hidden_dim, z_dim), jnp.float32),
        "blv":  s * jax.random.normal(ks[5], (z_dim,), jnp.float32),
        "wd1":  s * jax.random.normal(ks[6], (z_dim, hidden_dim), jnp.float32),
        "bd1":  s * jax.random.normal(ks[7], (hidden_dim,), jnp.float32),
        "wout": s * jax.random.normal(ks[8], (hidden_dim, input_dim), jnp.float32),
        "bout": s * jax.random.normal(ks[9], (input_dim,), jnp.float32),
    }


def reference_forward(x, eps, p):
    # Pure-JAX reference with the SAME bf16-operand / f32-accumulate matmul numerics
    # as the kernel (padded columns/rows contribute exactly zero).
    bf16 = jnp.bfloat16

    def mm(a, w):
        return jnp.dot(a.astype(bf16), w.astype(bf16),
                       preferred_element_type=jnp.float32)

    h = jax.nn.softplus(mm(x, p["w1"]) + p["b1"])
    mu = mm(h, p["wmu"]) + p["bmu"]
    lv = mm(h, p["wlv"]) + p["blv"]
    z = mu + eps * jnp.exp(0.5 * lv)
    hd = jax.nn.softplus(mm(z, p["wd1"]) + p["bd1"])
    xr = jax.nn.sigmoid(mm(hd, p["wout"]) + p["bout"])
    return xr, z, mu, lv


if __name__ == "__main__":
    # Small shapes consistent with the module (z_dim=50->64, hidden_dim=400->128 scale).
    # B=512 gives multiple grid steps on every chip generation:
    #   v6e: tile=256 -> 2 steps; v5e: tile=128 -> 4 steps; v7x: tile=128 -> 4 steps
    #   (>=2 per TensorCore), so the x/eps DMAs are software-pipelined everywhere.
    B, INPUT_DIM, Z_DIM, HIDDEN_DIM = 512, 256, 64, 128

    key = jax.random.PRNGKey(0)
    k_x, k_eps, k_p = jax.random.split(key, 3)

    x = jax.random.normal(k_x, (B, INPUT_DIM), jnp.float32)
    # eps drawn outside the kernel (corresponds to torch.randn_like in reparameterize)
    eps = jax.random.normal(k_eps, (B, Z_DIM), jnp.float32)
    params = init_params(k_p, INPUT_DIM, Z_DIM, HIDDEN_DIM)

    # One-time weight packing / padding / bf16 cast (kept OUT of the jitted forward).
    prepped, dims = prepare_params(params)
    prepped = jax.tree_util.tree_map(jax.block_until_ready, prepped)

    outs = causal_vae_forward(x, eps, prepped, dims)
    jax.block_until_ready(outs)
    x_recon, z, z_mu, z_logvar = outs

    assert x_recon.shape == (B, INPUT_DIM)
    assert z.shape == (B, Z_DIM) and z_mu.shape == (B, Z_DIM) and z_logvar.shape == (B, Z_DIM)

    xr_ref, z_ref, mu_ref, lv_ref = reference_forward(x, eps, params)
    assert jnp.allclose(x_recon, xr_ref, atol=2e-3, rtol=2e-3)
    assert jnp.allclose(z, z_ref, atol=2e-3, rtol=2e-3)
    assert jnp.allclose(z_mu, mu_ref, atol=2e-3, rtol=2e-3)
    assert jnp.allclose(z_logvar, lv_ref, atol=2e-3, rtol=2e-3)

    print("KERNEL_OK")
</pallas_src>

<mosaic_0001>
module attributes {stable_mosaic.version = 11 : i64} {
  func.func @causal_vae_kernel(%arg0: i32, %arg1: memref<256x256xbf16, #tpu.memory_space<vmem>>, %arg2: memref<256x128xf32, #tpu.memory_space<vmem>>, %arg3: memref<256x128xbf16, #tpu.memory_space<vmem>>, %arg4: memref<1x128xf32, #tpu.memory_space<vmem>>, %arg5: memref<128x256xbf16, #tpu.memory_space<vmem>>, %arg6: memref<1x256xf32, #tpu.memory_space<vmem>>, %arg7: memref<128x128xbf16, #tpu.memory_space<vmem>>, %arg8: memref<1x128xf32, #tpu.memory_space<vmem>>, %arg9: memref<128x256xbf16, #tpu.memory_space<vmem>>, %arg10: memref<1x256xf32, #tpu.memory_space<vmem>>, %arg11: memref<256x256xf32, #tpu.memory_space<vmem>>, %arg12: memref<256x384xf32, #tpu.memory_space<vmem>>) attributes {dimension_semantics = [#tpu.dimension_semantics<parallel>], iteration_bounds = array<i64: 2>, scalar_prefetch = 0 : i64, scratch_operands = 0 : i64, tpu.core_type = #tpu.core_type<tc>, window_params = [{transform_indices = @transform_0, window_bounds = array<i64: 256, 256>}, {transform_indices = @transform_1, window_bounds = array<i64: 256, 128>}, {pipeline_mode = #tpu.pipeline_mode<synchronous>, transform_indices = @transform_2, window_bounds = array<i64: 256, 128>}, {pipeline_mode = #tpu.pipeline_mode<synchronous>, transform_indices = @transform_3, window_bounds = array<i64: 1, 128>}, {pipeline_mode = #tpu.pipeline_mode<synchronous>, transform_indices = @transform_4, window_bounds = array<i64: 128, 256>}, {pipeline_mode = #tpu.pipeline_mode<synchronous>, transform_indices = @transform_5, window_bounds = array<i64: 1, 256>}, {pipeline_mode = #tpu.pipeline_mode<synchronous>, transform_indices = @transform_6, window_bounds = array<i64: 128, 128>}, {pipeline_mode = #tpu.pipeline_mode<synchronous>, transform_indices = @transform_7, window_bounds = array<i64: 1, 128>}, {pipeline_mode = #tpu.pipeline_mode<synchronous>, transform_indices = @transform_8, window_bounds = array<i64: 128, 256>}, {pipeline_mode = #tpu.pipeline_mode<synchronous>, transform_indices = @transform_9, window_bounds = array<i64: 1, 256>}, {transform_indices = @transform_10, window_bounds = array<i64: 256, 256>}, {transform_indices = @transform_11, window_bounds = array<i64: 256, 384>}]} {
    %c0 = arith.constant 0 : index
    %c0_0 = arith.constant 0 : index
    %0 = vector.load %arg1[%c0, %c0_0] : memref<256x256xbf16, #tpu.memory_space<vmem>>, vector<256x256xbf16>
    %c0_1 = arith.constant 0 : index
    %c0_2 = arith.constant 0 : index
    %1 = vector.load %arg2[%c0_1, %c0_2] : memref<256x128xf32, #tpu.memory_space<vmem>>, vector<256x128xf32>
    %c0_3 = arith.constant 0 : index
    %c0_4 = arith.constant 0 : index
    %2 = vector.load %arg3[%c0_3, %c0_4] : memref<256x128xbf16, #tpu.memory_space<vmem>>, vector<256x128xbf16>
    %cst = arith.constant dense<0.000000e+00> : vector<256x128xf32>
    %3 = tpu.matmul %0, %2, %cst {dimension_numbers = #tpu.dot_dimension_numbers<[1], [0], [0], [1], [0, 0, 1, 1], [], []>} : vector<256x256xbf16>, vector<256x128xbf16>, vector<256x128xf32> -> vector<256x128xf32>
    %c0_5 = arith.constant 0 : index
    %c0_6 = arith.constant 0 : index
    %4 = vector.load %arg4[%c0_5, %c0_6] : memref<1x128xf32, #tpu.memory_space<vmem>>, vector<1x128xf32>
    %5 = vector.broadcast %4 : vector<1x128xf32> to vector<256x128xf32>
    %6 = arith.addf %3, %5 : vector<256x128xf32>
    %cst_7 = arith.constant 0.000000e+00 : f32
    %7 = vector.broadcast %cst_7 : f32 to vector<256x128xf32>
    %8 = arith.maximumf %6, %7 : vector<256x128xf32>
    %9 = vector.broadcast %cst_7 : f32 to vector<256x128xf32>
    %10 = arith.subf %6, %9 : vector<256x128xf32>
    %11 = arith.cmpf one, %10, %10 : vector<256x128xf32>
    %12 = vector.broadcast %cst_7 : f32 to vector<256x128xf32>
    %13 = arith.addf %6, %12 : vector<256x128xf32>
    %14 = math.absf %10 : vector<256x128xf32>
    %cst_8 = arith.constant 0.000000e+00 : f32
    %15 = vector.broadcast %cst_8 : f32 to vector<256x128xf32>
    %16 = arith.subf %15, %14 : vector<256x128xf32>
    %17 = math.exp %16 : vector<256x128xf32>
    %18 = math.log1p %17 : vector<256x128xf32>
    %19 = arith.addf %8, %18 : vector<256x128xf32>
    %20 = arith.select %11, %13, %19 : vector<256x128xi1>, vector<256x128xf32>
    %21 = arith.truncf %20 : vector<256x128xf32> to vector<256x128xbf16>
    %c0_9 = arith.constant 0 : index
    %c0_10 = arith.constant 0 : index
    %22 = vector.load %arg5[%c0_9, %c0_10] : memref<128x256xbf16, #tpu.memory_space<vmem>>, vector<128x256xbf16>
    %cst_11 = arith.constant dense<0.000000e+00> : vector<256x256xf32>
    %23 = tpu.matmul %21, %22, %cst_11 {dimension_numbers = #tpu.dot_dimension_numbers<[1], [0], [0], [1], [0, 0, 1, 1], [], []>} : vector<256x128xbf16>, vector<128x256xbf16>, vector<256x256xf32> -> vector<256x256xf32>
    %c0_12 = arith.constant 0 : index
    %c0_13 = arith.constant 0 : index
    %24 = vector.load %arg6[%c0_12, %c0_13] : memref<1x256xf32, #tpu.memory_space<vmem>>, vector<1x256xf32>
    %25 = vector.broadcast %24 : vector<1x256xf32> to vector<256x256xf32>
    %26 = arith.addf %23, %25 : vector<256x256xf32>
    %27 = vector.extract_strided_slice %26 {offsets = [0, 0], sizes = [256, 128], strides = [1, 1]} : vector<256x256xf32> to vector<256x128xf32>
    %28 = vector.extract_strided_slice %26 {offsets = [0, 128], sizes = [256, 128], strides = [1, 1]} : vector<256x256xf32> to vector<256x128xf32>
    %cst_14 = arith.constant 5.000000e-01 : f32
    %29 = vector.broadcast %cst_14 : f32 to vector<256x128xf32>
    %30 = arith.mulf %29, %28 : vector<256x128xf32>
    %31 = math.exp %30 : vector<256x128xf32>
    %32 = arith.mulf %1, %31 : vector<256x128xf32>
    %33 = arith.addf %27, %32 : vector<256x128xf32>
    %34 = arith.truncf %33 : vector<256x128xf32> to vector<256x128xbf16>
    %c0_15 = arith.constant 0 : index
    %c0_16 = arith.constant 0 : index
    %35 = vector.load %arg7[%c0_15, %c0_16] : memref<128x128xbf16, #tpu.memory_space<vmem>>, vector<128x128xbf16>
    %cst_17 = arith.constant dense<0.000000e+00> : vector<256x128xf32>
    %36 = tpu.matmul %34, %35, %cst_17 {dimension_numbers = #tpu.dot_dimension_numbers<[1], [0], [0], [1], [0, 0, 1, 1], [], []>} : vector<256x128xbf16>, vector<128x128xbf16>, vector<256x128xf32> -> vector<256x128xf32>
    %c0_18 = arith.constant 0 : index
    %c0_19 = arith.constant 0 : index
    %37 = vector.load %arg8[%c0_18, %c0_19] : memref<1x128xf32, #tpu.memory_space<vmem>>, vector<1x128xf32>
    %38 = vector.broadcast %37 : vector<1x128xf32> to vector<256x128xf32>
    %39 = arith.addf %36, %38 : vector<256x128xf32>
    %cst_20 = arith.constant 0.000000e+00 : f32
    %40 = vector.broadcast %cst_20 : f32 to vector<256x128xf32>
    %41 = arith.maximumf %39, %40 : vector<256x128xf32>
    %42 = vector.broadcast %cst_20 : f32 to vector<256x128xf32>
    %43 = arith.subf %39, %42 : vector<256x128xf32>
    %44 = arith.cmpf one, %43, %43 : vector<256x128xf32>
    %45 = vector.broadcast %cst_20 : f32 to vector<256x128xf32>
    %46 = arith.addf %39, %45 : vector<256x128xf32>
    %47 = math.absf %43 : vector<256x128xf32>
    %cst_21 = arith.constant 0.000000e+00 : f32
    %48 = vector.broadcast %cst_21 : f32 to vector<256x128xf32>
    %49 = arith.subf %48, %47 : vector<256x128xf32>
    %50 = math.exp %49 : vector<256x128xf32>
    %51 = math.log1p %50 : vector<256x128xf32>
    %52 = arith.addf %41, %51 : vector<256x128xf32>
    %53 = arith.select %44, %46, %52 : vector<256x128xi1>, vector<256x128xf32>
    %54 = arith.truncf %53 : vector<256x128xf32> to vector<256x128xbf16>
    %c0_22 = arith.constant 0 : index
    %c0_23 = arith.constant 0 : index
    %55 = vector.load %arg9[%c0_22, %c0_23] : memref<128x256xbf16, #tpu.memory_space<vmem>>, vector<128x256xbf16>
    %cst_24 = arith.constant dense<0.000000e+00> : vector<256x256xf32>
    %56 = tpu.matmul %54, %55, %cst_24 {dimension_numbers = #tpu.dot_dimension_numbers<[1], [0], [0], [1], [0, 0, 1, 1], [], []>} : vector<256x128xbf16>, vector<128x256xbf16>, vector<256x256xf32> -> vector<256x256xf32>
    %c0_25 = arith.constant 0 : index
    %c0_26 = arith.constant 0 : index
    %57 = vector.load %arg10[%c0_25, %c0_26] : memref<1x256xf32, #tpu.memory_space<vmem>>, vector<1x256xf32>
    %58 = vector.broadcast %57 : vector<1x256xf32> to vector<256x256xf32>
    %59 = arith.addf %56, %58 : vector<256x256xf32>
    %60 = arith.negf %59 : vector<256x256xf32>
    %61 = math.exp %60 : vector<256x256xf32>
    %cst_27 = arith.constant 1.000000e+00 : f32
    %62 = vector.broadcast %cst_27 : f32 to vector<256x256xf32>
    %63 = arith.addf %62, %61 : vector<256x256xf32>
    %64 = arith.divf %62, %63 : vector<256x256xf32>
    %c0_28 = arith.constant 0 : index
    %c0_29 = arith.constant 0 : index
    %65 = vector.load %arg11[%c0_28, %c0_29] : memref<256x256xf32, #tpu.memory_space<vmem>>, vector<256x256xf32>
    tpu.vector_store %arg11[%c0_28, %c0_29], %64 {strides = array<i32>} : memref<256x256xf32, #tpu.memory_space<vmem>>, vector<256x256xf32>,
    %c0_30 = arith.constant 0 : index
    %c0_31 = arith.constant 0 : index
    %66 = vector.load %arg12[%c0_30, %c0_31] : memref<256x384xf32, #tpu.memory_space<vmem>>, vector<256x128xf32>
    tpu.vector_store %arg12[%c0_30, %c0_31], %33 {strides = array<i32>} : memref<256x384xf32, #tpu.memory_space<vmem>>, vector<256x128xf32>,
    %c0_32 = arith.constant 0 : index
    %c128 = arith.constant 128 : index
    %67 = vector.load %arg12[%c0_32, %c128] : memref<256x384xf32, #tpu.memory_space<vmem>>, vector<256x128xf32>
    tpu.vector_store %arg12[%c0_32, %c128], %27 {strides = array<i32>} : memref<256x384xf32, #tpu.memory_space<vmem>>, vector<256x128xf32>,
    %c0_33 = arith.constant 0 : index
    %c256 = arith.constant 256 : index
    %68 = vector.load %arg12[%c0_33, %c256] : memref<256x384xf32, #tpu.memory_space<vmem>>, vector<256x128xf32>
    tpu.vector_store %arg12[%c0_33, %c256], %28 {strides = array<i32>} : memref<256x384xf32, #tpu.memory_space<vmem>>, vector<256x128xf32>,
    return
  }
  func.func @transform_0(%arg0: i32) -> (i32, i32) {
    %c0_i32 = arith.constant 0 : i32
    %c0_i32_0 = arith.constant 0 : i32
    return %arg0, %c0_i32 : i32, i32
  }
  func.func @transform_1(%arg0: i32) -> (i32, i32) {
    %c0_i32 = arith.constant 0 : i32
    %c0_i32_0 = arith.constant 0 : i32
    return %arg0, %c0_i32 : i32, i32
  }
  func.func @transform_2(%arg0: i32) -> (i32, i32) {
    %c0_i32 = arith.constant 0 : i32
    %c0_i32_0 = arith.constant 0 : i32
    %c0_i32_1 = arith.constant 0 : i32
    return %c0_i32, %c0_i32_0 : i32, i32
  }
  func.func @transform_3(%arg0: i32) -> (i32, i32) {
    %c0_i32 = arith.constant 0 : i32
    %c0_i32_0 = arith.constant 0 : i32
    %c0_i32_1 = arith.constant 0 : i32
    return %c0_i32, %c0_i32_0 : i32, i32
  }
  func.func @transform_4(%arg0: i32) -> (i32, i32) {
    %c0_i32 = arith.constant 0 : i32
    %c0_i32_0 = arith.constant 0 : i32
    %c0_i32_1 = arith.constant 0 : i32
    return %c0_i32, %c0_i32_0 : i32, i32
  }
  func.func @transform_5(%arg0: i32) -> (i32, i32) {
    %c0_i32 = arith.constant 0 : i32
    %c0_i32_0 = arith.constant 0 : i32
    %c0_i32_1 = arith.constant 0 : i32
    return %c0_i32, %c0_i32_0 : i32, i32
  }
  func.func @transform_6(%arg0: i32) -> (i32, i32) {
    %c0_i32 = arith.constant 0 : i32
    %c0_i32_0 = arith.constant 0 : i32
    %c0_i32_1 = arith.constant 0 : i32
    return %c0_i32, %c0_i32_0 : i32, i32
  }
  func.func @transform_7(%arg0: i32) -> (i32, i32) {
    %c0_i32 = arith.constant 0 : i32
    %c0_i32_0 = arith.constant 0 : i32
    %c0_i32_1 = arith.constant 0 : i32
    return %c0_i32, %c0_i32_0 : i32, i32
  }
  func.func @transform_8(%arg0: i32) -> (i32, i32) {
    %c0_i32 = arith.constant 0 : i32
    %c0_i32_0 = arith.constant 0 : i32
    %c0_i32_1 = arith.constant 0 : i32
    return %c0_i32, %c0_i32_0 : i32, i32
  }
  func.func @transform_9(%arg0: i32) -> (i32, i32) {
    %c0_i32 = arith.constant 0 : i32
    %c0_i32_0 = arith.constant 0 : i32
    %c0_i32_1 = arith.constant 0 : i32
    return %c0_i32, %c0_i32_0 : i32, i32
  }
  func.func @transform_10(%arg0: i32) -> (i32, i32) {
    %c0_i32 = arith.constant 0 : i32
    %c0_i32_0 = arith.constant 0 : i32
    return %arg0, %c0_i32 : i32, i32
  }
  func.func @transform_11(%arg0: i32) -> (i32, i32) {
    %c0_i32 = arith.constant 0 : i32
    %c0_i32_0 = arith.constant 0 : i32
    return %arg0, %c0_i32 : i32, i32
  }
}

</mosaic_0001>

<llo_original>
// kernel: _causal_vae_forward_impl.1
$region0: #{_causal_vae_forward_impl.1}
  #allocation0 [shape = 'u32[]', space=smem, size = 0x4, offset = 0x4, fixed_abs, tag = 'smem constant byte address 0x4 - core index']
  #allocation1 [shape = 'u32[144,128]{1,0:T(1,128)}', space=vmem, size = 0x12000, scoped, tag = 'internal scratch']
  %s0 = inlined_call_operand.vmem [shape: bf16[512,256], index: 0, kind: input, shape index: {}]
  %s1 = inlined_call_operand.vmem [shape: f32[512,128], index: 1, kind: input, shape index: {}]
  %s2 = inlined_call_operand.vmem [shape: bf16[256,128], index: 2, kind: input, shape index: {}]
  %s3 = inlined_call_operand.vmem [shape: f32[1,128], index: 3, kind: input, shape index: {}]
  %s4 = inlined_call_operand.vmem [shape: bf16[128,256], index: 4, kind: input, shape index: {}]
  %s5 = inlined_call_operand.vmem [shape: f32[1,256], index: 5, kind: input, shape index: {}]
  %s6 = inlined_call_operand.vmem [shape: bf16[128,128], index: 6, kind: input, shape index: {}]
  %s7 = inlined_call_operand.vmem [shape: f32[1,128], index: 7, kind: input, shape index: {}]
  %s8 = inlined_call_operand.vmem [shape: bf16[128,256], index: 8, kind: input, shape index: {}]
  %s9 = inlined_call_operand.vmem [shape: f32[1,256], index: 9, kind: input, shape index: {}]
  %s10 = inlined_call_operand.hbm [shape: f32[512,256], index: 10, kind: output, shape index: {0}]
  %s11 = inlined_call_operand.vmem [shape: f32[512,384], index: 11, kind: output, shape index: {1}]
  %12 = xla_tuple %s10, %s11
  %s13 = sld [smem:[#allocation0]]
  $region81: #{_causal_vae_forward_impl.1} parent=0
    _
  %s15 = ssub.s32 1, %s13
  %s16 = scalar_select 0, %s15, %s13
  $region1: #{_causal_vae_forward_impl.1} parent=0
    #allocation2 [shape = 'u8[524288]{0}', space=vmem, size = 0x80000, scoped, tag = 'output window, operand 0']
    #allocation3 [shape = 's32[2]{0}', space=sflag, size = 0x8, scoped, tag = 'scoped memory for _causal_vae_forward_impl.1']
    %17 = vsyncpa [#allocation3], 0
    %s18 = scalar_lea.sflag [#allocation3], 1
    %19 = vsyncpa %s18, 0
    loop: start=0, step=1, limit=4
    $region2: #{_causal_vae_forward_impl.1} parent=1 // loop_pre_header
      _
    $region3: #{_causal_vae_forward_impl.1} parent=1 // loop_header
      %s21 = sphi 0, %s25
      %p22 = scmp.ge.s32.totalorder %s21, 4
      %s31 = sphi 0, %s33
      %s34 = sphi 0, %s31
      %s35 = sphi 0, %s34
      %s51 = sphi 0, %s35
      %s57 = sphi 0, %s59
      %s60 = sphi 0, %s57
      %s61 = sphi 0, %s60
      %s77 = sphi 0, %s61
      %s81 = sphi 0, %s81
      %s83 = sphi 0, %s81
      %s84 = sphi 0, %s83
      %s98 = sphi 0, %s84
      %s102 = sphi 0, %s102
      %s104 = sphi 0, %s102
      %s105 = sphi 0, %s104
      %s119 = sphi 0, %s105
      %s123 = sphi 0, %s123
      %s125 = sphi 0, %s123
      %s126 = sphi 0, %s125
      %s140 = sphi 0, %s126
      %s144 = sphi 0, %s144
      %s146 = sphi 0, %s144
      %s147 = sphi 0, %s146
      %s161 = sphi 0, %s147
      %s165 = sphi 0, %s165
      %s167 = sphi 0, %s165
      %s168 = sphi 0, %s167
      %s182 = sphi 0, %s168
      %s186 = sphi 0, %s186
      %s188 = sphi 0, %s186
      %s189 = sphi 0, %s188
      %s203 = sphi 0, %s189
      %s207 = sphi 0, %s207
      %s209 = sphi 0, %s207
      %s210 = sphi 0, %s209
      %s224 = sphi 0, %s210
      %s228 = sphi 0, %s228
      %s230 = sphi 0, %s228
      %s231 = sphi 0, %s230
      %s245 = sphi 0, %s231
      %s251 = sphi 0, %s253
      %s254 = sphi 0, %s251
      %s255 = sphi 0, %s254
      %s271 = sphi 0, %s255
      %s277 = sphi 0, %s279
      %s280 = sphi 0, %s277
      %s281 = sphi 0, %s280
      %s297 = sphi 0, %s281
    $region4: #{_causal_vae_forward_impl.1} parent=1 // loop_header_branch
      %24 = sbr.rel (%p22) target = $region8
    $region5: #{_causal_vae_forward_impl.1} parent=1 // loop_body
      %s26 = ssub.s32 %s21, 1
      %s27 = ssub.s32 %s21, 2
      %s28 = sadd.s32 %s21, 1
      %s29 = ssub.s32 %s21, %s28
      %p30 = scmp.eq.s32.totalorder %s29, 0
      %s32 = sadd.s32 %s31, 1
      %s33 = scalar_select %p30, %s31, %s32
      %p36 = pneg %p30
      %p37 = scmp.eq.s32.totalorder %s21, 1
      %p38 = por %p36, %p37
      %p39 = scmp.ne.s32.totalorder %s31, %s34
      %p40 = scmp.eq.s32.totalorder %s21, 0
      %p41 = por %p39, %p40
      %p42 = scmp.ne.s32.totalorder %s31, %s34
      %p43 = scmp.eq.s32.totalorder %s26, 1
      %p44 = por %p42, %p43
      %p45 = scmp.ne.s32.totalorder %s34, %s35
      %p46 = scmp.eq.s32.totalorder %s26, 0
      %p47 = por %p45, %p46
      %p48 = scmp.ne.s32.totalorder %s34, %s35
      %p49 = scmp.eq.s32.totalorder %s27, 1
      %p50 = por %p48, %p49
      %p52 = scmp.ne.s32.totalorder %s35, %s51
      %p53 = scmp.eq.s32.totalorder %s27, 0
      %p54 = por %p52, %p53
      %s55 = ssub.s32 %s21, %s28
      %p56 = scmp.eq.s32.totalorder %s55, 0
      %s58 = sadd.s32 %s57, 1
      %s59 = scalar_select %p56, %s57, %s58
      %p62 = pneg %p56
      %p63 = scmp.eq.s32.totalorder %s21, 1
      %p64 = por %p62, %p63
      %p65 = scmp.ne.s32.totalorder %s57, %s60
      %p66 = scmp.eq.s32.totalorder %s21, 0
      %p67 = por %p65, %p66
      %p68 = scmp.ne.s32.totalorder %s57, %s60
      %p69 = scmp.eq.s32.totalorder %s26, 1
      %p70 = por %p68, %p69
      %p71 = scmp.ne.s32.totalorder %s60, %s61
      %p72 = scmp.eq.s32.totalorder %s26, 0
      %p73 = por %p71, %p72
      %p74 = scmp.ne.s32.totalorder %s60, %s61
      %p75 = scmp.eq.s32.totalorder %s27, 1
      %p76 = por %p74, %p75
      %p78 = scmp.ne.s32.totalorder %s61, %s77
      %p79 = scmp.eq.s32.totalorder %s27, 0
      %p80 = por %p78, %p79
      %s82 = sadd.s32 %s81, 1
      %p85 = scmp.eq.s32.totalorder %s21, 1
      %p86 = scmp.ne.s32.totalorder %s81, %s83
      %p87 = scmp.eq.s32.totalorder %s21, 0
      %p88 = por %p86, %p87
      %p89 = scmp.ne.s32.totalorder %s81, %s83
      %p90 = scmp.eq.s32.totalorder %s26, 1
      %p91 = por %p89, %p90
      %p92 = scmp.ne.s32.totalorder %s83, %s84
      %p93 = scmp.eq.s32.totalorder %s26, 0
      %p94 = por %p92, %p93
      %p95 = scmp.ne.s32.totalorder %s83, %s84
      %p96 = scmp.eq.s32.totalorder %s27, 1
      %p97 = por %p95, %p96
      %p99 = scmp.ne.s32.totalorder %s84, %s98
      %p100 = scmp.eq.s32.totalorder %s27, 0
      %p101 = por %p99, %p100
      %s103 = sadd.s32 %s102, 1
      %p106 = scmp.eq.s32.totalorder %s21, 1
      %p107 = scmp.ne.s32.totalorder %s102, %s104
      %p108 = scmp.eq.s32.totalorder %s21, 0
      %p109 = por %p107, %p108
      %p110 = scmp.ne.s32.totalorder %s102, %s104
      %p111 = scmp.eq.s32.totalorder %s26, 1
      %p112 = por %p110, %p111
      %p113 = scmp.ne.s32.totalorder %s104, %s105
      %p114 = scmp.eq.s32.totalorder %s26, 0
      %p115 = por %p113, %p114
      %p116 = scmp.ne.s32.totalorder %s104, %s105
      %p117 = scmp.eq.s32.totalorder %s27, 1
      %p118 = por %p116, %p117
      %p120 = scmp.ne.s32.totalorder %s105, %s119
      %p121 = scmp.eq.s32.totalorder %s27, 0
      %p122 = por %p120, %p121
      %s124 = sadd.s32 %s123, 1
      %p127 = scmp.eq.s32.totalorder %s21, 1
      %p128 = scmp.ne.s32.totalorder %s123, %s125
      %p129 = scmp.eq.s32.totalorder %s21, 0
      %p130 = por %p128, %p129
      %p131 = scmp.ne.s32.totalorder %s123, %s125
      %p132 = scmp.eq.s32.totalorder %s26, 1
      %p133 = por %p131, %p132
      %p134 = scmp.ne.s32.totalorder %s125, %s126
      %p135 = scmp.eq.s32.totalorder %s26, 0
      %p136 = por %p134, %p135
      %p137 = scmp.ne.s32.totalorder %s125, %s126
      %p138 = scmp.eq.s32.totalorder %s27, 1
      %p139 = por %p137, %p138
      %p141 = scmp.ne.s32.totalorder %s126, %s140
      %p142 = scmp.eq.s32.totalorder %s27, 0
      %p143 = por %p141, %p142
      %s145 = sadd.s32 %s144, 1
      %p148 = scmp.eq.s32.totalorder %s21, 1
      %p149 = scmp.ne.s32.totalorder %s144, %s146
      %p150 = scmp.eq.s32.totalorder %s21, 0
      %p151 = por %p149, %p150
      %p152 = scmp.ne.s32.totalorder %s144, %s146
      %p153 = scmp.eq.s32.totalorder %s26, 1
      %p154 = por %p152, %p153
      %p155 = scmp.ne.s32.totalorder %s146, %s147
      %p156 = scmp.eq.s32.totalorder %s26, 0
      %p157 = por %p155, %p156
      %p158 = scmp.ne.s32.totalorder %s146, %s147
      %p159 = scmp.eq.s32.totalorder %s27, 1
      %p160 = por %p158, %p159
      %p162 = scmp.ne.s32.totalorder %s147, %s161
      %p163 = scmp.eq.s32.totalorder %s27, 0
      %p164 = por %p162, %p163
      %s166 = sadd.s32 %s165, 1
      %p169 = scmp.eq.s32.totalorder %s21, 1
      %p170 = scmp.ne.s32.totalorder %s165, %s167
      %p171 = scmp.eq.s32.totalorder %s21, 0
      %p172 = por %p170, %p171
      %p173 = scmp.ne.s32.totalorder %s165, %s167
      %p174 = scmp.eq.s32.totalorder %s26, 1
      %p175 = por %p173, %p174
      %p176 = scmp.ne.s32.totalorder %s167, %s168
      %p177 = scmp.eq.s32.totalorder %s26, 0
      %p178 = por %p176, %p177
      %p179 = scmp.ne.s32.totalorder %s167, %s168
      %p180 = scmp.eq.s32.totalorder %s27, 1
      %p181 = por %p179, %p180
      %p183 = scmp.ne.s32.totalorder %s168, %s182
      %p184 = scmp.eq.s32.totalorder %s27, 0
      %p185 = por %p183, %p184
      %s187 = sadd.s32 %s186, 1
      %p190 = scmp.eq.s32.totalorder %s21, 1
      %p191 = scmp.ne.s32.totalorder %s186, %s188
      %p192 = scmp.eq.s32.totalorder %s21, 0
      %p193 = por %p191, %p192
      %p194 = scmp.ne.s32.totalorder %s186, %s188
      %p195 = scmp.eq.s32.totalorder %s26, 1
      %p196 = por %p194, %p195
      %p197 = scmp.ne.s32.totalorder %s188, %s189
      %p198 = scmp.eq.s32.totalorder %s26, 0
      %p199 = por %p197, %p198
      %p200 = scmp.ne.s32.totalorder %s188, %s189
      %p201 = scmp.eq.s32.totalorder %s27, 1
      %p202 = por %p200, %p201
      %p204 = scmp.ne.s32.totalorder %s189, %s203
      %p205 = scmp.eq.s32.totalorder %s27, 0
      %p206 = por %p204, %p205
      %s208 = sadd.s32 %s207, 1
      %p211 = scmp.eq.s32.totalorder %s21, 1
      %p212 = scmp.ne.s32.totalorder %s207, %s209
      %p213 = scmp.eq.s32.totalorder %s21, 0
      %p214 = por %p212, %p213
      %p215 = scmp.ne.s32.totalorder %s207, %s209
      %p216 = scmp.eq.s32.totalorder %s26, 1
      %p217 = por %p215, %p216
      %p218 = scmp.ne.s32.totalorder %s209, %s210
      %p219 = scmp.eq.s32.totalorder %s26, 0
      %p220 = por %p218, %p219
      %p221 = scmp.ne.s32.totalorder %s209, %s210
      %p222 = scmp.eq.s32.totalorder %s27, 1
      %p223 = por %p221, %p222
      %p225 = scmp.ne.s32.totalorder %s210, %s224
      %p226 = scmp.eq.s32.totalorder %s27, 0
      %p227 = por %p225, %p226
      %s229 = sadd.s32 %s228, 1
      %p232 = scmp.eq.s32.totalorder %s21, 1
      %p233 = scmp.ne.s32.totalorder %s228, %s230
      %p234 = scmp.eq.s32.totalorder %s21, 0
      %p235 = por %p233, %p234
      %p236 = scmp.ne.s32.totalorder %s228, %s230
      %p237 = scmp.eq.s32.totalorder %s26, 1
      %p238 = por %p236, %p237
      %p239 = scmp.ne.s32.totalorder %s230, %s231
      %p240 = scmp.eq.s32.totalorder %s26, 0
      %p241 = por %p239, %p240
      %p242 = scmp.ne.s32.totalorder %s230, %s231
      %p243 = scmp.eq.s32.totalorder %s27, 1
      %p244 = por %p242, %p243
      %p246 = scmp.ne.s32.totalorder %s231, %s245
      %p247 = scmp.eq.s32.totalorder %s27, 0
      %p248 = por %p246, %p247
      %s249 = ssub.s32 %s21, %s28
      %p250 = scmp.eq.s32.totalorder %s249, 0
      %s252 = sadd.s32 %s251, 1
      %s253 = scalar_select %p250, %s251, %s252
      %p256 = pneg %p250
      %p257 = scmp.eq.s32.totalorder %s21, 1
      %p258 = por %p256, %p257
      %p259 = scmp.ne.s32.totalorder %s251, %s254
      %p260 = scmp.eq.s32.totalorder %s21, 0
      %p261 = por %p259, %p260
      %p262 = scmp.ne.s32.totalorder %s251, %s254
      %p263 = scmp.eq.s32.totalorder %s26, 1
      %p264 = por %p262, %p263
      %p265 = scmp.ne.s32.totalorder %s254, %s255
      %p266 = scmp.eq.s32.totalorder %s26, 0
      %p267 = por %p265, %p266
      %p268 = scmp.ne.s32.totalorder %s254, %s255
      %p269 = scmp.eq.s32.totalorder %s27, 1
      %p270 = por %p268, %p269
      %p272 = scmp.ne.s32.totalorder %s255, %s271
      %p273 = scmp.eq.s32.totalorder %s27, 0
      %p274 = por %p272, %p273
      %s275 = ssub.s32 %s21, %s28
      %p276 = scmp.eq.s32.totalorder %s275, 0
      %s278 = sadd.s32 %s277, 1
      %s279 = scalar_select %p276, %s277, %s278
      %p282 = pneg %p276
      %p283 = scmp.eq.s32.totalorder %s21, 1
      %p284 = por %p282, %p283
      %p285 = scmp.ne.s32.totalorder %s277, %s280
      %p286 = scmp.eq.s32.totalorder %s21, 0
      %p287 = por %p285, %p286
      %p288 = scmp.ne.s32.totalorder %s277, %s280
      %p289 = scmp.eq.s32.totalorder %s26, 1
      %p290 = por %p288, %p289
      %p291 = scmp.ne.s32.totalorder %s280, %s281
      %p292 = scmp.eq.s32.totalorder %s26, 0
      %p293 = por %p291, %p292
      %p294 = scmp.ne.s32.totalorder %s280, %s281
      %p295 = scmp.eq.s32.totalorder %s27, 1
      %p296 = por %p294, %p295
      %p298 = scmp.ne.s32.totalorder %s281, %s297
      %p299 = scmp.eq.s32.totalorder %s27, 0
      %p300 = por %p298, %p299
      %p301 = scmp.le.s32.totalorder 1, %s21
      %p302 = scmp.lt.s32.totalorder %s21, 3
      %p303 = pnand %p301, %p302
      %p304 = pneg %p303
      // Predicated region
      $region9: #{_causal_vae_forward_impl.1} parent=5 // pred_check
        _
      $region10: #{_causal_vae_forward_impl.1} parent=5 // pred_check_branch
        %306 = sbr.rel (%p303) target = $region12
      $region11: #{_causal_vae_forward_impl.1} parent=5 // pred_region
        %s307 = ssub.s32 %s21, 1
        // Predicated region
        $region13: #{_causal_vae_forward_impl.1} parent=11 // pred_check
          %p308 = pneg %p94
        $region14: #{_causal_vae_forward_impl.1} parent=11 // pred_check_branch
          %310 = sbr.rel (%p308) target = $region16
        $region15: #{_causal_vae_forward_impl.1} parent=11 // pred_region
          _
        $region16: #{_causal_vae_forward_impl.1} parent=11 // pred_fallthru
          _
        // Predicated region
        $region17: #{_causal_vae_forward_impl.1} parent=11 // pred_check
          %p311 = pneg %p115
        $region18: #{_causal_vae_forward_impl.1} parent=11 // pred_check_branch
          %313 = sbr.rel (%p311) target = $region20
        $region19: #{_causal_vae_forward_impl.1} parent=11 // pred_region
          _
        $region20: #{_causal_vae_forward_impl.1} parent=11 // pred_fallthru
          _
        // Predicated region
        $region21: #{_causal_vae_forward_impl.1} parent=11 // pred_check
          %p314 = pneg %p136
        $region22: #{_causal_vae_forward_impl.1} parent=11 // pred_check_branch
          %316 = sbr.rel (%p314) target = $region24
        $region23: #{_causal_vae_forward_impl.1} parent=11 // pred_region
          _
        $region24: #{_causal_vae_forward_impl.1} parent=11 // pred_fallthru
          _
        // Predicated region
        $region25: #{_causal_vae_forward_impl.1} parent=11 // pred_check
          %p317 = pneg %p157
        $region26: #{_causal_vae_forward_impl.1} parent=11 // pred_check_branch
          %319 = sbr.rel (%p317) target = $region28
        $region27: #{_causal_vae_forward_impl.1} parent=11 // pred_region
          _
        $region28: #{_causal_vae_forward_impl.1} parent=11 // pred_fallthru
          _
        // Predicated region
        $region29: #{_causal_vae_forward_impl.1} parent=11 // pred_check
          %p320 = pneg %p178
        $region30: #{_causal_vae_forward_impl.1} parent=11 // pred_check_branch
          %322 = sbr.rel (%p320) target = $region32
        $region31: #{_causal_vae_forward_impl.1} parent=11 // pred_region
          _
        $region32: #{_causal_vae_forward_impl.1} parent=11 // pred_fallthru
          _
        // Predicated region
        $region33: #{_causal_vae_forward_impl.1} parent=11 // pred_check
          %p323 = pneg %p199
        $region34: #{_causal_vae_forward_impl.1} parent=11 // pred_check_branch
          %325 = sbr.rel (%p323) target = $region36
        $region35: #{_causal_vae_forward_impl.1} parent=11 // pred_region
          _
        $region36: #{_causal_vae_forward_impl.1} parent=11 // pred_fallthru
          _
        // Predicated region
        $region37: #{_causal_vae_forward_impl.1} parent=11 // pred_check
          %p326 = pneg %p220
        $region38: #{_causal_vae_forward_impl.1} parent=11 // pred_check_branch
          %328 = sbr.rel (%p326) target = $region40
        $region39: #{_causal_vae_forward_impl.1} parent=11 // pred_region
          _
        $region40: #{_causal_vae_forward_impl.1} parent=11 // pred_fallthru
          _
        // Predicated region
        $region41: #{_causal_vae_forward_impl.1} parent=11 // pred_check
          %p329 = pneg %p241
        $region42: #{_causal_vae_forward_impl.1} parent=11 // pred_check_branch
          %331 = sbr.rel (%p329) target = $region44
        $region43: #{_causal_vae_forward_impl.1} parent=11 // pred_region
          _
        $region44: #{_causal_vae_forward_impl.1} parent=11 // pred_fallthru
          _
      $region12: #{_causal_vae_forward_impl.1} parent=5 // pred_fallthru
        _
      %p332 = scmp.lt.s32.totalorder %s21, 2
      // Predicated region
      $region45: #{_causal_vae_forward_impl.1} parent=5 // pred_check
        %p333 = pneg %p332
      $region46: #{_causal_vae_forward_impl.1} parent=5 // pred_check_branch
        %335 = sbr.rel (%p333) target = $region48
      $region47: #{_causal_vae_forward_impl.1} parent=5 // pred_region
        // Predicated region
        $region49: #{_causal_vae_forward_impl.1} parent=47 // pred_check
          %p336 = pneg %p41
        $region50: #{_causal_vae_forward_impl.1} parent=47 // pred_check_branch
          %338 = sbr.rel (%p336) target = $region52
        $region51: #{_causal_vae_forward_impl.1} parent=47 // pred_region
          %s339 = smul.u32 32, %s21
          %p340 = scmp.lt.s32.totalorder %s339, 63
          %s341 = scalar_select %p340, %s339, 63
          %s342 = smul.addr %s341, 2
          %s343 = smul.addr %s342, 4
          %s344 = scalar_lea.vmem %s0, %s343
          %s345 = smul.u32 32, %s21
        $region52: #{_causal_vae_forward_impl.1} parent=47 // pred_fallthru
          _
        // Predicated region
        $region53: #{_causal_vae_forward_impl.1} parent=47 // pred_check
          %p346 = pneg %p67
        $region54: #{_causal_vae_forward_impl.1} parent=47 // pred_check_branch
          %348 = sbr.rel (%p346) target = $region56
        $region55: #{_causal_vae_forward_impl.1} parent=47 // pred_region
          %s349 = smul.u32 32, %s21
          %p350 = scmp.lt.s32.totalorder %s349, 63
          %s351 = scalar_select %p350, %s349, 63
          %s352 = smul.addr %s351, 8
          %s353 = scalar_lea.vmem %s1, %s352
          %s354 = smul.u32 32, %s21
        $region56: #{_causal_vae_forward_impl.1} parent=47 // pred_fallthru
          _
      $region48: #{_causal_vae_forward_impl.1} parent=5 // pred_fallthru
        _
      %p355 = scmp.le.s32.totalorder 1, %s21
      %p356 = scmp.lt.s32.totalorder %s21, 3
      %p357 = pnand %p355, %p356
      %p358 = pneg %p357
      // Predicated region
      $region57: #{_causal_vae_forward_impl.1} parent=5 // pred_check
        _
      $region58: #{_causal_vae_forward_impl.1} parent=5 // pred_check_branch
        %360 = sbr.rel (%p357) target = $region60
      $region59: #{_causal_vae_forward_impl.1} parent=5 // pred_region
        %s361 = ssub.s32 %s21, 1
        %s362 = smul.u32 32, %s26
        %p363 = scmp.lt.s32.totalorder %s362, 63
        %s364 = scalar_select %p363, %s362, 63
        %s365 = smul.addr %s364, 2
        %s366 = smul.addr %s365, 4
        %s367 = scalar_lea.vmem %s0, %s366
        %p368 = pneg %p47
        %p369 = pneg %p44
        %s370 = smul.u32 32, %s26
        %p371 = scmp.lt.s32.totalorder %s370, 63
        %s372 = scalar_select %p371, %s370, 63
        %s373 = smul.addr %s372, 8
        %s374 = scalar_lea.vmem %s1, %s373
        %p375 = pneg %p73
        %p376 = pneg %p70
        %p377 = pneg %p94
        %p378 = pneg %p91
        %p379 = pneg %p115
        %p380 = pneg %p112
        %p381 = pneg %p136
        %p382 = pneg %p133
        %p383 = pneg %p157
        %p384 = pneg %p154
        %p385 = pneg %p178
        %p386 = pneg %p175
        %p387 = pneg %p199
        %p388 = pneg %p196
        %p389 = pneg %p220
        %p390 = pneg %p217
        %p391 = pneg %p241
        %p392 = pneg %p238
        %p393 = pneg %p267
        %p394 = pneg %p264
        %s395 = sand.u32 %s254, 1
        %s396 = scalar_lea.sflag [#allocation3], %s395
        %s397 = sand.u32 %s254, 1
        %s398 = smul.addr %s397, 512
        %s399 = scalar_lea.vmem [#allocation2], %s398
        %p400 = pneg %p293
        %p401 = pneg %p290
        %s402 = smul.u32 32, %s26
        %p403 = scmp.lt.s32.totalorder %s402, 63
        %s404 = scalar_select %p403, %s402, 63
        %s405 = smul.addr %s404, 3
        %s406 = smul.addr %s405, 8
        %s407 = scalar_lea.vmem %s11, %s406
        %s408 = smul.u32 32, %s26
        %p409 = scmp.lt.s32.totalorder %s408, 63
        %s410 = scalar_select %p409, %s408, 63
        %s411 = smul.addr %s410, 2
        %s412 = smul.addr %s411, 4
        %s413 = scalar_lea.vmem %s0, %s412
        %s414 = smul.u32 32, %s26
        %s415 = smul.u32 32, %s26
        %p416 = scmp.lt.s32.totalorder %s415, 63
        %s417 = scalar_select %p416, %s415, 63
        %s418 = smul.addr %s417, 8
        %s419 = scalar_lea.vmem %s1, %s418
        %s420 = smul.u32 32, %s26
        %s421 = smul.u32 32, %s26
        %s422 = smul.u32 32, %s26
        %p423 = scmp.lt.s32.totalorder %s422, 63
        %s424 = scalar_select %p423, %s422, 63
        %s425 = smul.addr %s424, 3
        %s426 = smul.addr %s425, 8
        %s427 = scalar_lea.vmem %s11, %s426
        %s428 = smul.u32 32, %s26
        %v430 = vld [vmem:[%s413] sm:$0xff]
        %v431 = vld [vmem:[%s413 + $0x8] sm:$0xff]
        %v432 = vld [vmem:[%s413 + $0x10] sm:$0xff]
        %v433 = vld [vmem:[%s413 + $0x18] sm:$0xff]
        %v434 = vld [vmem:[%s413 + $0x20] sm:$0xff]
        %v435 = vld [vmem:[%s413 + $0x28] sm:$0xff]
        %v436 = vld [vmem:[%s413 + $0x30] sm:$0xff]
        %v437 = vld [vmem:[%s413 + $0x38] sm:$0xff]
        %v438 = vld [vmem:[%s413 + $0x40] sm:$0xff]
        %v439 = vld [vmem:[%s413 + $0x48] sm:$0xff]
        %v440 = vld [vmem:[%s413 + $0x50] sm:$0xff]
        %v441 = vld [vmem:[%s413 + $0x58] sm:$0xff]
        %v442 = vld [vmem:[%s413 + $0x60] sm:$0xff]
        %v443 = vld [vmem:[%s413 + $0x68] sm:$0xff]
        %v444 = vld [vmem:[%s413 + $0x70] sm:$0xff]
        %v445 = vld [vmem:[%s413 + $0x78] sm:$0xff]
        %v446 = vld [vmem:[%s413 + $0x80] sm:$0xff]
        %v447 = vld [vmem:[%s413 + $0x88] sm:$0xff]
        %v448 = vld [vmem:[%s413 + $0x90] sm:$0xff]
        %v449 = vld [vmem:[%s413 + $0x98] sm:$0xff]
        %v450 = vld [vmem:[%s413 + $0xa0] sm:$0xff]
        %v451 = vld [vmem:[%s413 + $0xa8] sm:$0xff]
        %v452 = vld [vmem:[%s413 + $0xb0] sm:$0xff]
        %v453 = vld [vmem:[%s413 + $0xb8] sm:$0xff]
        %v454 = vld [vmem:[%s413 + $0xc0] sm:$0xff]
        %v455 = vld [vmem:[%s413 + $0xc8] sm:$0xff]
        %v456 = vld [vmem:[%s413 + $0xd0] sm:$0xff]
        %v457 = vld [vmem:[%s413 + $0xd8] sm:$0xff]
        %v458 = vld [vmem:[%s413 + $0xe0] sm:$0xff]
        %v459 = vld [vmem:[%s413 + $0xe8] sm:$0xff]
        %v460 = vld [vmem:[%s413 + $0xf0] sm:$0xff]
        %v461 = vld [vmem:[%s413 + $0xf8] sm:$0xff]
        %v462 = vld [vmem:[%s419] sm:$0xff]
        %v463 = vld [vmem:[%s419 + $0x8] sm:$0xff]
        %v464 = vld [vmem:[%s419 + $0x10] sm:$0xff]
        %v465 = vld [vmem:[%s419 + $0x18] sm:$0xff]
        %v466 = vld [vmem:[%s419 + $0x20] sm:$0xff]
        %v467 = vld [vmem:[%s419 + $0x28] sm:$0xff]
        %v468 = vld [vmem:[%s419 + $0x30] sm:$0xff]
        %v469 = vld [vmem:[%s419 + $0x38] sm:$0xff]
        %v470 = vld [vmem:[%s419 + $0x40] sm:$0xff]
        %v471 = vld [vmem:[%s419 + $0x48] sm:$0xff]
        %v472 = vld [vmem:[%s419 + $0x50] sm:$0xff]
        %v473 = vld [vmem:[%s419 + $0x58] sm:$0xff]
        %v474 = vld [vmem:[%s419 + $0x60] sm:$0xff]
        %v475 = vld [vmem:[%s419 + $0x68] sm:$0xff]
        %v476 = vld [vmem:[%s419 + $0x70] sm:$0xff]
        %v477 = vld [vmem:[%s419 + $0x78] sm:$0xff]
        %v478 = vld [vmem:[%s419 + $0x80] sm:$0xff]
        %v479 = vld [vmem:[%s419 + $0x88] sm:$0xff]
        %v480 = vld [vmem:[%s419 + $0x90] sm:$0xff]
        %v481 = vld [vmem:[%s419 + $0x98] sm:$0xff]
        %v482 = vld [vmem:[%s419 + $0xa0] sm:$0xff]
        %v483 = vld [vmem:[%s419 + $0xa8] sm:$0xff]
        %v484 = vld [vmem:[%s419 + $0xb0] sm:$0xff]
        %v485 = vld [vmem:[%s419 + $0xb8] sm:$0xff]
        %v486 = vld [vmem:[%s419 + $0xc0] sm:$0xff]
        %v487 = vld [vmem:[%s419 + $0xc8] sm:$0xff]
        %v488 = vld [vmem:[%s419 + $0xd0] sm:$0xff]
        %v489 = vld [vmem:[%s419 + $0xd8] sm:$0xff]
        %v490 = vld [vmem:[%s419 + $0xe0] sm:$0xff]
        %v491 = vld [vmem:[%s419 + $0xe8] sm:$0xff]
        %v492 = vld [vmem:[%s419 + $0xf0] sm:$0xff]
        %v493 = vld [vmem:[%s419 + $0xf8] sm:$0xff]
        %v494 = vld [vmem:[%s2] sm:$0xf]
        %v495 = vld [vmem:[%s2 + $0x4] sm:$0xf]
        %v496 = vld [vmem:[%s2 + $0x8] sm:$0xf]
        %v497 = vld [vmem:[%s2 + $0xc] sm:$0xf]
        %v498 = vld [vmem:[%s2 + $0x10] sm:$0xf]
        %v499 = vld [vmem:[%s2 + $0x14] sm:$0xf]
        %v500 = vld [vmem:[%s2 + $0x18] sm:$0xf]
        %v501 = vld [vmem:[%s2 + $0x1c] sm:$0xf]
        %v502 = vld [vmem:[%s2 + $0x20] sm:$0xf]
        %v503 = vld [vmem:[%s2 + $0x24] sm:$0xf]
        %v504 = vld [vmem:[%s2 + $0x28] sm:$0xf]
        %v505 = vld [vmem:[%s2 + $0x2c] sm:$0xf]
        %v506 = vld [vmem:[%s2 + $0x30] sm:$0xf]
        %v507 = vld [vmem:[%s2 + $0x34] sm:$0xf]
        %v508 = vld [vmem:[%s2 + $0x38] sm:$0xf]
        %v509 = vld [vmem:[%s2 + $0x3c] sm:$0xf]
        %v510 = vld [vmem:[%s2 + $0x40] sm:$0xf]
        %v511 = vld [vmem:[%s2 + $0x44] sm:$0xf]
        %v512 = vld [vmem:[%s2 + $0x48] sm:$0xf]
        %v513 = vld [vmem:[%s2 + $0x4c] sm:$0xf]
        %v514 = vld [vmem:[%s2 + $0x50] sm:$0xf]
        %v515 = vld [vmem:[%s2 + $0x54] sm:$0xf]
        %v516 = vld [vmem:[%s2 + $0x58] sm:$0xf]
        %v517 = vld [vmem:[%s2 + $0x5c] sm:$0xf]
        %v518 = vld [vmem:[%s2 + $0x60] sm:$0xf]
        %v519 = vld [vmem:[%s2 + $0x64] sm:$0xf]
        %v520 = vld [vmem:[%s2 + $0x68] sm:$0xf]
        %v521 = vld [vmem:[%s2 + $0x6c] sm:$0xf]
        %v522 = vld [vmem:[%s2 + $0x70] sm:$0xf]
        %v523 = vld [vmem:[%s2 + $0x74] sm:$0xf]
        %v524 = vld [vmem:[%s2 + $0x78] sm:$0xf]
        %v525 = vld [vmem:[%s2 + $0x7c] sm:$0xf]
        %v526 = vld [vmem:[%s3] sm:$0x1]
        %v528 = vlaneseq
        %v529 = vshrl.u32 %v528, 7
        %v530 = vsub.s32 0, %v529
        %v531 = vrot.slane %v526, %v530
        %v565 = vunpack.c.l.b16 %v430
        %v566 = vunpack.c.h.b16 %v430
        %v567 = vunpack.c.l.b16 %v431
        %v568 = vunpack.c.h.b16 %v431
        %v569 = vunpack.c.l.b16 %v432
        %v570 = vunpack.c.h.b16 %v432
        %v571 = vunpack.c.l.b16 %v433
        %v572 = vunpack.c.h.b16 %v433
        %v573 = vunpack.c.l.b16 %v434
        %v574 = vunpack.c.h.b16 %v434
        %v575 = vunpack.c.l.b16 %v435
        %v576 = vunpack.c.h.b16 %v435
        %v577 = vunpack.c.l.b16 %v436
        %v578 = vunpack.c.h.b16 %v436
        %v579 = vunpack.c.l.b16 %v437
        %v580 = vunpack.c.h.b16 %v437
        %v581 = vunpack.c.l.b16 %v438
        %v582 = vunpack.c.h.b16 %v438
        %v583 = vunpack.c.l.b16 %v439
        %v584 = vunpack.c.h.b16 %v439
        %v585 = vunpack.c.l.b16 %v440
        %v586 = vunpack.c.h.b16 %v440
        %v587 = vunpack.c.l.b16 %v441
        %v588 = vunpack.c.h.b16 %v441
        %v589 = vunpack.c.l.b16 %v442
        %v590 = vunpack.c.h.b16 %v442
        %v591 = vunpack.c.l.b16 %v443
        %v592 = vunpack.c.h.b16 %v443
        %v593 = vunpack.c.l.b16 %v444
        %v594 = vunpack.c.h.b16 %v444
        %v595 = vunpack.c.l.b16 %v445
        %v596 = vunpack.c.h.b16 %v445
        %v597 = vunpack.c.l.b16 %v446
        %v598 = vunpack.c.h.b16 %v446
        %v599 = vunpack.c.l.b16 %v447
        %v600 = vunpack.c.h.b16 %v447
        %v601 = vunpack.c.l.b16 %v448
        %v602 = vunpack.c.h.b16 %v448
        %v603 = vunpack.c.l.b16 %v449
        %v604 = vunpack.c.h.b16 %v449
        %v605 = vunpack.c.l.b16 %v450
        %v606 = vunpack.c.h.b16 %v450
        %v607 = vunpack.c.l.b16 %v451
        %v608 = vunpack.c.h.b16 %v451
        %v609 = vunpack.c.l.b16 %v452
        %v610 = vunpack.c.h.b16 %v452
        %v611 = vunpack.c.l.b16 %v453
        %v612 = vunpack.c.h.b16 %v453
        %v613 = vunpack.c.l.b16 %v454
        %v614 = vunpack.c.h.b16 %v454
        %v615 = vunpack.c.l.b16 %v455
        %v616 = vunpack.c.h.b16 %v455
        %v617 = vunpack.c.l.b16 %v456
        %v618 = vunpack.c.h.b16 %v456
        %v619 = vunpack.c.l.b16 %v457
        %v620 = vunpack.c.h.b16 %v457
        %v621 = vunpack.c.l.b16 %v458
        %v622 = vunpack.c.h.b16 %v458
        %v623 = vunpack.c.l.b16 %v459
        %v624 = vunpack.c.h.b16 %v459
        %v625 = vunpack.c.l.b16 %v460
        %v626 = vunpack.c.h.b16 %v460
        %v627 = vunpack.c.l.b16 %v461
        %v628 = vunpack.c.h.b16 %v461
        %v629 = vpack.c.b16 %v567, %v565
        %v630 = vpack.c.b16 %v568, %v566
        %v631 = vpack.c.b16 %v571, %v569
        %v632 = vpack.c.b16 %v572, %v570
        %v633 = vpack.c.b16 %v575, %v573
        %v634 = vpack.c.b16 %v576, %v574
        %v635 = vpack.c.b16 %v579, %v577
        %v636 = vpack.c.b16 %v580, %v578
        %v637 = vpack.c.b16 %v583, %v581
        %v638 = vpack.c.b16 %v584, %v582
        %v639 = vpack.c.b16 %v587, %v585
        %v640 = vpack.c.b16 %v588, %v586
        %v641 = vpack.c.b16 %v591, %v589
        %v642 = vpack.c.b16 %v592, %v590
        %v643 = vpack.c.b16 %v595, %v593
        %v644 = vpack.c.b16 %v596, %v594
        %v645 = vpack.c.b16 %v599, %v597
        %v646 = vpack.c.b16 %v600, %v598
        %v647 = vpack.c.b16 %v603, %v601
        %v648 = vpack.c.b16 %v604, %v602
        %v649 = vpack.c.b16 %v607, %v605
        %v650 = vpack.c.b16 %v608, %v606
        %v651 = vpack.c.b16 %v611, %v609
        %v652 = vpack.c.b16 %v612, %v610
        %v653 = vpack.c.b16 %v615, %v613
        %v654 = vpack.c.b16 %v616, %v614
        %v655 = vpack.c.b16 %v619, %v617
        %v656 = vpack.c.b16 %v620, %v618
        %v657 = vpack.c.b16 %v623, %v621
        %v658 = vpack.c.b16 %v624, %v622
        %v659 = vpack.c.b16 %v627, %v625
        %v660 = vpack.c.b16 %v628, %v626
        %v725 = vunpack.c.l.b16 %v494
        %v726 = vunpack.c.l.b16 %v495
        %v727 = vunpack.c.l.b16 %v496
        %v728 = vunpack.c.l.b16 %v497
        %v729 = vunpack.c.l.b16 %v498
        %v730 = vunpack.c.l.b16 %v499
        %v731 = vunpack.c.l.b16 %v500
        %v732 = vunpack.c.l.b16 %v501
        %v733 = vunpack.c.l.b16 %v502
        %v734 = vunpack.c.l.b16 %v503
        %v735 = vunpack.c.l.b16 %v504
        %v736 = vunpack.c.l.b16 %v505
        %v737 = vunpack.c.l.b16 %v506
        %v738 = vunpack.c.l.b16 %v507
        %v739 = vunpack.c.l.b16 %v508
        %v740 = vunpack.c.l.b16 %v509
        %v741 = vunpack.c.l.b16 %v510
        %v742 = vunpack.c.l.b16 %v511
        %v743 = vunpack.c.l.b16 %v512
        %v744 = vunpack.c.l.b16 %v513
        %v745 = vunpack.c.l.b16 %v514
        %v746 = vunpack.c.l.b16 %v515
        %v747 = vunpack.c.l.b16 %v516
        %v748 = vunpack.c.l.b16 %v517
        %v749 = vunpack.c.l.b16 %v518
        %v750 = vunpack.c.l.b16 %v519
        %v751 = vunpack.c.l.b16 %v520
        %v752 = vunpack.c.l.b16 %v521
        %v753 = vunpack.c.l.b16 %v522
        %v754 = vunpack.c.l.b16 %v523
        %v755 = vunpack.c.l.b16 %v524
        %v756 = vunpack.c.l.b16 %v525
        %v757 = vpack.c.b16 %v726, %v725
        %v758 = vpack.c.b16 %v728, %v727
        %v759 = vpack.c.b16 %v730, %v729
        %v760 = vpack.c.b16 %v732, %v731
        %v761 = vpack.c.b16 %v734, %v733
        %v762 = vpack.c.b16 %v736, %v735
        %v763 = vpack.c.b16 %v738, %v737
        %v764 = vpack.c.b16 %v740, %v739
        %v765 = vpack.c.b16 %v742, %v741
        %v766 = vpack.c.b16 %v744, %v743
        %v767 = vpack.c.b16 %v746, %v745
        %v768 = vpack.c.b16 %v748, %v747
        %v769 = vpack.c.b16 %v750, %v749
        %v770 = vpack.c.b16 %v752, %v751
        %v771 = vpack.c.b16 %v754, %v753
        %v772 = vpack.c.b16 %v756, %v755
        %789 = vmatprep.subr.bf16.mxu0 0
        %790 = vmatpush1.bf16.msra.mxu0 %v764
        %791 = vmatprep.subr.bf16.mxu0 0
        %792 = vmatpush1.bf16.msra.mxu0 %v763
        %793 = vmatprep.subr.bf16.mxu0 0
        %794 = vmatpush1.bf16.msra.mxu0 %v762
        %795 = vmatprep.subr.bf16.mxu0 0
        %796 = vmatpush1.bf16.msra.mxu0 %v761
        %797 = vmatprep.subr.bf16.mxu0 0
        %798 = vmatpush1.bf16.msra.mxu0 %v760
        %799 = vmatprep.subr.bf16.mxu0 0
        %800 = vmatpush1.bf16.msra.mxu0 %v759
        %801 = vmatprep.subr.bf16.mxu0 0
        %802 = vmatpush1.bf16.msra.mxu0 %v758
        %803 = vmatprep.subr.bf16.mxu0 0
        %804 = vmatpush1.bf16.msra.mxu0 %v757
        %805 = vmatprep.subr.bf16.mxu0 0
        %806 = vmatpush2.bf16.msra.mxu0 %v772
        %807 = vmatprep.subr.bf16.mxu0 0
        %808 = vmatpush2.bf16.msra.mxu0 %v771
        %809 = vmatprep.subr.bf16.mxu0 0
        %810 = vmatpush2.bf16.msra.mxu0 %v770
        %811 = vmatprep.subr.bf16.mxu0 0
        %812 = vmatpush2.bf16.msra.mxu0 %v769
        %813 = vmatprep.subr.bf16.mxu0 0
        %814 = vmatpush2.bf16.msra.mxu0 %v768
        %815 = vmatprep.subr.bf16.mxu0 0
        %816 = vmatpush2.bf16.msra.mxu0 %v767
        %817 = vmatprep.subr.bf16.mxu0 0
        %818 = vmatpush2.bf16.msra.mxu0 %v766
        %819 = vmatprep.subr.bf16.mxu0 0
        %820 = vmatpush2.bf16.msra.mxu0 %v765
        %821 = vmatprep.mubr.bf16.mxu0 %v630
        %822 = vmatmul.mubr.bf16.gmra.mxu0 %v629
        %v823 = vpop.f32.mrf.mxu0
        %v824 = vadd.f32 %v531, %v823
        %v825 = vpop.f32.mrf.mxu0
        %v826 = vpop.f32.mrf.mxu0
        %v827 = vadd.f32 %v531, %v826
        %v828 = vpop.f32.mrf.mxu0
        %829 = vmatprep.mubr.bf16.mxu0 %v632
        %830 = vmatmul.mubr.bf16.gmra.mxu0 %v631
        %v831 = vpop.f32.mrf.mxu0
        %v832 = vadd.f32 %v531, %v831
        %v833 = vpop.f32.mrf.mxu0
        %v834 = vpop.f32.mrf.mxu0
        %v835 = vadd.f32 %v531, %v834
        %v836 = vpop.f32.mrf.mxu0
        %837 = vmatprep.mubr.bf16.mxu0 %v634
        %838 = vmatmul.mubr.bf16.gmra.mxu0 %v633
        %v839 = vpop.f32.mrf.mxu0
        %v840 = vadd.f32 %v531, %v839
        %v841 = vpop.f32.mrf.mxu0
        %v842 = vpop.f32.mrf.mxu0
        %v843 = vadd.f32 %v531, %v842
        %v844 = vpop.f32.mrf.mxu0
        %845 = vmatprep.mubr.bf16.mxu0 %v636
        %846 = vmatmul.mubr.bf16.gmra.mxu0 %v635
        %v847 = vpop.f32.mrf.mxu0
        %v848 = vadd.f32 %v531, %v847
        %v849 = vpop.f32.mrf.mxu0
        %v850 = vpop.f32.mrf.mxu0
        %v851 = vadd.f32 %v531, %v850
        %v852 = vpop.f32.mrf.mxu0
        %853 = vmatprep.mubr.bf16.mxu0 %v638
        %854 = vmatmul.mubr.bf16.gmra.mxu0 %v637
        %v855 = vpop.f32.mrf.mxu0
        %v856 = vadd.f32 %v531, %v855
        %v857 = vpop.f32.mrf.mxu0
        %v858 = vpop.f32.mrf.mxu0
        %v859 = vadd.f32 %v531, %v858
        %v860 = vpop.f32.mrf.mxu0
        %861 = vmatprep.mubr.bf16.mxu0 %v640
        %862 = vmatmul.mubr.bf16.gmra.mxu0 %v639
        %v863 = vpop.f32.mrf.mxu0
        %v864 = vadd.f32 %v531, %v863
        %v865 = vpop.f32.mrf.mxu0
        %v866 = vpop.f32.mrf.mxu0
        %v867 = vadd.f32 %v531, %v866
        %v868 = vpop.f32.mrf.mxu0
        %869 = vmatprep.mubr.bf16.mxu0 %v642
        %870 = vmatmul.mubr.bf16.gmra.mxu0 %v641
        %v871 = vpop.f32.mrf.mxu0
        %v872 = vadd.f32 %v531, %v871
        %v873 = vpop.f32.mrf.mxu0
        %v874 = vpop.f32.mrf.mxu0
        %v875 = vadd.f32 %v531, %v874
        %v876 = vpop.f32.mrf.mxu0
        %877 = vmatprep.mubr.bf16.mxu0 %v644
        %878 = vmatmul.mubr.bf16.gmra.mxu0 %v643
        %v879 = vpop.f32.mrf.mxu0
        %v880 = vadd.f32 %v531, %v879
        %v881 = vpop.f32.mrf.mxu0
        %v882 = vpop.f32.mrf.mxu0
        %v883 = vadd.f32 %v531, %v882
        %v884 = vpop.f32.mrf.mxu0
        %885 = vmatprep.mubr.bf16.mxu0 %v646
        %886 = vmatmul.mubr.bf16.gmra.mxu0 %v645
        %v887 = vpop.f32.mrf.mxu0
        %v888 = vadd.f32 %v531, %v887
        %v889 = vpop.f32.mrf.mxu0
        %v890 = vpop.f32.mrf.mxu0
        %v891 = vadd.f32 %v531, %v890
        %v892 = vpop.f32.mrf.mxu0
        %893 = vmatprep.mubr.bf16.mxu0 %v648
        %894 = vmatmul.mubr.bf16.gmra.mxu0 %v647
        %v895 = vpop.f32.mrf.mxu0
        %v896 = vadd.f32 %v531, %v895
        %v897 = vpop.f32.mrf.mxu0
        %v898 = vpop.f32.mrf.mxu0
        %v899 = vadd.f32 %v531, %v898
        %v900 = vpop.f32.mrf.mxu0
        %901 = vmatprep.mubr.bf16.mxu0 %v650
        %902 = vmatmul.mubr.bf16.gmra.mxu0 %v649
        %v903 = vpop.f32.mrf.mxu0
        %v904 = vadd.f32 %v531, %v903
        %v905 = vpop.f32.mrf.mxu0
        %v906 = vpop.f32.mrf.mxu0
        %v907 = vadd.f32 %v531, %v906
        %v908 = vpop.f32.mrf.mxu0
        %909 = vmatprep.mubr.bf16.mxu0 %v652
        %910 = vmatmul.mubr.bf16.gmra.mxu0 %v651
        %v911 = vpop.f32.mrf.mxu0
        %v912 = vadd.f32 %v531, %v911
        %v913 = vpop.f32.mrf.mxu0
        %v914 = vpop.f32.mrf.mxu0
        %v915 = vadd.f32 %v531, %v914
        %v916 = vpop.f32.mrf.mxu0
        %917 = vmatprep.mubr.bf16.mxu0 %v654
        %918 = vmatmul.mubr.bf16.gmra.mxu0 %v653
        %v919 = vpop.f32.mrf.mxu0
        %v920 = vadd.f32 %v531, %v919
        %v921 = vpop.f32.mrf.mxu0
        %v922 = vpop.f32.mrf.mxu0
        %v923 = vadd.f32 %v531, %v922
        %v924 = vpop.f32.mrf.mxu0
        %925 = vmatprep.mubr.bf16.mxu0 %v656
        %926 = vmatmul.mubr.bf16.gmra.mxu0 %v655
        %v927 = vpop.f32.mrf.mxu0
        %v928 = vadd.f32 %v531, %v927
        %v929 = vpop.f32.mrf.mxu0
        %v930 = vpop.f32.mrf.mxu0
        %v931 = vadd.f32 %v531, %v930
        %v932 = vpop.f32.mrf.mxu0
        %933 = vmatprep.mubr.bf16.mxu0 %v658
        %934 = vmatmul.mubr.bf16.gmra.mxu0 %v657
        %v935 = vpop.f32.mrf.mxu0
        %v936 = vadd.f32 %v531, %v935
        %v937 = vpop.f32.mrf.mxu0
        %v938 = vpop.f32.mrf.mxu0
        %v939 = vadd.f32 %v531, %v938
        %v940 = vpop.f32.mrf.mxu0
        %941 = vmatprep.mubr.bf16.mxu0 %v660
        %942 = vmatmul.mubr.bf16.gmra.mxu0 %v659
        %v943 = vpop.f32.mrf.mxu0
        %v944 = vadd.f32 %v531, %v943
        %v945 = vpop.f32.mrf.mxu0
        %v946 = vpop.f32.mrf.mxu0
        %v947 = vadd.f32 %v531, %v946
        %v948 = vpop.f32.mrf.mxu0
        %949 = vdwg.mxu0
        %v950 = vmax.f32 %v824, 0.0
        %v951 = vmax.f32 %v827, 0.0
        %v952 = vmax.f32 %v832, 0.0
        %v953 = vmax.f32 %v835, 0.0
        %v954 = vmax.f32 %v840, 0.0
        %v955 = vmax.f32 %v843, 0.0
        %v956 = vmax.f32 %v848, 0.0
        %v957 = vmax.f32 %v851, 0.0
        %v958 = vmax.f32 %v856, 0.0
        %v959 = vmax.f32 %v859, 0.0
        %v960 = vmax.f32 %v864, 0.0
        %v961 = vmax.f32 %v867, 0.0
        %v962 = vmax.f32 %v872, 0.0
        %v963 = vmax.f32 %v875, 0.0
        %v964 = vmax.f32 %v880, 0.0
        %v965 = vmax.f32 %v883, 0.0
        %v966 = vmax.f32 %v888, 0.0
        %v967 = vmax.f32 %v891, 0.0
        %v968 = vmax.f32 %v896, 0.0
        %v969 = vmax.f32 %v899, 0.0
        %v970 = vmax.f32 %v904, 0.0
        %v971 = vmax.f32 %v907, 0.0
        %v972 = vmax.f32 %v912, 0.0
        %v973 = vmax.f32 %v915, 0.0
        %v974 = vmax.f32 %v920, 0.0
        %v975 = vmax.f32 %v923, 0.0
        %v976 = vmax.f32 %v928, 0.0
        %v977 = vmax.f32 %v931, 0.0
        %v978 = vmax.f32 %v936, 0.0
        %v979 = vmax.f32 %v939, 0.0
        %v980 = vmax.f32 %v944, 0.0
        %v981 = vmax.f32 %v947, 0.0
        %vm982 = vcmp.ne.f32.partialorder %v824, %v824
        %vm983 = vcmp.ne.f32.partialorder %v827, %v827
        %vm984 = vcmp.ne.f32.partialorder %v832, %v832
        %vm985 = vcmp.ne.f32.partialorder %v835, %v835
        %vm986 = vcmp.ne.f32.partialorder %v840, %v840
        %vm987 = vcmp.ne.f32.partialorder %v843, %v843
        %vm988 = vcmp.ne.f32.partialorder %v848, %v848
        %vm989 = vcmp.ne.f32.partialorder %v851, %v851
        %vm990 = vcmp.ne.f32.partialorder %v856, %v856
        %vm991 = vcmp.ne.f32.partialorder %v859, %v859
        %vm992 = vcmp.ne.f32.partialorder %v864, %v864
        %vm993 = vcmp.ne.f32.partialorder %v867, %v867
        %vm994 = vcmp.ne.f32.partialorder %v872, %v872
        %vm995 = vcmp.ne.f32.partialorder %v875, %v875
        %vm996 = vcmp.ne.f32.partialorder %v880, %v880
        %vm997 = vcmp.ne.f32.partialorder %v883, %v883
        %vm998 = vcmp.ne.f32.partialorder %v888, %v888
        %vm999 = vcmp.ne.f32.partialorder %v891, %v891
        %vm1000 = vcmp.ne.f32.partialorder %v896, %v896
        %vm1001 = vcmp.ne.f32.partialorder %v899, %v899
        %vm1002 = vcmp.ne.f32.partialorder %v904, %v904
        %vm1003 = vcmp.ne.f32.partialorder %v907, %v907
        %vm1004 = vcmp.ne.f32.partialorder %v912, %v912
        %vm1005 = vcmp.ne.f32.partialorder %v915, %v915
        %vm1006 = vcmp.ne.f32.partialorder %v920, %v920
        %vm1007 = vcmp.ne.f32.partialorder %v923, %v923
        %vm1008 = vcmp.ne.f32.partialorder %v928, %v928
        %vm1009 = vcmp.ne.f32.partialorder %v931, %v931
        %vm1010 = vcmp.ne.f32.partialorder %v936, %v936
        %vm1011 = vcmp.ne.f32.partialorder %v939, %v939
        %vm1012 = vcmp.ne.f32.partialorder %v944, %v944
        %vm1013 = vcmp.ne.f32.partialorder %v947, %v947
        %v1014 = vadd.f32 %v824, 0.0
        %v1015 = vadd.f32 %v827, 0.0
        %v1016 = vadd.f32 %v832, 0.0
        %v1017 = vadd.f32 %v835, 0.0
        %v1018 = vadd.f32 %v840, 0.0
        %v1019 = vadd.f32 %v843, 0.0
        %v1020 = vadd.f32 %v848, 0.0
        %v1021 = vadd.f32 %v851, 0.0
        %v1022 = vadd.f32 %v856, 0.0
        %v1023 = vadd.f32 %v859, 0.0
        %v1024 = vadd.f32 %v864, 0.0
        %v1025 = vadd.f32 %v867, 0.0
        %v1026 = vadd.f32 %v872, 0.0
        %v1027 = vadd.f32 %v875, 0.0
        %v1028 = vadd.f32 %v880, 0.0
        %v1029 = vadd.f32 %v883, 0.0
        %v1030 = vadd.f32 %v888, 0.0
        %v1031 = vadd.f32 %v891, 0.0
        %v1032 = vadd.f32 %v896, 0.0
        %v1033 = vadd.f32 %v899, 0.0
        %v1034 = vadd.f32 %v904, 0.0
        %v1035 = vadd.f32 %v907, 0.0
        %v1036 = vadd.f32 %v912, 0.0
        %v1037 = vadd.f32 %v915, 0.0
        %v1038 = vadd.f32 %v920, 0.0
        %v1039 = vadd.f32 %v923, 0.0
        %v1040 = vadd.f32 %v928, 0.0
        %v1041 = vadd.f32 %v931, 0.0
        %v1042 = vadd.f32 %v936, 0.0
        %v1043 = vadd.f32 %v939, 0.0
        %v1044 = vadd.f32 %v944, 0.0
        %v1045 = vadd.f32 %v947, 0.0
        %v1046 = vand.u32 2147483647, %v824
        %v1047 = vand.u32 2147483647, %v827
        %v1048 = vand.u32 2147483647, %v832
        %v1049 = vand.u32 2147483647, %v835
        %v1050 = vand.u32 2147483647, %v840
        %v1051 = vand.u32 2147483647, %v843
        %v1052 = vand.u32 2147483647, %v848
        %v1053 = vand.u32 2147483647, %v851
        %v1054 = vand.u32 2147483647, %v856
        %v1055 = vand.u32 2147483647, %v859
        %v1056 = vand.u32 2147483647, %v864
        %v1057 = vand.u32 2147483647, %v867
        %v1058 = vand.u32 2147483647, %v872
        %v1059 = vand.u32 2147483647, %v875
        %v1060 = vand.u32 2147483647, %v880
        %v1061 = vand.u32 2147483647, %v883
        %v1062 = vand.u32 2147483647, %v888
        %v1063 = vand.u32 2147483647, %v891
        %v1064 = vand.u32 2147483647, %v896
        %v1065 = vand.u32 2147483647, %v899
        %v1066 = vand.u32 2147483647, %v904
        %v1067 = vand.u32 2147483647, %v907
        %v1068 = vand.u32 2147483647, %v912
        %v1069 = vand.u32 2147483647, %v915
        %v1070 = vand.u32 2147483647, %v920
        %v1071 = vand.u32 2147483647, %v923
        %v1072 = vand.u32 2147483647, %v928
        %v1073 = vand.u32 2147483647, %v931
        %v1074 = vand.u32 2147483647, %v936
        %v1075 = vand.u32 2147483647, %v939
        %v1076 = vand.u32 2147483647, %v944
        %v1077 = vand.u32 2147483647, %v947
        %v1078 = vsub.f32 0.0, %v1046
        %v1079 = vsub.f32 0.0, %v1047
        %v1080 = vsub.f32 0.0, %v1048
        %v1081 = vsub.f32 0.0, %v1049
        %v1082 = vsub.f32 0.0, %v1050
        %v1083 = vsub.f32 0.0, %v1051
        %v1084 = vsub.f32 0.0, %v1052
        %v1085 = vsub.f32 0.0, %v1053
        %v1086 = vsub.f32 0.0, %v1054
        %v1087 = vsub.f32 0.0, %v1055
        %v1088 = vsub.f32 0.0, %v1056
        %v1089 = vsub.f32 0.0, %v1057
        %v1090 = vsub.f32 0.0, %v1058
        %v1091 = vsub.f32 0.0, %v1059
        %v1092 = vsub.f32 0.0, %v1060
        %v1093 = vsub.f32 0.0, %v1061
        %v1094 = vsub.f32 0.0, %v1062
        %v1095 = vsub.f32 0.0, %v1063
        %v1096 = vsub.f32 0.0, %v1064
        %v1097 = vsub.f32 0.0, %v1065
        %v1098 = vsub.f32 0.0, %v1066
        %v1099 = vsub.f32 0.0, %v1067
        %v1100 = vsub.f32 0.0, %v1068
        %v1101 = vsub.f32 0.0, %v1069
        %v1102 = vsub.f32 0.0, %v1070
        %v1103 = vsub.f32 0.0, %v1071
        %v1104 = vsub.f32 0.0, %v1072
        %v1105 = vsub.f32 0.0, %v1073
        %v1106 = vsub.f32 0.0, %v1074
        %v1107 = vsub.f32 0.0, %v1075
        %v1108 = vsub.f32 0.0, %v1076
        %v1109 = vsub.f32 0.0, %v1077
        %v1110 = vmul.f32 %v1078, 1.442695
        %v1111 = vpow.pop %v1110
        %v1112 = vmul.f32 %v1079, 1.442695
        %v1113 = vpow.pop %v1112
        %v1114 = vmul.f32 %v1080, 1.442695
        %v1115 = vpow.pop %v1114
        %v1116 = vmul.f32 %v1081, 1.442695
        %v1117 = vpow.pop %v1116
        %v1118 = vmul.f32 %v1082, 1.442695
        %v1119 = vpow.pop %v1118
        %v1120 = vmul.f32 %v1083, 1.442695
        %v1121 = vpow.pop %v1120
        %v1122 = vmul.f32 %v1084, 1.442695
        %v1123 = vpow.pop %v1122
        %v1124 = vmul.f32 %v1085, 1.442695
        %v1125 = vpow.pop %v1124
        %v1126 = vmul.f32 %v1086, 1.442695
        %v1127 = vpow.pop %v1126
        %v1128 = vmul.f32 %v1087, 1.442695
        %v1129 = vpow.pop %v1128
        %v1130 = vmul.f32 %v1088, 1.442695
        %v1131 = vpow.pop %v1130
        %v1132 = vmul.f32 %v1089, 1.442695
        %v1133 = vpow.pop %v1132
        %v1134 = vmul.f32 %v1090, 1.442695
        %v1135 = vpow.pop %v1134
        %v1136 = vmul.f32 %v1091, 1.442695
        %v1137 = vpow.pop %v1136
        %v1138 = vmul.f32 %v1092, 1.442695
        %v1139 = vpow.pop %v1138
        %v1140 = vmul.f32 %v1093, 1.442695
        %v1141 = vpow.pop %v1140
        %v1142 = vmul.f32 %v1094, 1.442695
        %v1143 = vpow.pop %v1142
        %v1144 = vmul.f32 %v1095, 1.442695
        %v1145 = vpow.pop %v1144
        %v1146 = vmul.f32 %v1096, 1.442695
        %v1147 = vpow.pop %v1146
        %v1148 = vmul.f32 %v1097, 1.442695
        %v1149 = vpow.pop %v1148
        %v1150 = vmul.f32 %v1098, 1.442695
        %v1151 = vpow.pop %v1150
        %v1152 = vmul.f32 %v1099, 1.442695
        %v1153 = vpow.pop %v1152
        %v1154 = vmul.f32 %v1100, 1.442695
        %v1155 = vpow.pop %v1154
        %v1156 = vmul.f32 %v1101, 1.442695
        %v1157 = vpow.pop %v1156
        %v1158 = vmul.f32 %v1102, 1.442695
        %v1159 = vpow.pop %v1158
        %v1160 = vmul.f32 %v1103, 1.442695
        %v1161 = vpow.pop %v1160
        %v1162 = vmul.f32 %v1104, 1.442695
        %v1163 = vpow.pop %v1162
        %v1164 = vmul.f32 %v1105, 1.442695
        %v1165 = vpow.pop %v1164
        %v1166 = vmul.f32 %v1106, 1.442695
        %v1167 = vpow.pop %v1166
        %v1168 = vmul.f32 %v1107, 1.442695
        %v1169 = vpow.pop %v1168
        %v1170 = vmul.f32 %v1108, 1.442695
        %v1171 = vpow.pop %v1170
        %v1172 = vmul.f32 %v1109, 1.442695
        %v1173 = vpow.pop %v1172
        %v1174 = vadd.f32 %v1111, 1.0
        %v1175 = vlog2.pop %v1174
        %v1176 = vmul.f32 %v1175, 0.6931472
        %v1177 = vmul.f32 -0.5, %v1111
        %v1178 = vadd.f32 %v1177, 1.0
        %v1179 = vmul.f32 %v1178, %v1111
        %v1180 = vand.u32 2147483647, %v1111
        %vm1181 = vcmp.lt.f32.partialorder %v1180, 0.0004427343
        %v1182 = vsel %vm1181, %v1179, %v1176
        %v1183 = vadd.f32 %v1113, 1.0
        %v1184 = vlog2.pop %v1183
        %v1185 = vmul.f32 %v1184, 0.6931472
        %v1186 = vmul.f32 -0.5, %v1113
        %v1187 = vadd.f32 %v1186, 1.0
        %v1188 = vmul.f32 %v1187, %v1113
        %v1189 = vand.u32 2147483647, %v1113
        %vm1190 = vcmp.lt.f32.partialorder %v1189, 0.0004427343
        %v1191 = vsel %vm1190, %v1188, %v1185
        %v1192 = vadd.f32 %v1115, 1.0
        %v1193 = vlog2.pop %v1192
        %v1194 = vmul.f32 %v1193, 0.6931472
        %v1195 = vmul.f32 -0.5, %v1115
        %v1196 = vadd.f32 %v1195, 1.0
        %v1197 = vmul.f32 %v1196, %v1115
        %v1198 = vand.u32 2147483647, %v1115
        %vm1199 = vcmp.lt.f32.partialorder %v1198, 0.0004427343
        %v1200 = vsel %vm1199, %v1197, %v1194
        %v1201 = vadd.f32 %v1117, 1.0
        %v1202 = vlog2.pop %v1201
        %v1203 = vmul.f32 %v1202, 0.6931472
        %v1204 = vmul.f32 -0.5, %v1117
        %v1205 = vadd.f32 %v1204, 1.0
        %v1206 = vmul.f32 %v1205, %v1117
        %v1207 = vand.u32 2147483647, %v1117
        %vm1208 = vcmp.lt.f32.partialorder %v1207, 0.0004427343
        %v1209 = vsel %vm1208, %v1206, %v1203
        %v1210 = vadd.f32 %v1119, 1.0
        %v1211 = vlog2.pop %v1210
        %v1212 = vmul.f32 %v1211, 0.6931472
        %v1213 = vmul.f32 -0.5, %v1119
        %v1214 = vadd.f32 %v1213, 1.0
        %v1215 = vmul.f32 %v1214, %v1119
        %v1216 = vand.u32 2147483647, %v1119
        %vm1217 = vcmp.lt.f32.partialorder %v1216, 0.0004427343
        %v1218 = vsel %vm1217, %v1215, %v1212
        %v1219 = vadd.f32 %v1121, 1.0
        %v1220 = vlog2.pop %v1219
        %v1221 = vmul.f32 %v1220, 0.6931472
        %v1222 = vmul.f32 -0.5, %v1121
        %v1223 = vadd.f32 %v1222, 1.0
        %v1224 = vmul.f32 %v1223, %v1121
        %v1225 = vand.u32 2147483647, %v1121
        %vm1226 = vcmp.lt.f32.partialorder %v1225, 0.0004427343
        %v1227 = vsel %vm1226, %v1224, %v1221
        %v1228 = vadd.f32 %v1123, 1.0
        %v1229 = vlog2.pop %v1228
        %v1230 = vmul.f32 %v1229, 0.6931472
        %v1231 = vmul.f32 -0.5, %v1123
        %v1232 = vadd.f32 %v1231, 1.0
        %v1233 = vmul.f32 %v1232, %v1123
        %v1234 = vand.u32 2147483647, %v1123
        %vm1235 = vcmp.lt.f32.partialorder %v1234, 0.0004427343
        %v1236 = vsel %vm1235, %v1233, %v1230
        %v1237 = vadd.f32 %v1125, 1.0
        %v1238 = vlog2.pop %v1237
        %v1239 = vmul.f32 %v1238, 0.6931472
        %v1240 = vmul.f32 -0.5, %v1125
        %v1241 = vadd.f32 %v1240, 1.0
        %v1242 = vmul.f32 %v1241, %v1125
        %v1243 = vand.u32 2147483647, %v1125
        %vm1244 = vcmp.lt.f32.partialorder %v1243, 0.0004427343
        %v1245 = vsel %vm1244, %v1242, %v1239
        %v1246 = vadd.f32 %v1127, 1.0
        %v1247 = vlog2.pop %v1246
        %v1248 = vmul.f32 %v1247, 0.6931472
        %v1249 = vmul.f32 -0.5, %v1127
        %v1250 = vadd.f32 %v1249, 1.0
        %v1251 = vmul.f32 %v1250, %v1127
        %v1252 = vand.u32 2147483647, %v1127
        %vm1253 = vcmp.lt.f32.partialorder %v1252, 0.0004427343
        %v1254 = vsel %vm1253, %v1251, %v1248
        %v1255 = vadd.f32 %v1129, 1.0
        %v1256 = vlog2.pop %v1255
        %v1257 = vmul.f32 %v1256, 0.6931472
        %v1258 = vmul.f32 -0.5, %v1129
        %v1259 = vadd.f32 %v1258, 1.0
        %v1260 = vmul.f32 %v1259, %v1129
        %v1261 = vand.u32 2147483647, %v1129
        %vm1262 = vcmp.lt.f32.partialorder %v1261, 0.0004427343
        %v1263 = vsel %vm1262, %v1260, %v1257
        %v1264 = vadd.f32 %v1131, 1.0
        %v1265 = vlog2.pop %v1264
        %v1266 = vmul.f32 %v1265, 0.6931472
        %v1267 = vmul.f32 -0.5, %v1131
        %v1268 = vadd.f32 %v1267, 1.0
        %v1269 = vmul.f32 %v1268, %v1131
        %v1270 = vand.u32 2147483647, %v1131
        %vm1271 = vcmp.lt.f32.partialorder %v1270, 0.0004427343
        %v1272 = vsel %vm1271, %v1269, %v1266
        %v1273 = vadd.f32 %v1133, 1.0
        %v1274 = vlog2.pop %v1273
        %v1275 = vmul.f32 %v1274, 0.6931472
        %v1276 = vmul.f32 -0.5, %v1133
        %v1277 = vadd.f32 %v1276, 1.0
        %v1278 = vmul.f32 %v1277, %v1133
        %v1279 = vand.u32 2147483647, %v1133
        %vm1280 = vcmp.lt.f32.partialorder %v1279, 0.0004427343
        %v1281 = vsel %vm1280, %v1278, %v1275
        %v1282 = vadd.f32 %v1135, 1.0
        %v1283 = vlog2.pop %v1282
        %v1284 = vmul.f32 %v1283, 0.6931472
        %v1285 = vmul.f32 -0.5, %v1135
        %v1286 = vadd.f32 %v1285, 1.0
        %v1287 = vmul.f32 %v1286, %v1135
        %v1288 = vand.u32 2147483647, %v1135
        %vm1289 = vcmp.lt.f32.partialorder %v1288, 0.0004427343
        %v1290 = vsel %vm1289, %v1287, %v1284
        %v1291 = vadd.f32 %v1137, 1.0
        %v1292 = vlog2.pop %v1291
        %v1293 = vmul.f32 %v1292, 0.6931472
        %v1294 = vmul.f32 -0.5, %v1137
        %v1295 = vadd.f32 %v1294, 1.0
        %v1296 = vmul.f32 %v1295, %v1137
        %v1297 = vand.u32 2147483647, %v1137
        %vm1298 = vcmp.lt.f32.partialorder %v1297, 0.0004427343
        %v1299 = vsel %vm1298, %v1296, %v1293
        %v1300 = vadd.f32 %v1139, 1.0
        %v1301 = vlog2.pop %v1300
        %v1302 = vmul.f32 %v1301, 0.6931472
        %v1303 = vmul.f32 -0.5, %v1139
        %v1304 = vadd.f32 %v1303, 1.0
        %v1305 = vmul.f32 %v1304, %v1139
        %v1306 = vand.u32 2147483647, %v1139
        %vm1307 = vcmp.lt.f32.partialorder %v1306, 0.0004427343
        %v1308 = vsel %vm1307, %v1305, %v1302
        %v1309 = vadd.f32 %v1141, 1.0
        %v1310 = vlog2.pop %v1309
        %v1311 = vmul.f32 %v1310, 0.6931472
        %v1312 = vmul.f32 -0.5, %v1141
        %v1313 = vadd.f32 %v1312, 1.0
        %v1314 = vmul.f32 %v1313, %v1141
        %v1315 = vand.u32 2147483647, %v1141
        %vm1316 = vcmp.lt.f32.partialorder %v1315, 0.0004427343
        %v1317 = vsel %vm1316, %v1314, %v1311
        %v1318 = vadd.f32 %v1143, 1.0
        %v1319 = vlog2.pop %v1318
        %v1320 = vmul.f32 %v1319, 0.6931472
        %v1321 = vmul.f32 -0.5, %v1143
        %v1322 = vadd.f32 %v1321, 1.0
        %v1323 = vmul.f32 %v1322, %v1143
        %v1324 = vand.u32 2147483647, %v1143
        %vm1325 = vcmp.lt.f32.partialorder %v1324, 0.0004427343
        %v1326 = vsel %vm1325, %v1323, %v1320
        %v1327 = vadd.f32 %v1145, 1.0
        %v1328 = vlog2.pop %v1327
        %v1329 = vmul.f32 %v1328, 0.6931472
        %v1330 = vmul.f32 -0.5, %v1145
        %v1331 = vadd.f32 %v1330, 1.0
        %v1332 = vmul.f32 %v1331, %v1145
        %v1333 = vand.u32 2147483647, %v1145
        %vm1334 = vcmp.lt.f32.partialorder %v1333, 0.0004427343
        %v1335 = vsel %vm1334, %v1332, %v1329
        %v1336 = vadd.f32 %v1147, 1.0
        %v1337 = vlog2.pop %v1336
        %v1338 = vmul.f32 %v1337, 0.6931472
        %v1339 = vmul.f32 -0.5, %v1147
        %v1340 = vadd.f32 %v1339, 1.0
        %v1341 = vmul.f32 %v1340, %v1147
        %v1342 = vand.u32 2147483647, %v1147
        %vm1343 = vcmp.lt.f32.partialorder %v1342, 0.0004427343
        %v1344 = vsel %vm1343, %v1341, %v1338
        %v1345 = vadd.f32 %v1149, 1.0
        %v1346 = vlog2.pop %v1345
        %v1347 = vmul.f32 %v1346, 0.6931472
        %v1348 = vmul.f32 -0.5, %v1149
        %v1349 = vadd.f32 %v1348, 1.0
        %v1350 = vmul.f32 %v1349, %v1149
        %v1351 = vand.u32 2147483647, %v1149
        %vm1352 = vcmp.lt.f32.partialorder %v1351, 0.0004427343
        %v1353 = vsel %vm1352, %v1350, %v1347
        %v1354 = vadd.f32 %v1151, 1.0
        %v1355 = vlog2.pop %v1354
        %v1356 = vmul.f32 %v1355, 0.6931472
        %v1357 = vmul.f32 -0.5, %v1151
        %v1358 = vadd.f32 %v1357, 1.0
        %v1359 = vmul.f32 %v1358, %v1151
        %v1360 = vand.u32 2147483647, %v1151
        %vm1361 = vcmp.lt.f32.partialorder %v1360, 0.0004427343
        %v1362 = vsel %vm1361, %v1359, %v1356
        %v1363 = vadd.f32 %v1153, 1.0
        %v1364 = vlog2.pop %v1363
        %v1365 = vmul.f32 %v1364, 0.6931472
        %v1366 = vmul.f32 -0.5, %v1153
        %v1367 = vadd.f32 %v1366, 1.0
        %v1368 = vmul.f32 %v1367, %v1153
        %v1369 = vand.u32 2147483647, %v1153
        %vm1370 = vcmp.lt.f32.partialorder %v1369, 0.0004427343
        %v1371 = vsel %vm1370, %v1368, %v1365
        %v1372 = vadd.f32 %v1155, 1.0
        %v1373 = vlog2.pop %v1372
        %v1374 = vmul.f32 %v1373, 0.6931472
        %v1375 = vmul.f32 -0.5, %v1155
        %v1376 = vadd.f32 %v1375, 1.0
        %v1377 = vmul.f32 %v1376, %v1155
        %v1378 = vand.u32 2147483647, %v1155
        %vm1379 = vcmp.lt.f32.partialorder %v1378, 0.0004427343
        %v1380 = vsel %vm1379, %v1377, %v1374
        %v1381 = vadd.f32 %v1157, 1.0
        %v1382 = vlog2.pop %v1381
        %v1383 = vmul.f32 %v1382, 0.6931472
        %v1384 = vmul.f32 -0.5, %v1157
        %v1385 = vadd.f32 %v1384, 1.0
        %v1386 = vmul.f32 %v1385, %v1157
        %v1387 = vand.u32 2147483647, %v1157
        %vm1388 = vcmp.lt.f32.partialorder %v1387, 0.0004427343
        %v1389 = vsel %vm1388, %v1386, %v1383
        %v1390 = vadd.f32 %v1159, 1.0
        %v1391 = vlog2.pop %v1390
        %v1392 = vmul.f32 %v1391, 0.6931472
        %v1393 = vmul.f32 -0.5, %v1159
        %v1394 = vadd.f32 %v1393, 1.0
        %v1395 = vmul.f32 %v1394, %v1159
        %v1396 = vand.u32 2147483647, %v1159
        %vm1397 = vcmp.lt.f32.partialorder %v1396, 0.0004427343
        %v1398 = vsel %vm1397, %v1395, %v1392
        %v1399 = vadd.f32 %v1161, 1.0
        %v1400 = vlog2.pop %v1399
        %v1401 = vmul.f32 %v1400, 0.6931472
        %v1402 = vmul.f32 -0.5, %v1161
        %v1403 = vadd.f32 %v1402, 1.0
        %v1404 = vmul.f32 %v1403, %v1161
        %v1405 = vand.u32 2147483647, %v1161
        %vm1406 = vcmp.lt.f32.partialorder %v1405, 0.0004427343
        %v1407 = vsel %vm1406, %v1404, %v1401
        %v1408 = vadd.f32 %v1163, 1.0
        %v1409 = vlog2.pop %v1408
        %v1410 = vmul.f32 %v1409, 0.6931472
        %v1411 = vmul.f32 -0.5, %v1163
        %v1412 = vadd.f32 %v1411, 1.0
        %v1413 = vmul.f32 %v1412, %v1163
        %v1414 = vand.u32 2147483647, %v1163
        %vm1415 = vcmp.lt.f32.partialorder %v1414, 0.0004427343
        %v1416 = vsel %vm1415, %v1413, %v1410
        %v1417 = vadd.f32 %v1165, 1.0
        %v1418 = vlog2.pop %v1417
        %v1419 = vmul.f32 %v1418, 0.6931472
        %v1420 = vmul.f32 -0.5, %v1165
        %v1421 = vadd.f32 %v1420, 1.0
        %v1422 = vmul.f32 %v1421, %v1165
        %v1423 = vand.u32 2147483647, %v1165
        %vm1424 = vcmp.lt.f32.partialorder %v1423, 0.0004427343
        %v1425 = vsel %vm1424, %v1422, %v1419
        %v1426 = vadd.f32 %v1167, 1.0
        %v1427 = vlog2.pop %v1426
        %v1428 = vmul.f32 %v1427, 0.6931472
        %v1429 = vmul.f32 -0.5, %v1167
        %v1430 = vadd.f32 %v1429, 1.0
        %v1431 = vmul.f32 %v1430, %v1167
        %v1432 = vand.u32 2147483647, %v1167
        %vm1433 = vcmp.lt.f32.partialorder %v1432, 0.0004427343
        %v1434 = vsel %vm1433, %v1431, %v1428
        %v1435 = vadd.f32 %v1169, 1.0
        %v1436 = vlog2.pop %v1435
        %v1437 = vmul.f32 %v1436, 0.6931472
        %v1438 = vmul.f32 -0.5, %v1169
        %v1439 = vadd.f32 %v1438, 1.0
        %v1440 = vmul.f32 %v1439, %v1169
        %v1441 = vand.u32 2147483647, %v1169
        %vm1442 = vcmp.lt.f32.partialorder %v1441, 0.0004427343
        %v1443 = vsel %vm1442, %v1440, %v1437
        %v1444 = vadd.f32 %v1171, 1.0
        %v1445 = vlog2.pop %v1444
        %v1446 = vmul.f32 %v1445, 0.6931472
        %v1447 = vmul.f32 -0.5, %v1171
        %v1448 = vadd.f32 %v1447, 1.0
        %v1449 = vmul.f32 %v1448, %v1171
        %v1450 = vand.u32 2147483647, %v1171
        %vm1451 = vcmp.lt.f32.partialorder %v1450, 0.0004427343
        %v1452 = vsel %vm1451, %v1449, %v1446
        %v1453 = vadd.f32 %v1173, 1.0
        %v1454 = vlog2.pop %v1453
        %v1455 = vmul.f32 %v1454, 0.6931472
        %v1456 = vmul.f32 -0.5, %v1173
        %v1457 = vadd.f32 %v1456, 1.0
        %v1458 = vmul.f32 %v1457, %v1173
        %v1459 = vand.u32 2147483647, %v1173
        %vm1460 = vcmp.lt.f32.partialorder %v1459, 0.0004427343
        %v1461 = vsel %vm1460, %v1458, %v1455
        %v1462 = vadd.f32 %v950, %v1182
        %v1463 = vadd.f32 %v951, %v1191
        %v1464 = vadd.f32 %v952, %v1200
        %v1465 = vadd.f32 %v953, %v1209
        %v1466 = vadd.f32 %v954, %v1218
        %v1467 = vadd.f32 %v955, %v1227
        %v1468 = vadd.f32 %v956, %v1236
        %v1469 = vadd.f32 %v957, %v1245
        %v1470 = vadd.f32 %v958, %v1254
        %v1471 = vadd.f32 %v959, %v1263
        %v1472 = vadd.f32 %v960, %v1272
        %v1473 = vadd.f32 %v961, %v1281
        %v1474 = vadd.f32 %v962, %v1290
        %v1475 = vadd.f32 %v963, %v1299
        %v1476 = vadd.f32 %v964, %v1308
        %v1477 = vadd.f32 %v965, %v1317
        %v1478 = vadd.f32 %v966, %v1326
        %v1479 = vadd.f32 %v967, %v1335
        %v1480 = vadd.f32 %v968, %v1344
        %v1481 = vadd.f32 %v969, %v1353
        %v1482 = vadd.f32 %v970, %v1362
        %v1483 = vadd.f32 %v971, %v1371
        %v1484 = vadd.f32 %v972, %v1380
        %v1485 = vadd.f32 %v973, %v1389
        %v1486 = vadd.f32 %v974, %v1398
        %v1487 = vadd.f32 %v975, %v1407
        %v1488 = vadd.f32 %v976, %v1416
        %v1489 = vadd.f32 %v977, %v1425
        %v1490 = vadd.f32 %v978, %v1434
        %v1491 = vadd.f32 %v979, %v1443
        %v1492 = vadd.f32 %v980, %v1452
        %v1493 = vadd.f32 %v981, %v1461
        %v1494 = vsel %vm982, %v1014, %v1462
        %v1495 = vsel %vm983, %v1015, %v1463
        %v1496 = vsel %vm984, %v1016, %v1464
        %v1497 = vsel %vm985, %v1017, %v1465
        %v1498 = vsel %vm986, %v1018, %v1466
        %v1499 = vsel %vm987, %v1019, %v1467
        %v1500 = vsel %vm988, %v1020, %v1468
        %v1501 = vsel %vm989, %v1021, %v1469
        %v1502 = vsel %vm990, %v1022, %v1470
        %v1503 = vsel %vm991, %v1023, %v1471
        %v1504 = vsel %vm992, %v1024, %v1472
        %v1505 = vsel %vm993, %v1025, %v1473
        %v1506 = vsel %vm994, %v1026, %v1474
        %v1507 = vsel %vm995, %v1027, %v1475
        %v1508 = vsel %vm996, %v1028, %v1476
        %v1509 = vsel %vm997, %v1029, %v1477
        %v1510 = vsel %vm998, %v1030, %v1478
        %v1511 = vsel %vm999, %v1031, %v1479
        %v1512 = vsel %vm1000, %v1032, %v1480
        %v1513 = vsel %vm1001, %v1033, %v1481
        %v1514 = vsel %vm1002, %v1034, %v1482
        %v1515 = vsel %vm1003, %v1035, %v1483
        %v1516 = vsel %vm1004, %v1036, %v1484
        %v1517 = vsel %vm1005, %v1037, %v1485
        %v1518 = vsel %vm1006, %v1038, %v1486
        %v1519 = vsel %vm1007, %v1039, %v1487
        %v1520 = vsel %vm1008, %v1040, %v1488
        %v1521 = vsel %vm1009, %v1041, %v1489
        %v1522 = vsel %vm1010, %v1042, %v1490
        %v1523 = vsel %vm1011, %v1043, %v1491
        %v1524 = vsel %vm1012, %v1044, %v1492
        %v1525 = vsel %vm1013, %v1045, %v1493
        %v1526 = vpack.c.bf16 %v1495, %v1494
        %v1527 = vpack.c.bf16 %v1497, %v1496
        %v1528 = vpack.c.bf16 %v1499, %v1498
        %v1529 = vpack.c.bf16 %v1501, %v1500
        %v1530 = vpack.c.bf16 %v1503, %v1502
        %v1531 = vpack.c.bf16 %v1505, %v1504
        %v1532 = vpack.c.bf16 %v1507, %v1506
        %v1533 = vpack.c.bf16 %v1509, %v1508
        %v1534 = vpack.c.bf16 %v1511, %v1510
        %v1535 = vpack.c.bf16 %v1513, %v1512
        %v1536 = vpack.c.bf16 %v1515, %v1514
        %v1537 = vpack.c.bf16 %v1517, %v1516
        %v1538 = vpack.c.bf16 %v1519, %v1518
        %v1539 = vpack.c.bf16 %v1521, %v1520
        %v1540 = vpack.c.bf16 %v1523, %v1522
        %v1541 = vpack.c.bf16 %v1525, %v1524
        %v1542 = vld [vmem:[%s4] sm:$0xff]
        %v1543 = vld [vmem:[%s4 + $0x8] sm:$0xff]
        %v1544 = vld [vmem:[%s4 + $0x10] sm:$0xff]
        %v1545 = vld [vmem:[%s4 + $0x18] sm:$0xff]
        %v1546 = vld [vmem:[%s4 + $0x20] sm:$0xff]
        %v1547 = vld [vmem:[%s4 + $0x28] sm:$0xff]
        %v1548 = vld [vmem:[%s4 + $0x30] sm:$0xff]
        %v1549 = vld [vmem:[%s4 + $0x38] sm:$0xff]
        %v1550 = vld [vmem:[%s4 + $0x40] sm:$0xff]
        %v1551 = vld [vmem:[%s4 + $0x48] sm:$0xff]
        %v1552 = vld [vmem:[%s4 + $0x50] sm:$0xff]
        %v1553 = vld [vmem:[%s4 + $0x58] sm:$0xff]
        %v1554 = vld [vmem:[%s4 + $0x60] sm:$0xff]
        %v1555 = vld [vmem:[%s4 + $0x68] sm:$0xff]
        %v1556 = vld [vmem:[%s4 + $0x70] sm:$0xff]
        %v1557 = vld [vmem:[%s4 + $0x78] sm:$0xff]
        %v1558 = vld [vmem:[%s5] sm:$0x3]
        %v1560 = vlaneseq
        %v1561 = vshrl.u32 %v1560, 7
        %v1562 = vsub.s32 0, %v1561
        %v1563 = vrot.slane %v1558, %v1562
        %v1564 = vlaneseq
        %v1565 = vshrl.u32 %v1564, 7
        %v1566 = vsub.s32 1, %v1565
        %v1567 = vrot.slane %v1558, %v1566
        %v1586 = vunpack.c.l.b16 %v1542
        %v1587 = vunpack.c.h.b16 %v1542
        %v1588 = vunpack.c.l.b16 %v1543
        %v1589 = vunpack.c.h.b16 %v1543
        %v1590 = vunpack.c.l.b16 %v1544
        %v1591 = vunpack.c.h.b16 %v1544
        %v1592 = vunpack.c.l.b16 %v1545
        %v1593 = vunpack.c.h.b16 %v1545
        %v1594 = vunpack.c.l.b16 %v1546
        %v1595 = vunpack.c.h.b16 %v1546
        %v1596 = vunpack.c.l.b16 %v1547
        %v1597 = vunpack.c.h.b16 %v1547
        %v1598 = vunpack.c.l.b16 %v1548
        %v1599 = vunpack.c.h.b16 %v1548
        %v1600 = vunpack.c.l.b16 %v1549
        %v1601 = vunpack.c.h.b16 %v1549
        %v1602 = vunpack.c.l.b16 %v1550
        %v1603 = vunpack.c.h.b16 %v1550
        %v1604 = vunpack.c.l.b16 %v1551
        %v1605 = vunpack.c.h.b16 %v1551
        %v1606 = vunpack.c.l.b16 %v1552
        %v1607 = vunpack.c.h.b16 %v1552
        %v1608 = vunpack.c.l.b16 %v1553
        %v1609 = vunpack.c.h.b16 %v1553
        %v1610 = vunpack.c.l.b16 %v1554
        %v1611 = vunpack.c.h.b16 %v1554
        %v1612 = vunpack.c.l.b16 %v1555
        %v1613 = vunpack.c.h.b16 %v1555
        %v1614 = vunpack.c.l.b16 %v1556
        %v1615 = vunpack.c.h.b16 %v1556
        %v1616 = vunpack.c.l.b16 %v1557
        %v1617 = vunpack.c.h.b16 %v1557
        %v1618 = vpack.c.b16 %v1588, %v1586
        %v1619 = vpack.c.b16 %v1589, %v1587
        %v1620 = vpack.c.b16 %v1592, %v1590
        %v1621 = vpack.c.b16 %v1593, %v1591
        %v1622 = vpack.c.b16 %v1596, %v1594
        %v1623 = vpack.c.b16 %v1597, %v1595
        %v1624 = vpack.c.b16 %v1600, %v1598
        %v1625 = vpack.c.b16 %v1601, %v1599
        %v1626 = vpack.c.b16 %v1604, %v1602
        %v1627 = vpack.c.b16 %v1605, %v1603
        %v1628 = vpack.c.b16 %v1608, %v1606
        %v1629 = vpack.c.b16 %v1609, %v1607
        %v1630 = vpack.c.b16 %v1612, %v1610
        %v1631 = vpack.c.b16 %v1613, %v1611
        %v1632 = vpack.c.b16 %v1616, %v1614
        %v1633 = vpack.c.b16 %v1617, %v1615
        %1650 = vmatprep.subr.bf16.mxu0 %v1633
        %1651 = vmatpush1.bf16.msra.mxu0 %v1632
        %1652 = vmatprep.subr.bf16.mxu0 %v1631
        %1653 = vmatpush1.bf16.msra.mxu0 %v1630
        %1654 = vmatprep.subr.bf16.mxu0 %v1629
        %1655 = vmatpush1.bf16.msra.mxu0 %v1628
        %1656 = vmatprep.subr.bf16.mxu0 %v1627
        %1657 = vmatpush1.bf16.msra.mxu0 %v1626
        %1658 = vmatprep.subr.bf16.mxu0 %v1625
        %1659 = vmatpush1.bf16.msra.mxu0 %v1624
        %1660 = vmatprep.subr.bf16.mxu0 %v1623
        %1661 = vmatpush1.bf16.msra.mxu0 %v1622
        %1662 = vmatprep.subr.bf16.mxu0 %v1621
        %1663 = vmatpush1.bf16.msra.mxu0 %v1620
        %1664 = vmatprep.subr.bf16.mxu0 %v1619
        %1665 = vmatpush1.bf16.msra.mxu0 %v1618
        %1666 = vmatprep.subr.bf16.mxu0 0
        %1667 = vmatpush2.bf16.msra.mxu0 0
        %1668 = vmatprep.subr.bf16.mxu0 0
        %1669 = vmatpush2.bf16.msra.mxu0 0
        %1670 = vmatprep.subr.bf16.mxu0 0
        %1671 = vmatpush2.bf16.msra.mxu0 0
        %1672 = vmatprep.subr.bf16.mxu0 0
        %1673 = vmatpush2.bf16.msra.mxu0 0
        %1674 = vmatprep.subr.bf16.mxu0 0
        %1675 = vmatpush2.bf16.msra.mxu0 0
        %1676 = vmatprep.subr.bf16.mxu0 0
        %1677 = vmatpush2.bf16.msra.mxu0 0
        %1678 = vmatprep.subr.bf16.mxu0 0
        %1679 = vmatpush2.bf16.msra.mxu0 0
        %1680 = vmatprep.subr.bf16.mxu0 0
        %1681 = vmatpush2.bf16.msra.mxu0 0
        %1682 = vmatprep.mubr.bf16.mxu0 0
        %1683 = vmatmul.mubr.bf16.gmra.mxu0 %v1526
        %v1684 = vpop.f32.mrf.mxu0
        %v1685 = vadd.f32 %v1563, %v1684
        %v1686 = vpop.f32.mrf.mxu0
        %v1687 = vadd.f32 %v1567, %v1686
        %v1688 = vpop.f32.mrf.mxu0
        %v1689 = vadd.f32 %v1563, %v1688
        %v1690 = vpop.f32.mrf.mxu0
        %v1691 = vadd.f32 %v1567, %v1690
        %1692 = vmatprep.mubr.bf16.mxu0 0
        %1693 = vmatmul.mubr.bf16.gmra.mxu0 %v1527
        %v1694 = vpop.f32.mrf.mxu0
        %v1695 = vadd.f32 %v1563, %v1694
        %v1696 = vpop.f32.mrf.mxu0
        %v1697 = vadd.f32 %v1567, %v1696
        %v1698 = vpop.f32.mrf.mxu0
        %v1699 = vadd.f32 %v1563, %v1698
        %v1700 = vpop.f32.mrf.mxu0
        %v1701 = vadd.f32 %v1567, %v1700
        %1702 = vmatprep.mubr.bf16.mxu0 0
        %1703 = vmatmul.mubr.bf16.gmra.mxu0 %v1528
        %v1704 = vpop.f32.mrf.mxu0
        %v1705 = vadd.f32 %v1563, %v1704
        %v1706 = vpop.f32.mrf.mxu0
        %v1707 = vadd.f32 %v1567, %v1706
        %v1708 = vpop.f32.mrf.mxu0
        %v1709 = vadd.f32 %v1563, %v1708
        %v1710 = vpop.f32.mrf.mxu0
        %v1711 = vadd.f32 %v1567, %v1710
        %1712 = vmatprep.mubr.bf16.mxu0 0
        %1713 = vmatmul.mubr.bf16.gmra.mxu0 %v1529
        %v1714 = vpop.f32.mrf.mxu0
        %v1715 = vadd.f32 %v1563, %v1714
        %v1716 = vpop.f32.mrf.mxu0
        %v1717 = vadd.f32 %v1567, %v1716
        %v1718 = vpop.f32.mrf.mxu0
        %v1719 = vadd.f32 %v1563, %v1718
        %v1720 = vpop.f32.mrf.mxu0
        %v1721 = vadd.f32 %v1567, %v1720
        %1722 = vmatprep.mubr.bf16.mxu0 0
        %1723 = vmatmul.mubr.bf16.gmra.mxu0 %v1530
        %v1724 = vpop.f32.mrf.mxu0
        %v1725 = vadd.f32 %v1563, %v1724
        %v1726 = vpop.f32.mrf.mxu0
        %v1727 = vadd.f32 %v1567, %v1726
        %v1728 = vpop.f32.mrf.mxu0
        %v1729 = vadd.f32 %v1563, %v1728
        %v1730 = vpop.f32.mrf.mxu0
        %v1731 = vadd.f32 %v1567, %v1730
        %1732 = vmatprep.mubr.bf16.mxu0 0
        %1733 = vmatmul.mubr.bf16.gmra.mxu0 %v1531
        %v1734 = vpop.f32.mrf.mxu0
        %v1735 = vadd.f32 %v1563, %v1734
        %v1736 = vpop.f32.mrf.mxu0
        %v1737 = vadd.f32 %v1567, %v1736
        %v1738 = vpop.f32.mrf.mxu0
        %v1739 = vadd.f32 %v1563, %v1738
        %v1740 = vpop.f32.mrf.mxu0
        %v1741 = vadd.f32 %v1567, %v1740
        %1742 = vmatprep.mubr.bf16.mxu0 0
        %1743 = vmatmul.mubr.bf16.gmra.mxu0 %v1532
        %v1744 = vpop.f32.mrf.mxu0
        %v1745 = vadd.f32 %v1563, %v1744
        %v1746 = vpop.f32.mrf.mxu0
        %v1747 = vadd.f32 %v1567, %v1746
        %v1748 = vpop.f32.mrf.mxu0
        %v1749 = vadd.f32 %v1563, %v1748
        %v1750 = vpop.f32.mrf.mxu0
        %v1751 = vadd.f32 %v1567, %v1750
        %1752 = vmatprep.mubr.bf16.mxu0 0
        %1753 = vmatmul.mubr.bf16.gmra.mxu0 %v1533
        %v1754 = vpop.f32.mrf.mxu0
        %v1755 = vadd.f32 %v1563, %v1754
        %v1756 = vpop.f32.mrf.mxu0
        %v1757 = vadd.f32 %v1567, %v1756
        %v1758 = vpop.f32.mrf.mxu0
        %v1759 = vadd.f32 %v1563, %v1758
        %v1760 = vpop.f32.mrf.mxu0
        %v1761 = vadd.f32 %v1567, %v1760
        %1762 = vmatprep.mubr.bf16.mxu0 0
        %1763 = vmatmul.mubr.bf16.gmra.mxu0 %v1534
        %v1764 = vpop.f32.mrf.mxu0
        %v1765 = vadd.f32 %v1563, %v1764
        %v1766 = vpop.f32.mrf.mxu0
        %v1767 = vadd.f32 %v1567, %v1766
        %v1768 = vpop.f32.mrf.mxu0
        %v1769 = vadd.f32 %v1563, %v1768
        %v1770 = vpop.f32.mrf.mxu0
        %v1771 = vadd.f32 %v1567, %v1770
        %1772 = vmatprep.mubr.bf16.mxu0 0
        %1773 = vmatmul.mubr.bf16.gmra.mxu0 %v1535
        %v1774 = vpop.f32.mrf.mxu0
        %v1775 = vadd.f32 %v1563, %v1774
        %v1776 = vpop.f32.mrf.mxu0
        %v1777 = vadd.f32 %v1567, %v1776
        %v1778 = vpop.f32.mrf.mxu0
        %v1779 = vadd.f32 %v1563, %v1778
        %v1780 = vpop.f32.mrf.mxu0
        %v1781 = vadd.f32 %v1567, %v1780
        %1782 = vmatprep.mubr.bf16.mxu0 0
        %1783 = vmatmul.mubr.bf16.gmra.mxu0 %v1536
        %v1784 = vpop.f32.mrf.mxu0
        %v1785 = vadd.f32 %v1563, %v1784
        %v1786 = vpop.f32.mrf.mxu0
        %v1787 = vadd.f32 %v1567, %v1786
        %v1788 = vpop.f32.mrf.mxu0
        %v1789 = vadd.f32 %v1563, %v1788
        %v1790 = vpop.f32.mrf.mxu0
        %v1791 = vadd.f32 %v1567, %v1790
        %1792 = vmatprep.mubr.bf16.mxu0 0
        %1793 = vmatmul.mubr.bf16.gmra.mxu0 %v1537
        %v1794 = vpop.f32.mrf.mxu0
        %v1795 = vadd.f32 %v1563, %v1794
        %v1796 = vpop.f32.mrf.mxu0
        %v1797 = vadd.f32 %v1567, %v1796
        %v1798 = vpop.f32.mrf.mxu0
        %v1799 = vadd.f32 %v1563, %v1798
        %v1800 = vpop.f32.mrf.mxu0
        %v1801 = vadd.f32 %v1567, %v1800
        %1802 = vmatprep.mubr.bf16.mxu0 0
        %1803 = vmatmul.mubr.bf16.gmra.mxu0 %v1538
        %v1804 = vpop.f32.mrf.mxu0
        %v1805 = vadd.f32 %v1563, %v1804
        %v1806 = vpop.f32.mrf.mxu0
        %v1807 = vadd.f32 %v1567, %v1806
        %v1808 = vpop.f32.mrf.mxu0
        %v1809 = vadd.f32 %v1563, %v1808
        %v1810 = vpop.f32.mrf.mxu0
        %v1811 = vadd.f32 %v1567, %v1810
        %1812 = vmatprep.mubr.bf16.mxu0 0
        %1813 = vmatmul.mubr.bf16.gmra.mxu0 %v1539
        %v1814 = vpop.f32.mrf.mxu0
        %v1815 = vadd.f32 %v1563, %v1814
        %v1816 = vpop.f32.mrf.mxu0
        %v1817 = vadd.f32 %v1567, %v1816
        %v1818 = vpop.f32.mrf.mxu0
        %v1819 = vadd.f32 %v1563, %v1818
        %v1820 = vpop.f32.mrf.mxu0
        %v1821 = vadd.f32 %v1567, %v1820
        %1822 = vmatprep.mubr.bf16.mxu0 0
        %1823 = vmatmul.mubr.bf16.gmra.mxu0 %v1540
        %v1824 = vpop.f32.mrf.mxu0
        %v1825 = vadd.f32 %v1563, %v1824
        %v1826 = vpop.f32.mrf.mxu0
        %v1827 = vadd.f32 %v1567, %v1826
        %v1828 = vpop.f32.mrf.mxu0
        %v1829 = vadd.f32 %v1563, %v1828
        %v1830 = vpop.f32.mrf.mxu0
        %v1831 = vadd.f32 %v1567, %v1830
        %1832 = vmatprep.mubr.bf16.mxu0 0
        %1833 = vmatmul.mubr.bf16.gmra.mxu0 %v1541
        %v1834 = vpop.f32.mrf.mxu0
        %v1835 = vadd.f32 %v1563, %v1834
        %v1836 = vpop.f32.mrf.mxu0
        %v1837 = vadd.f32 %v1567, %v1836
        %v1838 = vpop.f32.mrf.mxu0
        %v1839 = vadd.f32 %v1563, %v1838
        %v1840 = vpop.f32.mrf.mxu0
        %v1841 = vadd.f32 %v1567, %v1840
        %1842 = vdwg.mxu0
        %v1843 = vmul.f32 %v1687, 0.5
        %v1844 = vmul.f32 %v1691, 0.5
        %v1845 = vmul.f32 %v1697, 0.5
        %v1846 = vmul.f32 %v1701, 0.5
        %v1847 = vmul.f32 %v1707, 0.5
        %v1848 = vmul.f32 %v1711, 0.5
        %v1849 = vmul.f32 %v1717, 0.5
        %v1850 = vmul.f32 %v1721, 0.5
        %v1851 = vmul.f32 %v1727, 0.5
        %v1852 = vmul.f32 %v1731, 0.5
        %v1853 = vmul.f32 %v1737, 0.5
        %v1854 = vmul.f32 %v1741, 0.5
        %v1855 = vmul.f32 %v1747, 0.5
        %v1856 = vmul.f32 %v1751, 0.5
        %v1857 = vmul.f32 %v1757, 0.5
        %v1858 = vmul.f32 %v1761, 0.5
        %v1859 = vmul.f32 %v1767, 0.5
        %v1860 = vmul.f32 %v1771, 0.5
        %v1861 = vmul.f32 %v1777, 0.5
        %v1862 = vmul.f32 %v1781, 0.5
        %v1863 = vmul.f32 %v1787, 0.5
        %v1864 = vmul.f32 %v1791, 0.5
        %v1865 = vmul.f32 %v1797, 0.5
        %v1866 = vmul.f32 %v1801, 0.5
        %v1867 = vmul.f32 %v1807, 0.5
        %v1868 = vmul.f32 %v1811, 0.5
        %v1869 = vmul.f32 %v1817, 0.5
        %v1870 = vmul.f32 %v1821, 0.5
        %v1871 = vmul.f32 %v1827, 0.5
        %v1872 = vmul.f32 %v1831, 0.5
        %v1873 = vmul.f32 %v1837, 0.5
        %v1874 = vmul.f32 %v1841, 0.5
        %v1875 = vmul.f32 %v1843, 1.442695
        %v1876 = vpow.pop %v1875
        %v1877 = vmul.f32 %v1844, 1.442695
        %v1878 = vpow.pop %v1877
        %v1879 = vmul.f32 %v1845, 1.442695
        %v1880 = vpow.pop %v1879
        %v1881 = vmul.f32 %v1846, 1.442695
        %v1882 = vpow.pop %v1881
        %v1883 = vmul.f32 %v1847, 1.442695
        %v1884 = vpow.pop %v1883
        %v1885 = vmul.f32 %v1848, 1.442695
        %v1886 = vpow.pop %v1885
        %v1887 = vmul.f32 %v1849, 1.442695
        %v1888 = vpow.pop %v1887
        %v1889 = vmul.f32 %v1850, 1.442695
        %v1890 = vpow.pop %v1889
        %v1891 = vmul.f32 %v1851, 1.442695
        %v1892 = vpow.pop %v1891
        %v1893 = vmul.f32 %v1852, 1.442695
        %v1894 = vpow.pop %v1893
        %v1895 = vmul.f32 %v1853, 1.442695
        %v1896 = vpow.pop %v1895
        %v1897 = vmul.f32 %v1854, 1.442695
        %v1898 = vpow.pop %v1897
        %v1899 = vmul.f32 %v1855, 1.442695
        %v1900 = vpow.pop %v1899
        %v1901 = vmul.f32 %v1856, 1.442695
        %v1902 = vpow.pop %v1901
        %v1903 = vmul.f32 %v1857, 1.442695
        %v1904 = vpow.pop %v1903
        %v1905 = vmul.f32 %v1858, 1.442695
        %v1906 = vpow.pop %v1905
        %v1907 = vmul.f32 %v1859, 1.442695
        %v1908 = vpow.pop %v1907
        %v1909 = vmul.f32 %v1860, 1.442695
        %v1910 = vpow.pop %v1909
        %v1911 = vmul.f32 %v1861, 1.442695
        %v1912 = vpow.pop %v1911
        %v1913 = vmul.f32 %v1862, 1.442695
        %v1914 = vpow.pop %v1913
        %v1915 = vmul.f32 %v1863, 1.442695
        %v1916 = vpow.pop %v1915
        %v1917 = vmul.f32 %v1864, 1.442695
        %v1918 = vpow.pop %v1917
        %v1919 = vmul.f32 %v1865, 1.442695
        %v1920 = vpow.pop %v1919
        %v1921 = vmul.f32 %v1866, 1.442695
        %v1922 = vpow.pop %v1921
        %v1923 = vmul.f32 %v1867, 1.442695
        %v1924 = vpow.pop %v1923
        %v1925 = vmul.f32 %v1868, 1.442695
        %v1926 = vpow.pop %v1925
        %v1927 = vmul.f32 %v1869, 1.442695
        %v1928 = vpow.pop %v1927
        %v1929 = vmul.f32 %v1870, 1.442695
        %v1930 = vpow.pop %v1929
        %v1931 = vmul.f32 %v1871, 1.442695
        %v1932 = vpow.pop %v1931
        %v1933 = vmul.f32 %v1872, 1.442695
        %v1934 = vpow.pop %v1933
        %v1935 = vmul.f32 %v1873, 1.442695
        %v1936 = vpow.pop %v1935
        %v1937 = vmul.f32 %v1874, 1.442695
        %v1938 = vpow.pop %v1937
        %v1939 = vmul.f32 %v462, %v1876
        %v1940 = vmul.f32 %v463, %v1878
        %v1941 = vmul.f32 %v464, %v1880
        %v1942 = vmul.f32 %v465, %v1882
        %v1943 = vmul.f32 %v466, %v1884
        %v1944 = vmul.f32 %v467, %v1886
        %v1945 = vmul.f32 %v468, %v1888
        %v1946 = vmul.f32 %v469, %v1890
        %v1947 = vmul.f32 %v470, %v1892
        %v1948 = vmul.f32 %v471, %v1894
        %v1949 = vmul.f32 %v472, %v1896
        %v1950 = vmul.f32 %v473, %v1898
        %v1951 = vmul.f32 %v474, %v1900
        %v1952 = vmul.f32 %v475, %v1902
        %v1953 = vmul.f32 %v476, %v1904
        %v1954 = vmul.f32 %v477, %v1906
        %v1955 = vmul.f32 %v478, %v1908
        %v1956 = vmul.f32 %v479, %v1910
        %v1957 = vmul.f32 %v480, %v1912
        %v1958 = vmul.f32 %v481, %v1914
        %v1959 = vmul.f32 %v482, %v1916
        %v1960 = vmul.f32 %v483, %v1918
        %v1961 = vmul.f32 %v484, %v1920
        %v1962 = vmul.f32 %v485, %v1922
        %v1963 = vmul.f32 %v486, %v1924
        %v1964 = vmul.f32 %v487, %v1926
        %v1965 = vmul.f32 %v488, %v1928
        %v1966 = vmul.f32 %v489, %v1930
        %v1967 = vmul.f32 %v490, %v1932
        %v1968 = vmul.f32 %v491, %v1934
        %v1969 = vmul.f32 %v492, %v1936
        %v1970 = vmul.f32 %v493, %v1938
        %v1971 = vadd.f32 %v1685, %v1939
        %v1972 = vadd.f32 %v1689, %v1940
        %v1973 = vadd.f32 %v1695, %v1941
        %v1974 = vadd.f32 %v1699, %v1942
        %v1975 = vadd.f32 %v1705, %v1943
        %v1976 = vadd.f32 %v1709, %v1944
        %v1977 = vadd.f32 %v1715, %v1945
        %v1978 = vadd.f32 %v1719, %v1946
        %v1979 = vadd.f32 %v1725, %v1947
        %v1980 = vadd.f32 %v1729, %v1948
        %v1981 = vadd.f32 %v1735, %v1949
        %v1982 = vadd.f32 %v1739, %v1950
        %v1983 = vadd.f32 %v1745, %v1951
        %v1984 = vadd.f32 %v1749, %v1952
        %v1985 = vadd.f32 %v1755, %v1953
        %v1986 = vadd.f32 %v1759, %v1954
        %v1987 = vadd.f32 %v1765, %v1955
        %v1988 = vadd.f32 %v1769, %v1956
        %v1989 = vadd.f32 %v1775, %v1957
        %v1990 = vadd.f32 %v1779, %v1958
        %v1991 = vadd.f32 %v1785, %v1959
        %v1992 = vadd.f32 %v1789, %v1960
        %v1993 = vadd.f32 %v1795, %v1961
        %v1994 = vadd.f32 %v1799, %v1962
        %v1995 = vadd.f32 %v1805, %v1963
        %v1996 = vadd.f32 %v1809, %v1964
        %v1997 = vadd.f32 %v1815, %v1965
        %v1998 = vadd.f32 %v1819, %v1966
        %v1999 = vadd.f32 %v1825, %v1967
        %v2000 = vadd.f32 %v1829, %v1968
        %v2001 = vadd.f32 %v1835, %v1969
        %v2002 = vadd.f32 %v1839, %v1970
        %v2003 = vpack.c.bf16 %v1972, %v1971
        %v2004 = vpack.c.bf16 %v1974, %v1973
        %v2005 = vpack.c.bf16 %v1976, %v1975
        %v2006 = vpack.c.bf16 %v1978, %v1977
        %v2007 = vpack.c.bf16 %v1980, %v1979
        %v2008 = vpack.c.bf16 %v1982, %v1981
        %v2009 = vpack.c.bf16 %v1984, %v1983
        %v2010 = vpack.c.bf16 %v1986, %v1985
        %v2011 = vpack.c.bf16 %v1988, %v1987
        %v2012 = vpack.c.bf16 %v1990, %v1989
        %v2013 = vpack.c.bf16 %v1992, %v1991
        %v2014 = vpack.c.bf16 %v1994, %v1993
        %v2015 = vpack.c.bf16 %v1996, %v1995
        %v2016 = vpack.c.bf16 %v1998, %v1997
        %v2017 = vpack.c.bf16 %v2000, %v1999
        %v2018 = vpack.c.bf16 %v2002, %v2001
        %v2019 = vld [vmem:[%s6] sm:$0xf]
        %v2020 = vld [vmem:[%s6 + $0x4] sm:$0xf]
        %v2021 = vld [vmem:[%s6 + $0x8] sm:$0xf]
        %v2022 = vld [vmem:[%s6 + $0xc] sm:$0xf]
        %v2023 = vld [vmem:[%s6 + $0x10] sm:$0xf]
        %v2024 = vld [vmem:[%s6 + $0x14] sm:$0xf]
        %v2025 = vld [vmem:[%s6 + $0x18] sm:$0xf]
        %v2026 = vld [vmem:[%s6 + $0x1c] sm:$0xf]
        %v2027 = vld [vmem:[%s6 + $0x20] sm:$0xf]
        %v2028 = vld [vmem:[%s6 + $0x24] sm:$0xf]
        %v2029 = vld [vmem:[%s6 + $0x28] sm:$0xf]
        %v2030 = vld [vmem:[%s6 + $0x2c] sm:$0xf]
        %v2031 = vld [vmem:[%s6 + $0x30] sm:$0xf]
        %v2032 = vld [vmem:[%s6 + $0x34] sm:$0xf]
        %v2033 = vld [vmem:[%s6 + $0x38] sm:$0xf]
        %v2034 = vld [vmem:[%s6 + $0x3c] sm:$0xf]
        %v2035 = vld [vmem:[%s7] sm:$0x1]
        %v2037 = vlaneseq
        %v2038 = vshrl.u32 %v2037, 7
        %v2039 = vsub.s32 0, %v2038
        %v2040 = vrot.slane %v2035, %v2039
        %v2058 = vunpack.c.l.b16 %v2019
        %v2059 = vunpack.c.l.b16 %v2020
        %v2060 = vunpack.c.l.b16 %v2021
        %v2061 = vunpack.c.l.b16 %v2022
        %v2062 = vunpack.c.l.b16 %v2023
        %v2063 = vunpack.c.l.b16 %v2024
        %v2064 = vunpack.c.l.b16 %v2025
        %v2065 = vunpack.c.l.b16 %v2026
        %v2066 = vunpack.c.l.b16 %v2027
        %v2067 = vunpack.c.l.b16 %v2028
        %v2068 = vunpack.c.l.b16 %v2029
        %v2069 = vunpack.c.l.b16 %v2030
        %v2070 = vunpack.c.l.b16 %v2031
        %v2071 = vunpack.c.l.b16 %v2032
        %v2072 = vunpack.c.l.b16 %v2033
        %v2073 = vunpack.c.l.b16 %v2034
        %v2074 = vpack.c.b16 %v2059, %v2058
        %v2075 = vpack.c.b16 %v2061, %v2060
        %v2076 = vpack.c.b16 %v2063, %v2062
        %v2077 = vpack.c.b16 %v2065, %v2064
        %v2078 = vpack.c.b16 %v2067, %v2066
        %v2079 = vpack.c.b16 %v2069, %v2068
        %v2080 = vpack.c.b16 %v2071, %v2070
        %v2081 = vpack.c.b16 %v2073, %v2072
        %2090 = vmatprep.subr.bf16.mxu0 0
        %2091 = vmatpush1.bf16.msra.mxu0 %v2081
        %2092 = vmatprep.subr.bf16.mxu0 0
        %2093 = vmatpush1.bf16.msra.mxu0 %v2080
        %2094 = vmatprep.subr.bf16.mxu0 0
        %2095 = vmatpush1.bf16.msra.mxu0 %v2079
        %2096 = vmatprep.subr.bf16.mxu0 0
        %2097 = vmatpush1.bf16.msra.mxu0 %v2078
        %2098 = vmatprep.subr.bf16.mxu0 0
        %2099 = vmatpush1.bf16.msra.mxu0 %v2077
        %2100 = vmatprep.subr.bf16.mxu0 0
        %2101 = vmatpush1.bf16.msra.mxu0 %v2076
        %2102 = vmatprep.subr.bf16.mxu0 0
        %2103 = vmatpush1.bf16.msra.mxu0 %v2075
        %2104 = vmatprep.subr.bf16.mxu0 0
        %2105 = vmatpush1.bf16.msra.mxu0 %v2074
        %2106 = vmatprep.subr.bf16.mxu0 0
        %2107 = vmatpush2.bf16.msra.mxu0 0
        %2108 = vmatprep.subr.bf16.mxu0 0
        %2109 = vmatpush2.bf16.msra.mxu0 0
        %2110 = vmatprep.subr.bf16.mxu0 0
        %2111 = vmatpush2.bf16.msra.mxu0 0
        %2112 = vmatprep.subr.bf16.mxu0 0
        %2113 = vmatpush2.bf16.msra.mxu0 0
        %2114 = vmatprep.subr.bf16.mxu0 0
        %2115 = vmatpush2.bf16.msra.mxu0 0
        %2116 = vmatprep.subr.bf16.mxu0 0
        %2117 = vmatpush2.bf16.msra.mxu0 0
        %2118 = vmatprep.subr.bf16.mxu0 0
        %2119 = vmatpush2.bf16.msra.mxu0 0
        %2120 = vmatprep.subr.bf16.mxu0 0
        %2121 = vmatpush2.bf16.msra.mxu0 0
        %2122 = vmatprep.mubr.bf16.mxu0 0
        %2123 = vmatmul.mubr.bf16.gmra.mxu0 %v2003
        %v2124 = vpop.f32.mrf.mxu0
        %v2125 = vadd.f32 %v2040, %v2124
        %v2126 = vpop.f32.mrf.mxu0
        %v2127 = vpop.f32.mrf.mxu0
        %v2128 = vadd.f32 %v2040, %v2127
        %v2129 = vpop.f32.mrf.mxu0
        %2130 = vmatprep.mubr.bf16.mxu0 0
        %2131 = vmatmul.mubr.bf16.gmra.mxu0 %v2004
        %v2132 = vpop.f32.mrf.mxu0
        %v2133 = vadd.f32 %v2040, %v2132
        %v2134 = vpop.f32.mrf.mxu0
        %v2135 = vpop.f32.mrf.mxu0
        %v2136 = vadd.f32 %v2040, %v2135
        %v2137 = vpop.f32.mrf.mxu0
        %2138 = vmatprep.mubr.bf16.mxu0 0
        %2139 = vmatmul.mubr.bf16.gmra.mxu0 %v2005
        %v2140 = vpop.f32.mrf.mxu0
        %v2141 = vadd.f32 %v2040, %v2140
        %v2142 = vpop.f32.mrf.mxu0
        %v2143 = vpop.f32.mrf.mxu0
        %v2144 = vadd.f32 %v2040, %v2143
        %v2145 = vpop.f32.mrf.mxu0
        %2146 = vmatprep.mubr.bf16.mxu0 0
        %2147 = vmatmul.mubr.bf16.gmra.mxu0 %v2006
        %v2148 = vpop.f32.mrf.mxu0
        %v2149 = vadd.f32 %v2040, %v2148
        %v2150 = vpop.f32.mrf.mxu0
        %v2151 = vpop.f32.mrf.mxu0
        %v2152 = vadd.f32 %v2040, %v2151
        %v2153 = vpop.f32.mrf.mxu0
        %2154 = vmatprep.mubr.bf16.mxu0 0
        %2155 = vmatmul.mubr.bf16.gmra.mxu0 %v2007
        %v2156 = vpop.f32.mrf.mxu0
        %v2157 = vadd.f32 %v2040, %v2156
        %v2158 = vpop.f32.mrf.mxu0
        %v2159 = vpop.f32.mrf.mxu0
        %v2160 = vadd.f32 %v2040, %v2159
        %v2161 = vpop.f32.mrf.mxu0
        %2162 = vmatprep.mubr.bf16.mxu0 0
        %2163 = vmatmul.mubr.bf16.gmra.mxu0 %v2008
        %v2164 = vpop.f32.mrf.mxu0
        %v2165 = vadd.f32 %v2040, %v2164
        %v2166 = vpop.f32.mrf.mxu0
        %v2167 = vpop.f32.mrf.mxu0
        %v2168 = vadd.f32 %v2040, %v2167
        %v2169 = vpop.f32.mrf.mxu0
        %2170 = vmatprep.mubr.bf16.mxu0 0
        %2171 = vmatmul.mubr.bf16.gmra.mxu0 %v2009
        %v2172 = vpop.f32.mrf.mxu0
        %v2173 = vadd.f32 %v2040, %v2172
        %v2174 = vpop.f32.mrf.mxu0
        %v2175 = vpop.f32.mrf.mxu0
        %v2176 = vadd.f32 %v2040, %v2175
        %v2177 = vpop.f32.mrf.mxu0
        %2178 = vmatprep.mubr.bf16.mxu0 0
        %2179 = vmatmul.mubr.bf16.gmra.mxu0 %v2010
        %v2180 = vpop.f32.mrf.mxu0
        %v2181 = vadd.f32 %v2040, %v2180
        %v2182 = vpop.f32.mrf.mxu0
        %v2183 = vpop.f32.mrf.mxu0
        %v2184 = vadd.f32 %v2040, %v2183
        %v2185 = vpop.f32.mrf.mxu0
        %2186 = vmatprep.mubr.bf16.mxu0 0
        %2187 = vmatmul.mubr.bf16.gmra.mxu0 %v2011
        %v2188 = vpop.f32.mrf.mxu0
        %v2189 = vadd.f32 %v2040, %v2188
        %v2190 = vpop.f32.mrf.mxu0
        %v2191 = vpop.f32.mrf.mxu0
        %v2192 = vadd.f32 %v2040, %v2191
        %v2193 = vpop.f32.mrf.mxu0
        %2194 = vmatprep.mubr.bf16.mxu0 0
        %2195 = vmatmul.mubr.bf16.gmra.mxu0 %v2012
        %v2196 = vpop.f32.mrf.mxu0
        %v2197 = vadd.f32 %v2040, %v2196
        %v2198 = vpop.f32.mrf.mxu0
        %v2199 = vpop.f32.mrf.mxu0
        %v2200 = vadd.f32 %v2040, %v2199
        %v2201 = vpop.f32.mrf.mxu0
        %2202 = vmatprep.mubr.bf16.mxu0 0
        %2203 = vmatmul.mubr.bf16.gmra.mxu0 %v2013
        %v2204 = vpop.f32.mrf.mxu0
        %v2205 = vadd.f32 %v2040, %v2204
        %v2206 = vpop.f32.mrf.mxu0
        %v2207 = vpop.f32.mrf.mxu0
        %v2208 = vadd.f32 %v2040, %v2207
        %v2209 = vpop.f32.mrf.mxu0
        %2210 = vmatprep.mubr.bf16.mxu0 0
        %2211 = vmatmul.mubr.bf16.gmra.mxu0 %v2014
        %v2212 = vpop.f32.mrf.mxu0
        %v2213 = vadd.f32 %v2040, %v2212
        %v2214 = vpop.f32.mrf.mxu0
        %v2215 = vpop.f32.mrf.mxu0
        %v2216 = vadd.f32 %v2040, %v2215
        %v2217 = vpop.f32.mrf.mxu0
        %2218 = vmatprep.mubr.bf16.mxu0 0
        %2219 = vmatmul.mubr.bf16.gmra.mxu0 %v2015
        %v2220 = vpop.f32.mrf.mxu0
        %v2221 = vadd.f32 %v2040, %v2220
        %v2222 = vpop.f32.mrf.mxu0
        %v2223 = vpop.f32.mrf.mxu0
        %v2224 = vadd.f32 %v2040, %v2223
        %v2225 = vpop.f32.mrf.mxu0
        %2226 = vmatprep.mubr.bf16.mxu0 0
        %2227 = vmatmul.mubr.bf16.gmra.mxu0 %v2016
        %v2228 = vpop.f32.mrf.mxu0
        %v2229 = vadd.f32 %v2040, %v2228
        %v2230 = vpop.f32.mrf.mxu0
        %v2231 = vpop.f32.mrf.mxu0
        %v2232 = vadd.f32 %v2040, %v2231
        %v2233 = vpop.f32.mrf.mxu0
        %2234 = vmatprep.mubr.bf16.mxu0 0
        %2235 = vmatmul.mubr.bf16.gmra.mxu0 %v2017
        %v2236 = vpop.f32.mrf.mxu0
        %v2237 = vadd.f32 %v2040, %v2236
        %v2238 = vpop.f32.mrf.mxu0
        %v2239 = vpop.f32.mrf.mxu0
        %v2240 = vadd.f32 %v2040, %v2239
        %v2241 = vpop.f32.mrf.mxu0
        %2242 = vmatprep.mubr.bf16.mxu0 0
        %2243 = vmatmul.mubr.bf16.gmra.mxu0 %v2018
        %v2244 = vpop.f32.mrf.mxu0
        %v2245 = vadd.f32 %v2040, %v2244
        %v2246 = vpop.f32.mrf.mxu0
        %v2247 = vpop.f32.mrf.mxu0
        %v2248 = vadd.f32 %v2040, %v2247
        %v2249 = vpop.f32.mrf.mxu0
        %2250 = vdwg.mxu0
        %v2251 = vmax.f32 %v2125, 0.0
        %v2252 = vmax.f32 %v2128, 0.0
        %v2253 = vmax.f32 %v2133, 0.0
        %v2254 = vmax.f32 %v2136, 0.0
        %v2255 = vmax.f32 %v2141, 0.0
        %v2256 = vmax.f32 %v2144, 0.0
        %v2257 = vmax.f32 %v2149, 0.0
        %v2258 = vmax.f32 %v2152, 0.0
        %v2259 = vmax.f32 %v2157, 0.0
        %v2260 = vmax.f32 %v2160, 0.0
        %v2261 = vmax.f32 %v2165, 0.0
        %v2262 = vmax.f32 %v2168, 0.0
        %v2263 = vmax.f32 %v2173, 0.0
        %v2264 = vmax.f32 %v2176, 0.0
        %v2265 = vmax.f32 %v2181, 0.0
        %v2266 = vmax.f32 %v2184, 0.0
        %v2267 = vmax.f32 %v2189, 0.0
        %v2268 = vmax.f32 %v2192, 0.0
        %v2269 = vmax.f32 %v2197, 0.0
        %v2270 = vmax.f32 %v2200, 0.0
        %v2271 = vmax.f32 %v2205, 0.0
        %v2272 = vmax.f32 %v2208, 0.0
        %v2273 = vmax.f32 %v2213, 0.0
        %v2274 = vmax.f32 %v2216, 0.0
        %v2275 = vmax.f32 %v2221, 0.0
        %v2276 = vmax.f32 %v2224, 0.0
        %v2277 = vmax.f32 %v2229, 0.0
        %v2278 = vmax.f32 %v2232, 0.0
        %v2279 = vmax.f32 %v2237, 0.0
        %v2280 = vmax.f32 %v2240, 0.0
        %v2281 = vmax.f32 %v2245, 0.0
        %v2282 = vmax.f32 %v2248, 0.0
        %vm2283 = vcmp.ne.f32.partialorder %v2125, %v2125
        %vm2284 = vcmp.ne.f32.partialorder %v2128, %v2128
        %vm2285 = vcmp.ne.f32.partialorder %v2133, %v2133
        %vm2286 = vcmp.ne.f32.partialorder %v2136, %v2136
        %vm2287 = vcmp.ne.f32.partialorder %v2141, %v2141
        %vm2288 = vcmp.ne.f32.partialorder %v2144, %v2144
        %vm2289 = vcmp.ne.f32.partialorder %v2149, %v2149
        %vm2290 = vcmp.ne.f32.partialorder %v2152, %v2152
        %vm2291 = vcmp.ne.f32.partialorder %v2157, %v2157
        %vm2292 = vcmp.ne.f32.partialorder %v2160, %v2160
        %vm2293 = vcmp.ne.f32.partialorder %v2165, %v2165
        %vm2294 = vcmp.ne.f32.partialorder %v2168, %v2168
        %vm2295 = vcmp.ne.f32.partialorder %v2173, %v2173
        %vm2296 = vcmp.ne.f32.partialorder %v2176, %v2176
        %vm2297 = vcmp.ne.f32.partialorder %v2181, %v2181
        %vm2298 = vcmp.ne.f32.partialorder %v2184, %v2184
        %vm2299 = vcmp.ne.f32.partialorder %v2189, %v2189
        %vm2300 = vcmp.ne.f32.partialorder %v2192, %v2192
        %vm2301 = vcmp.ne.f32.partialorder %v2197, %v2197
        %vm2302 = vcmp.ne.f32.partialorder %v2200, %v2200
        %vm2303 = vcmp.ne.f32.partialorder %v2205, %v2205
        %vm2304 = vcmp.ne.f32.partialorder %v2208, %v2208
        %vm2305 = vcmp.ne.f32.partialorder %v2213, %v2213
        %vm2306 = vcmp.ne.f32.partialorder %v2216, %v2216
        %vm2307 = vcmp.ne.f32.partialorder %v2221, %v2221
        %vm2308 = vcmp.ne.f32.partialorder %v2224, %v2224
        %vm2309 = vcmp.ne.f32.partialorder %v2229, %v2229
        %vm2310 = vcmp.ne.f32.partialorder %v2232, %v2232
        %vm2311 = vcmp.ne.f32.partialorder %v2237, %v2237
        %vm2312 = vcmp.ne.f32.partialorder %v2240, %v2240
        %vm2313 = vcmp.ne.f32.partialorder %v2245, %v2245
        %vm2314 = vcmp.ne.f32.partialorder %v2248, %v2248
        %v2315 = vadd.f32 %v2125, 0.0
        %v2316 = vadd.f32 %v2128, 0.0
        %v2317 = vadd.f32 %v2133, 0.0
        %v2318 = vadd.f32 %v2136, 0.0
        %v2319 = vadd.f32 %v2141, 0.0
        %v2320 = vadd.f32 %v2144, 0.0
        %v2321 = vadd.f32 %v2149, 0.0
        %v2322 = vadd.f32 %v2152, 0.0
        %v2323 = vadd.f32 %v2157, 0.0
        %v2324 = vadd.f32 %v2160, 0.0
        %v2325 = vadd.f32 %v2165, 0.0
        %v2326 = vadd.f32 %v2168, 0.0
        %v2327 = vadd.f32 %v2173, 0.0
        %v2328 = vadd.f32 %v2176, 0.0
        %v2329 = vadd.f32 %v2181, 0.0
        %v2330 = vadd.f32 %v2184, 0.0
        %v2331 = vadd.f32 %v2189, 0.0
        %v2332 = vadd.f32 %v2192, 0.0
        %v2333 = vadd.f32 %v2197, 0.0
        %v2334 = vadd.f32 %v2200, 0.0
        %v2335 = vadd.f32 %v2205, 0.0
        %v2336 = vadd.f32 %v2208, 0.0
        %v2337 = vadd.f32 %v2213, 0.0
        %v2338 = vadd.f32 %v2216, 0.0
        %v2339 = vadd.f32 %v2221, 0.0
        %v2340 = vadd.f32 %v2224, 0.0
        %v2341 = vadd.f32 %v2229, 0.0
        %v2342 = vadd.f32 %v2232, 0.0
        %v2343 = vadd.f32 %v2237, 0.0
        %v2344 = vadd.f32 %v2240, 0.0
        %v2345 = vadd.f32 %v2245, 0.0
        %v2346 = vadd.f32 %v2248, 0.0
        %v2347 = vand.u32 2147483647, %v2125
        %v2348 = vand.u32 2147483647, %v2128
        %v2349 = vand.u32 2147483647, %v2133
        %v2350 = vand.u32 2147483647, %v2136
        %v2351 = vand.u32 2147483647, %v2141
        %v2352 = vand.u32 2147483647, %v2144
        %v2353 = vand.u32 2147483647, %v2149
        %v2354 = vand.u32 2147483647, %v2152
        %v2355 = vand.u32 2147483647, %v2157
        %v2356 = vand.u32 2147483647, %v2160
        %v2357 = vand.u32 2147483647, %v2165
        %v2358 = vand.u32 2147483647, %v2168
        %v2359 = vand.u32 2147483647, %v2173
        %v2360 = vand.u32 2147483647, %v2176
        %v2361 = vand.u32 2147483647, %v2181
        %v2362 = vand.u32 2147483647, %v2184
        %v2363 = vand.u32 2147483647, %v2189
        %v2364 = vand.u32 2147483647, %v2192
        %v2365 = vand.u32 2147483647, %v2197
        %v2366 = vand.u32 2147483647, %v2200
        %v2367 = vand.u32 2147483647, %v2205
        %v2368 = vand.u32 2147483647, %v2208
        %v2369 = vand.u32 2147483647, %v2213
        %v2370 = vand.u32 2147483647, %v2216
        %v2371 = vand.u32 2147483647, %v2221
        %v2372 = vand.u32 2147483647, %v2224
        %v2373 = vand.u32 2147483647, %v2229
        %v2374 = vand.u32 2147483647, %v2232
        %v2375 = vand.u32 2147483647, %v2237
        %v2376 = vand.u32 2147483647, %v2240
        %v2377 = vand.u32 2147483647, %v2245
        %v2378 = vand.u32 2147483647, %v2248
        %v2379 = vsub.f32 0.0, %v2347
        %v2380 = vsub.f32 0.0, %v2348
        %v2381 = vsub.f32 0.0, %v2349
        %v2382 = vsub.f32 0.0, %v2350
        %v2383 = vsub.f32 0.0, %v2351
        %v2384 = vsub.f32 0.0, %v2352
        %v2385 = vsub.f32 0.0, %v2353
        %v2386 = vsub.f32 0.0, %v2354
        %v2387 = vsub.f32 0.0, %v2355
        %v2388 = vsub.f32 0.0, %v2356
        %v2389 = vsub.f32 0.0, %v2357
        %v2390 = vsub.f32 0.0, %v2358
        %v2391 = vsub.f32 0.0, %v2359
        %v2392 = vsub.f32 0.0, %v2360
        %v2393 = vsub.f32 0.0, %v2361
        %v2394 = vsub.f32 0.0, %v2362
        %v2395 = vsub.f32 0.0, %v2363
        %v2396 = vsub.f32 0.0, %v2364
        %v2397 = vsub.f32 0.0, %v2365
        %v2398 = vsub.f32 0.0, %v2366
        %v2399 = vsub.f32 0.0, %v2367
        %v2400 = vsub.f32 0.0, %v2368
        %v2401 = vsub.f32 0.0, %v2369
        %v2402 = vsub.f32 0.0, %v2370
        %v2403 = vsub.f32 0.0, %v2371
        %v2404 = vsub.f32 0.0, %v2372
        %v2405 = vsub.f32 0.0, %v2373
        %v2406 = vsub.f32 0.0, %v2374
        %v2407 = vsub.f32 0.0, %v2375
        %v2408 = vsub.f32 0.0, %v2376
        %v2409 = vsub.f32 0.0, %v2377
        %v2410 = vsub.f32 0.0, %v2378
        %v2411 = vmul.f32 %v2379, 1.442695
        %v2412 = vpow.pop %v2411
        %v2413 = vmul.f32 %v2380, 1.442695
        %v2414 = vpow.pop %v2413
        %v2415 = vmul.f32 %v2381, 1.442695
        %v2416 = vpow.pop %v2415
        %v2417 = vmul.f32 %v2382, 1.442695
        %v2418 = vpow.pop %v2417
        %v2419 = vmul.f32 %v2383, 1.442695
        %v2420 = vpow.pop %v2419
        %v2421 = vmul.f32 %v2384, 1.442695
        %v2422 = vpow.pop %v2421
        %v2423 = vmul.f32 %v2385, 1.442695
        %v2424 = vpow.pop %v2423
        %v2425 = vmul.f32 %v2386, 1.442695
        %v2426 = vpow.pop %v2425
        %v2427 = vmul.f32 %v2387, 1.442695
        %v2428 = vpow.pop %v2427
        %v2429 = vmul.f32 %v2388, 1.442695
        %v2430 = vpow.pop %v2429
        %v2431 = vmul.f32 %v2389, 1.442695
        %v2432 = vpow.pop %v2431
        %v2433 = vmul.f32 %v2390, 1.442695
        %v2434 = vpow.pop %v2433
        %v2435 = vmul.f32 %v2391, 1.442695
        %v2436 = vpow.pop %v2435
        %v2437 = vmul.f32 %v2392, 1.442695
        %v2438 = vpow.pop %v2437
        %v2439 = vmul.f32 %v2393, 1.442695
        %v2440 = vpow.pop %v2439
        %v2441 = vmul.f32 %v2394, 1.442695
        %v2442 = vpow.pop %v2441
        %v2443 = vmul.f32 %v2395, 1.442695
        %v2444 = vpow.pop %v2443
        %v2445 = vmul.f32 %v2396, 1.442695
        %v2446 = vpow.pop %v2445
        %v2447 = vmul.f32 %v2397, 1.442695
        %v2448 = vpow.pop %v2447
        %v2449 = vmul.f32 %v2398, 1.442695
        %v2450 = vpow.pop %v2449
        %v2451 = vmul.f32 %v2399, 1.442695
        %v2452 = vpow.pop %v2451
        %v2453 = vmul.f32 %v2400, 1.442695
        %v2454 = vpow.pop %v2453
        %v2455 = vmul.f32 %v2401, 1.442695
        %v2456 = vpow.pop %v2455
        %v2457 = vmul.f32 %v2402, 1.442695
        %v2458 = vpow.pop %v2457
        %v2459 = vmul.f32 %v2403, 1.442695
        %v2460 = vpow.pop %v2459
        %v2461 = vmul.f32 %v2404, 1.442695
        %v2462 = vpow.pop %v2461
        %v2463 = vmul.f32 %v2405, 1.442695
        %v2464 = vpow.pop %v2463
        %v2465 = vmul.f32 %v2406, 1.442695
        %v2466 = vpow.pop %v2465
        %v2467 = vmul.f32 %v2407, 1.442695
        %v2468 = vpow.pop %v2467
        %v2469 = vmul.f32 %v2408, 1.442695
        %v2470 = vpow.pop %v2469
        %v2471 = vmul.f32 %v2409, 1.442695
        %v2472 = vpow.pop %v2471
        %v2473 = vmul.f32 %v2410, 1.442695
        %v2474 = vpow.pop %v2473
        %v2475 = vadd.f32 %v2412, 1.0
        %v2476 = vlog2.pop %v2475
        %v2477 = vmul.f32 %v2476, 0.6931472
        %v2478 = vmul.f32 -0.5, %v2412
        %v2479 = vadd.f32 %v2478, 1.0
        %v2480 = vmul.f32 %v2479, %v2412
        %v2481 = vand.u32 2147483647, %v2412
        %vm2482 = vcmp.lt.f32.partialorder %v2481, 0.0004427343
        %v2483 = vsel %vm2482, %v2480, %v2477
        %v2484 = vadd.f32 %v2414, 1.0
        %v2485 = vlog2.pop %v2484
        %v2486 = vmul.f32 %v2485, 0.6931472
        %v2487 = vmul.f32 -0.5, %v2414
        %v2488 = vadd.f32 %v2487, 1.0
        %v2489 = vmul.f32 %v2488, %v2414
        %v2490 = vand.u32 2147483647, %v2414
        %vm2491 = vcmp.lt.f32.partialorder %v2490, 0.0004427343
        %v2492 = vsel %vm2491, %v2489, %v2486
        %v2493 = vadd.f32 %v2416, 1.0
        %v2494 = vlog2.pop %v2493
        %v2495 = vmul.f32 %v2494, 0.6931472
        %v2496 = vmul.f32 -0.5, %v2416
        %v2497 = vadd.f32 %v2496, 1.0
        %v2498 = vmul.f32 %v2497, %v2416
        %v2499 = vand.u32 2147483647, %v2416
        %vm2500 = vcmp.lt.f32.partialorder %v2499, 0.0004427343
        %v2501 = vsel %vm2500, %v2498, %v2495
        %v2502 = vadd.f32 %v2418, 1.0
        %v2503 = vlog2.pop %v2502
        %v2504 = vmul.f32 %v2503, 0.6931472
        %v2505 = vmul.f32 -0.5, %v2418
        %v2506 = vadd.f32 %v2505, 1.0
        %v2507 = vmul.f32 %v2506, %v2418
        %v2508 = vand.u32 2147483647, %v2418
        %vm2509 = vcmp.lt.f32.partialorder %v2508, 0.0004427343
        %v2510 = vsel %vm2509, %v2507, %v2504
        %v2511 = vadd.f32 %v2420, 1.0
        %v2512 = vlog2.pop %v2511
        %v2513 = vmul.f32 %v2512, 0.6931472
        %v2514 = vmul.f32 -0.5, %v2420
        %v2515 = vadd.f32 %v2514, 1.0
        %v2516 = vmul.f32 %v2515, %v2420
        %v2517 = vand.u32 2147483647, %v2420
        %vm2518 = vcmp.lt.f32.partialorder %v2517, 0.0004427343
        %v2519 = vsel %vm2518, %v2516, %v2513
        %v2520 = vadd.f32 %v2422, 1.0
        %v2521 = vlog2.pop %v2520
        %v2522 = vmul.f32 %v2521, 0.6931472
        %v2523 = vmul.f32 -0.5, %v2422
        %v2524 = vadd.f32 %v2523, 1.0
        %v2525 = vmul.f32 %v2524, %v2422
        %v2526 = vand.u32 2147483647, %v2422
        %vm2527 = vcmp.lt.f32.partialorder %v2526, 0.0004427343
        %v2528 = vsel %vm2527, %v2525, %v2522
        %v2529 = vadd.f32 %v2424, 1.0
        %v2530 = vlog2.pop %v2529
        %v2531 = vmul.f32 %v2530, 0.6931472
        %v2532 = vmul.f32 -0.5, %v2424
        %v2533 = vadd.f32 %v2532, 1.0
        %v2534 = vmul.f32 %v2533, %v2424
        %v2535 = vand.u32 2147483647, %v2424
        %vm2536 = vcmp.lt.f32.partialorder %v2535, 0.0004427343
        %v2537 = vsel %vm2536, %v2534, %v2531
        %v2538 = vadd.f32 %v2426, 1.0
        %v2539 = vlog2.pop %v2538
        %v2540 = vmul.f32 %v2539, 0.6931472
        %v2541 = vmul.f32 -0.5, %v2426
        %v2542 = vadd.f32 %v2541, 1.0
        %v2543 = vmul.f32 %v2542, %v2426
        %v2544 = vand.u32 2147483647, %v2426
        %vm2545 = vcmp.lt.f32.partialorder %v2544, 0.0004427343
        %v2546 = vsel %vm2545, %v2543, %v2540
        %v2547 = vadd.f32 %v2428, 1.0
        %v2548 = vlog2.pop %v2547
        %v2549 = vmul.f32 %v2548, 0.6931472
        %v2550 = vmul.f32 -0.5, %v2428
        %v2551 = vadd.f32 %v2550, 1.0
        %v2552 = vmul.f32 %v2551, %v2428
        %v2553 = vand.u32 2147483647, %v2428
        %vm2554 = vcmp.lt.f32.partialorder %v2553, 0.0004427343
        %v2555 = vsel %vm2554, %v2552, %v2549
        %v2556 = vadd.f32 %v2430, 1.0
        %v2557 = vlog2.pop %v2556
        %v2558 = vmul.f32 %v2557, 0.6931472
        %v2559 = vmul.f32 -0.5, %v2430
        %v2560 = vadd.f32 %v2559, 1.0
        %v2561 = vmul.f32 %v2560, %v2430
        %v2562 = vand.u32 2147483647, %v2430
        %vm2563 = vcmp.lt.f32.partialorder %v2562, 0.0004427343
        %v2564 = vsel %vm2563, %v2561, %v2558
        %v2565 = vadd.f32 %v2432, 1.0
        %v2566 = vlog2.pop %v2565
        %v2567 = vmul.f32 %v2566, 0.6931472
        %v2568 = vmul.f32 -0.5, %v2432
        %v2569 = vadd.f32 %v2568, 1.0
        %v2570 = vmul.f32 %v2569, %v2432
        %v2571 = vand.u32 2147483647, %v2432
        %vm2572 = vcmp.lt.f32.partialorder %v2571, 0.0004427343
        %v2573 = vsel %vm2572, %v2570, %v2567
        %v2574 = vadd.f32 %v2434, 1.0
        %v2575 = vlog2.pop %v2574
        %v2576 = vmul.f32 %v2575, 0.6931472
        %v2577 = vmul.f32 -0.5, %v2434
        %v2578 = vadd.f32 %v2577, 1.0
        %v2579 = vmul.f32 %v2578, %v2434
        %v2580 = vand.u32 2147483647, %v2434
        %vm2581 = vcmp.lt.f32.partialorder %v2580, 0.0004427343
        %v2582 = vsel %vm2581, %v2579, %v2576
        %v2583 = vadd.f32 %v2436, 1.0
        %v2584 = vlog2.pop %v2583
        %v2585 = vmul.f32 %v2584, 0.6931472
        %v2586 = vmul.f32 -0.5, %v2436
        %v2587 = vadd.f32 %v2586, 1.0
        %v2588 = vmul.f32 %v2587, %v2436
        %v2589 = vand.u32 2147483647, %v2436
        %vm2590 = vcmp.lt.f32.partialorder %v2589, 0.0004427343
        %v2591 = vsel %vm2590, %v2588, %v2585
        %v2592 = vadd.f32 %v2438, 1.0
        %v2593 = vlog2.pop %v2592
        %v2594 = vmul.f32 %v2593, 0.6931472
        %v2595 = vmul.f32 -0.5, %v2438
        %v2596 = vadd.f32 %v2595, 1.0
        %v2597 = vmul.f32 %v2596, %v2438
        %v2598 = vand.u32 2147483647, %v2438
        %vm2599 = vcmp.lt.f32.partialorder %v2598, 0.0004427343
        %v2600 = vsel %vm2599, %v2597, %v2594
        %v2601 = vadd.f32 %v2440, 1.0
        %v2602 = vlog2.pop %v2601
        %v2603 = vmul.f32 %v2602, 0.6931472
        %v2604 = vmul.f32 -0.5, %v2440
        %v2605 = vadd.f32 %v2604, 1.0
        %v2606 = vmul.f32 %v2605, %v2440
        %v2607 = vand.u32 2147483647, %v2440
        %vm2608 = vcmp.lt.f32.partialorder %v2607, 0.0004427343
        %v2609 = vsel %vm2608, %v2606, %v2603
        %v2610 = vadd.f32 %v2442, 1.0
        %v2611 = vlog2.pop %v2610
        %v2612 = vmul.f32 %v2611, 0.6931472
        %v2613 = vmul.f32 -0.5, %v2442
        %v2614 = vadd.f32 %v2613, 1.0
        %v2615 = vmul.f32 %v2614, %v2442
        %v2616 = vand.u32 2147483647, %v2442
        %vm2617 = vcmp.lt.f32.partialorder %v2616, 0.0004427343
        %v2618 = vsel %vm2617, %v2615, %v2612
        %v2619 = vadd.f32 %v2444, 1.0
        %v2620 = vlog2.pop %v2619
        %v2621 = vmul.f32 %v2620, 0.6931472
        %v2622 = vmul.f32 -0.5, %v2444
        %v2623 = vadd.f32 %v2622, 1.0
        %v2624 = vmul.f32 %v2623, %v2444
        %v2625 = vand.u32 2147483647, %v2444
        %vm2626 = vcmp.lt.f32.partialorder %v2625, 0.0004427343
        %v2627 = vsel %vm2626, %v2624, %v2621
        %v2628 = vadd.f32 %v2446, 1.0
        %v2629 = vlog2.pop %v2628
        %v2630 = vmul.f32 %v2629, 0.6931472
        %v2631 = vmul.f32 -0.5, %v2446
        %v2632 = vadd.f32 %v2631, 1.0
        %v2633 = vmul.f32 %v2632, %v2446
        %v2634 = vand.u32 2147483647, %v2446
        %vm2635 = vcmp.lt.f32.partialorder %v2634, 0.0004427343
        %v2636 = vsel %vm2635, %v2633, %v2630
        %v2637 = vadd.f32 %v2448, 1.0
        %v2638 = vlog2.pop %v2637
        %v2639 = vmul.f32 %v2638, 0.6931472
        %v2640 = vmul.f32 -0.5, %v2448
        %v2641 = vadd.f32 %v2640, 1.0
        %v2642 = vmul.f32 %v2641, %v2448
        %v2643 = vand.u32 2147483647, %v2448
        %vm2644 = vcmp.lt.f32.partialorder %v2643, 0.0004427343
        %v2645 = vsel %vm2644, %v2642, %v2639
        %v2646 = vadd.f32 %v2450, 1.0
        %v2647 = vlog2.pop %v2646
        %v2648 = vmul.f32 %v2647, 0.6931472
        %v2649 = vmul.f32 -0.5, %v2450
        %v2650 = vadd.f32 %v2649, 1.0
        %v2651 = vmul.f32 %v2650, %v2450
        %v2652 = vand.u32 2147483647, %v2450
        %vm2653 = vcmp.lt.f32.partialorder %v2652, 0.0004427343
        %v2654 = vsel %vm2653, %v2651, %v2648
        %v2655 = vadd.f32 %v2452, 1.0
        %v2656 = vlog2.pop %v2655
        %v2657 = vmul.f32 %v2656, 0.6931472
        %v2658 = vmul.f32 -0.5, %v2452
        %v2659 = vadd.f32 %v2658, 1.0
        %v2660 = vmul.f32 %v2659, %v2452
        %v2661 = vand.u32 2147483647, %v2452
        %vm2662 = vcmp.lt.f32.partialorder %v2661, 0.0004427343
        %v2663 = vsel %vm2662, %v2660, %v2657
        %v2664 = vadd.f32 %v2454, 1.0
        %v2665 = vlog2.pop %v2664
        %v2666 = vmul.f32 %v2665, 0.6931472
        %v2667 = vmul.f32 -0.5, %v2454
        %v2668 = vadd.f32 %v2667, 1.0
        %v2669 = vmul.f32 %v2668, %v2454
        %v2670 = vand.u32 2147483647, %v2454
        %vm2671 = vcmp.lt.f32.partialorder %v2670, 0.0004427343
        %v2672 = vsel %vm2671, %v2669, %v2666
        %v2673 = vadd.f32 %v2456, 1.0
        %v2674 = vlog2.pop %v2673
        %v2675 = vmul.f32 %v2674, 0.6931472
        %v2676 = vmul.f32 -0.5, %v2456
        %v2677 = vadd.f32 %v2676, 1.0
        %v2678 = vmul.f32 %v2677, %v2456
        %v2679 = vand.u32 2147483647, %v2456
        %vm2680 = vcmp.lt.f32.partialorder %v2679, 0.0004427343
        %v2681 = vsel %vm2680, %v2678, %v2675
        %v2682 = vadd.f32 %v2458, 1.0
        %v2683 = vlog2.pop %v2682
        %v2684 = vmul.f32 %v2683, 0.6931472
        %v2685 = vmul.f32 -0.5, %v2458
        %v2686 = vadd.f32 %v2685, 1.0
        %v2687 = vmul.f32 %v2686, %v2458
        %v2688 = vand.u32 2147483647, %v2458
        %vm2689 = vcmp.lt.f32.partialorder %v2688, 0.0004427343
        %v2690 = vsel %vm2689, %v2687, %v2684
        %v2691 = vadd.f32 %v2460, 1.0
        %v2692 = vlog2.pop %v2691
        %v2693 = vmul.f32 %v2692, 0.6931472
        %v2694 = vmul.f32 -0.5, %v2460
        %v2695 = vadd.f32 %v2694, 1.0
        %v2696 = vmul.f32 %v2695, %v2460
        %v2697 = vand.u32 2147483647, %v2460
        %vm2698 = vcmp.lt.f32.partialorder %v2697, 0.0004427343
        %v2699 = vsel %vm2698, %v2696, %v2693
        %v2700 = vadd.f32 %v2462, 1.0
        %v2701 = vlog2.pop %v2700
        %v2702 = vmul.f32 %v2701, 0.6931472
        %v2703 = vmul.f32 -0.5, %v2462
        %v2704 = vadd.f32 %v2703, 1.0
        %v2705 = vmul.f32 %v2704, %v2462
        %v2706 = vand.u32 2147483647, %v2462
        %vm2707 = vcmp.lt.f32.partialorder %v2706, 0.0004427343
        %v2708 = vsel %vm2707, %v2705, %v2702
        %v2709 = vadd.f32 %v2464, 1.0
        %v2710 = vlog2.pop %v2709
        %v2711 = vmul.f32 %v2710, 0.6931472
        %v2712 = vmul.f32 -0.5, %v2464
        %v2713 = vadd.f32 %v2712, 1.0
        %v2714 = vmul.f32 %v2713, %v2464
        %v2715 = vand.u32 2147483647, %v2464
        %vm2716 = vcmp.lt.f32.partialorder %v2715, 0.0004427343
        %v2717 = vsel %vm2716, %v2714, %v2711
        %v2718 = vadd.f32 %v2466, 1.0
        %v2719 = vlog2.pop %v2718
        %v2720 = vmul.f32 %v2719, 0.6931472
        %v2721 = vmul.f32 -0.5, %v2466
        %v2722 = vadd.f32 %v2721, 1.0
        %v2723 = vmul.f32 %v2722, %v2466
        %v2724 = vand.u32 2147483647, %v2466
        %vm2725 = vcmp.lt.f32.partialorder %v2724, 0.0004427343
        %v2726 = vsel %vm2725, %v2723, %v2720
        %v2727 = vadd.f32 %v2468, 1.0
        %v2728 = vlog2.pop %v2727
        %v2729 = vmul.f32 %v2728, 0.6931472
        %v2730 = vmul.f32 -0.5, %v2468
        %v2731 = vadd.f32 %v2730, 1.0
        %v2732 = vmul.f32 %v2731, %v2468
        %v2733 = vand.u32 2147483647, %v2468
        %vm2734 = vcmp.lt.f32.partialorder %v2733, 0.0004427343
        %v2735 = vsel %vm2734, %v2732, %v2729
        %v2736 = vadd.f32 %v2470, 1.0
        %v2737 = vlog2.pop %v2736
        %v2738 = vmul.f32 %v2737, 0.6931472
        %v2739 = vmul.f32 -0.5, %v2470
        %v2740 = vadd.f32 %v2739, 1.0
        %v2741 = vmul.f32 %v2740, %v2470
        %v2742 = vand.u32 2147483647, %v2470
        %vm2743 = vcmp.lt.f32.partialorder %v2742, 0.0004427343
        %v2744 = vsel %vm2743, %v2741, %v2738
        %v2745 = vadd.f32 %v2472, 1.0
        %v2746 = vlog2.pop %v2745
        %v2747 = vmul.f32 %v2746, 0.6931472
        %v2748 = vmul.f32 -0.5, %v2472
        %v2749 = vadd.f32 %v2748, 1.0
        %v2750 = vmul.f32 %v2749, %v2472
        %v2751 = vand.u32 2147483647, %v2472
        %vm2752 = vcmp.lt.f32.partialorder %v2751, 0.0004427343
        %v2753 = vsel %vm2752, %v2750, %v2747
        %v2754 = vadd.f32 %v2474, 1.0
        %v2755 = vlog2.pop %v2754
        %v2756 = vmul.f32 %v2755, 0.6931472
        %v2757 = vmul.f32 -0.5, %v2474
        %v2758 = vadd.f32 %v2757, 1.0
        %v2759 = vmul.f32 %v2758, %v2474
        %v2760 = vand.u32 2147483647, %v2474
        %vm2761 = vcmp.lt.f32.partialorder %v2760, 0.0004427343
        %v2762 = vsel %vm2761, %v2759, %v2756
        %v2763 = vadd.f32 %v2251, %v2483
        %v2764 = vadd.f32 %v2252, %v2492
        %v2765 = vadd.f32 %v2253, %v2501
        %v2766 = vadd.f32 %v2254, %v2510
        %v2767 = vadd.f32 %v2255, %v2519
        %v2768 = vadd.f32 %v2256, %v2528
        %v2769 = vadd.f32 %v2257, %v2537
        %v2770 = vadd.f32 %v2258, %v2546
        %v2771 = vadd.f32 %v2259, %v2555
        %v2772 = vadd.f32 %v2260, %v2564
        %v2773 = vadd.f32 %v2261, %v2573
        %v2774 = vadd.f32 %v2262, %v2582
        %v2775 = vadd.f32 %v2263, %v2591
        %v2776 = vadd.f32 %v2264, %v2600
        %v2777 = vadd.f32 %v2265, %v2609
        %v2778 = vadd.f32 %v2266, %v2618
        %v2779 = vadd.f32 %v2267, %v2627
        %v2780 = vadd.f32 %v2268, %v2636
        %v2781 = vadd.f32 %v2269, %v2645
        %v2782 = vadd.f32 %v2270, %v2654
        %v2783 = vadd.f32 %v2271, %v2663
        %v2784 = vadd.f32 %v2272, %v2672
        %v2785 = vadd.f32 %v2273, %v2681
        %v2786 = vadd.f32 %v2274, %v2690
        %v2787 = vadd.f32 %v2275, %v2699
        %v2788 = vadd.f32 %v2276, %v2708
        %v2789 = vadd.f32 %v2277, %v2717
        %v2790 = vadd.f32 %v2278, %v2726
        %v2791 = vadd.f32 %v2279, %v2735
        %v2792 = vadd.f32 %v2280, %v2744
        %v2793 = vadd.f32 %v2281, %v2753
        %v2794 = vadd.f32 %v2282, %v2762
        %v2795 = vsel %vm2283, %v2315, %v2763
        %v2796 = vsel %vm2284, %v2316, %v2764
        %v2797 = vsel %vm2285, %v2317, %v2765
        %v2798 = vsel %vm2286, %v2318, %v2766
        %v2799 = vsel %vm2287, %v2319, %v2767
        %v2800 = vsel %vm2288, %v2320, %v2768
        %v2801 = vsel %vm2289, %v2321, %v2769
        %v2802 = vsel %vm2290, %v2322, %v2770
        %v2803 = vsel %vm2291, %v2323, %v2771
        %v2804 = vsel %vm2292, %v2324, %v2772
        %v2805 = vsel %vm2293, %v2325, %v2773
        %v2806 = vsel %vm2294, %v2326, %v2774
        %v2807 = vsel %vm2295, %v2327, %v2775
        %v2808 = vsel %vm2296, %v2328, %v2776
        %v2809 = vsel %vm2297, %v2329, %v2777
        %v2810 = vsel %vm2298, %v2330, %v2778
        %v2811 = vsel %vm2299, %v2331, %v2779
        %v2812 = vsel %vm2300, %v2332, %v2780
        %v2813 = vsel %vm2301, %v2333, %v2781
        %v2814 = vsel %vm2302, %v2334, %v2782
        %v2815 = vsel %vm2303, %v2335, %v2783
        %v2816 = vsel %vm2304, %v2336, %v2784
        %v2817 = vsel %vm2305, %v2337, %v2785
        %v2818 = vsel %vm2306, %v2338, %v2786
        %v2819 = vsel %vm2307, %v2339, %v2787
        %v2820 = vsel %vm2308, %v2340, %v2788
        %v2821 = vsel %vm2309, %v2341, %v2789
        %v2822 = vsel %vm2310, %v2342, %v2790
        %v2823 = vsel %vm2311, %v2343, %v2791
        %v2824 = vsel %vm2312, %v2344, %v2792
        %v2825 = vsel %vm2313, %v2345, %v2793
        %v2826 = vsel %vm2314, %v2346, %v2794
        %v2827 = vpack.c.bf16 %v2796, %v2795
        %v2828 = vpack.c.bf16 %v2798, %v2797
        %v2829 = vpack.c.bf16 %v2800, %v2799
        %v2830 = vpack.c.bf16 %v2802, %v2801
        %v2831 = vpack.c.bf16 %v2804, %v2803
        %v2832 = vpack.c.bf16 %v2806, %v2805
        %v2833 = vpack.c.bf16 %v2808, %v2807
        %v2834 = vpack.c.bf16 %v2810, %v2809
        %v2835 = vpack.c.bf16 %v2812, %v2811
        %v2836 = vpack.c.bf16 %v2814, %v2813
        %v2837 = vpack.c.bf16 %v2816, %v2815
        %v2838 = vpack.c.bf16 %v2818, %v2817
        %v2839 = vpack.c.bf16 %v2820, %v2819
        %v2840 = vpack.c.bf16 %v2822, %v2821
        %v2841 = vpack.c.bf16 %v2824, %v2823
        %v2842 = vpack.c.bf16 %v2826, %v2825
        %v2843 = vld [vmem:[%s8] sm:$0xff]
        %v2844 = vld [vmem:[%s8 + $0x8] sm:$0xff]
        %v2845 = vld [vmem:[%s8 + $0x10] sm:$0xff]
        %v2846 = vld [vmem:[%s8 + $0x18] sm:$0xff]
        %v2847 = vld [vmem:[%s8 + $0x20] sm:$0xff]
        %v2848 = vld [vmem:[%s8 + $0x28] sm:$0xff]
        %v2849 = vld [vmem:[%s8 + $0x30] sm:$0xff]
        %v2850 = vld [vmem:[%s8 + $0x38] sm:$0xff]
        %v2851 = vld [vmem:[%s8 + $0x40] sm:$0xff]
        %v2852 = vld [vmem:[%s8 + $0x48] sm:$0xff]
        %v2853 = vld [vmem:[%s8 + $0x50] sm:$0xff]
        %v2854 = vld [vmem:[%s8 + $0x58] sm:$0xff]
        %v2855 = vld [vmem:[%s8 + $0x60] sm:$0xff]
        %v2856 = vld [vmem:[%s8 + $0x68] sm:$0xff]
        %v2857 = vld [vmem:[%s8 + $0x70] sm:$0xff]
        %v2858 = vld [vmem:[%s8 + $0x78] sm:$0xff]
        %v2859 = vld [vmem:[%s9] sm:$0x3]
        %v2861 = vlaneseq
        %v2862 = vshrl.u32 %v2861, 7
        %v2863 = vsub.s32 0, %v2862
        %v2864 = vrot.slane %v2859, %v2863
        %v2865 = vlaneseq
        %v2866 = vshrl.u32 %v2865, 7
        %v2867 = vsub.s32 1, %v2866
        %v2868 = vrot.slane %v2859, %v2867
        %v2887 = vunpack.c.l.b16 %v2843
        %v2888 = vunpack.c.h.b16 %v2843
        %v2889 = vunpack.c.l.b16 %v2844
        %v2890 = vunpack.c.h.b16 %v2844
        %v2891 = vunpack.c.l.b16 %v2845
        %v2892 = vunpack.c.h.b16 %v2845
        %v2893 = vunpack.c.l.b16 %v2846
        %v2894 = vunpack.c.h.b16 %v2846
        %v2895 = vunpack.c.l.b16 %v2847
        %v2896 = vunpack.c.h.b16 %v2847
        %v2897 = vunpack.c.l.b16 %v2848
        %v2898 = vunpack.c.h.b16 %v2848
        %v2899 = vunpack.c.l.b16 %v2849
        %v2900 = vunpack.c.h.b16 %v2849
        %v2901 = vunpack.c.l.b16 %v2850
        %v2902 = vunpack.c.h.b16 %v2850
        %v2903 = vunpack.c.l.b16 %v2851
        %v2904 = vunpack.c.h.b16 %v2851
        %v2905 = vunpack.c.l.b16 %v2852
        %v2906 = vunpack.c.h.b16 %v2852
        %v2907 = vunpack.c.l.b16 %v2853
        %v2908 = vunpack.c.h.b16 %v2853
        %v2909 = vunpack.c.l.b16 %v2854
        %v2910 = vunpack.c.h.b16 %v2854
        %v2911 = vunpack.c.l.b16 %v2855
        %v2912 = vunpack.c.h.b16 %v2855
        %v2913 = vunpack.c.l.b16 %v2856
        %v2914 = vunpack.c.h.b16 %v2856
        %v2915 = vunpack.c.l.b16 %v2857
        %v2916 = vunpack.c.h.b16 %v2857
        %v2917 = vunpack.c.l.b16 %v2858
        %v2918 = vunpack.c.h.b16 %v2858
        %v2919 = vpack.c.b16 %v2889, %v2887
        %v2920 = vpack.c.b16 %v2890, %v2888
        %v2921 = vpack.c.b16 %v2893, %v2891
        %v2922 = vpack.c.b16 %v2894, %v2892
        %v2923 = vpack.c.b16 %v2897, %v2895
        %v2924 = vpack.c.b16 %v2898, %v2896
        %v2925 = vpack.c.b16 %v2901, %v2899
        %v2926 = vpack.c.b16 %v2902, %v2900
        %v2927 = vpack.c.b16 %v2905, %v2903
        %v2928 = vpack.c.b16 %v2906, %v2904
        %v2929 = vpack.c.b16 %v2909, %v2907
        %v2930 = vpack.c.b16 %v2910, %v2908
        %v2931 = vpack.c.b16 %v2913, %v2911
        %v2932 = vpack.c.b16 %v2914, %v2912
        %v2933 = vpack.c.b16 %v2917, %v2915
        %v2934 = vpack.c.b16 %v2918, %v2916
        %2951 = vmatprep.subr.bf16.mxu0 %v2934
        %2952 = vmatpush1.bf16.msra.mxu0 %v2933
        %2953 = vmatprep.subr.bf16.mxu0 %v2932
        %2954 = vmatpush1.bf16.msra.mxu0 %v2931
        %2955 = vmatprep.subr.bf16.mxu0 %v2930
        %2956 = vmatpush1.bf16.msra.mxu0 %v2929
        %2957 = vmatprep.subr.bf16.mxu0 %v2928
        %2958 = vmatpush1.bf16.msra.mxu0 %v2927
        %2959 = vmatprep.subr.bf16.mxu0 %v2926
        %2960 = vmatpush1.bf16.msra.mxu0 %v2925
        %2961 = vmatprep.subr.bf16.mxu0 %v2924
        %2962 = vmatpush1.bf16.msra.mxu0 %v2923
        %2963 = vmatprep.subr.bf16.mxu0 %v2922
        %2964 = vmatpush1.bf16.msra.mxu0 %v2921
        %2965 = vmatprep.subr.bf16.mxu0 %v2920
        %2966 = vmatpush1.bf16.msra.mxu0 %v2919
        %2967 = vmatprep.subr.bf16.mxu0 0
        %2968 = vmatpush2.bf16.msra.mxu0 0
        %2969 = vmatprep.subr.bf16.mxu0 0
        %2970 = vmatpush2.bf16.msra.mxu0 0
        %2971 = vmatprep.subr.bf16.mxu0 0
        %2972 = vmatpush2.bf16.msra.mxu0 0
        %2973 = vmatprep.subr.bf16.mxu0 0
        %2974 = vmatpush2.bf16.msra.mxu0 0
        %2975 = vmatprep.subr.bf16.mxu0 0
        %2976 = vmatpush2.bf16.msra.mxu0 0
        %2977 = vmatprep.subr.bf16.mxu0 0
        %2978 = vmatpush2.bf16.msra.mxu0 0
        %2979 = vmatprep.subr.bf16.mxu0 0
        %2980 = vmatpush2.bf16.msra.mxu0 0
        %2981 = vmatprep.subr.bf16.mxu0 0
        %2982 = vmatpush2.bf16.msra.mxu0 0
        %2983 = vmatprep.mubr.bf16.mxu0 0
        %2984 = vmatmul.mubr.bf16.gmra.mxu0 %v2827
        %v2985 = vpop.f32.mrf.mxu0
        %v2986 = vadd.f32 %v2864, %v2985
        %v2987 = vpop.f32.mrf.mxu0
        %v2988 = vadd.f32 %v2868, %v2987
        %v2989 = vpop.f32.mrf.mxu0
        %v2990 = vadd.f32 %v2864, %v2989
        %v2991 = vpop.f32.mrf.mxu0
        %v2992 = vadd.f32 %v2868, %v2991
        %2993 = vmatprep.mubr.bf16.mxu0 0
        %2994 = vmatmul.mubr.bf16.gmra.mxu0 %v2828
        %v2995 = vpop.f32.mrf.mxu0
        %v2996 = vadd.f32 %v2864, %v2995
        %v2997 = vpop.f32.mrf.mxu0
        %v2998 = vadd.f32 %v2868, %v2997
        %v2999 = vpop.f32.mrf.mxu0
        %v3000 = vadd.f32 %v2864, %v2999
        %v3001 = vpop.f32.mrf.mxu0
        %v3002 = vadd.f32 %v2868, %v3001
        %3003 = vmatprep.mubr.bf16.mxu0 0
        %3004 = vmatmul.mubr.bf16.gmra.mxu0 %v2829
        %v3005 = vpop.f32.mrf.mxu0
        %v3006 = vadd.f32 %v2864, %v3005
        %v3007 = vpop.f32.mrf.mxu0
        %v3008 = vadd.f32 %v2868, %v3007
        %v3009 = vpop.f32.mrf.mxu0
        %v3010 = vadd.f32 %v2864, %v3009
        %v3011 = vpop.f32.mrf.mxu0
        %v3012 = vadd.f32 %v2868, %v3011
        %3013 = vmatprep.mubr.bf16.mxu0 0
        %3014 = vmatmul.mubr.bf16.gmra.mxu0 %v2830
        %v3015 = vpop.f32.mrf.mxu0
        %v3016 = vadd.f32 %v2864, %v3015
        %v3017 = vpop.f32.mrf.mxu0
        %v3018 = vadd.f32 %v2868, %v3017
        %v3019 = vpop.f32.mrf.mxu0
        %v3020 = vadd.f32 %v2864, %v3019
        %v3021 = vpop.f32.mrf.mxu0
        %v3022 = vadd.f32 %v2868, %v3021
        %3023 = vmatprep.mubr.bf16.mxu0 0
        %3024 = vmatmul.mubr.bf16.gmra.mxu0 %v2831
        %v3025 = vpop.f32.mrf.mxu0
        %v3026 = vadd.f32 %v2864, %v3025
        %v3027 = vpop.f32.mrf.mxu0
        %v3028 = vadd.f32 %v2868, %v3027
        %v3029 = vpop.f32.mrf.mxu0
        %v3030 = vadd.f32 %v2864, %v3029
        %v3031 = vpop.f32.mrf.mxu0
        %v3032 = vadd.f32 %v2868, %v3031
        %3033 = vmatprep.mubr.bf16.mxu0 0
        %3034 = vmatmul.mubr.bf16.gmra.mxu0 %v2832
        %v3035 = vpop.f32.mrf.mxu0
        %v3036 = vadd.f32 %v2864, %v3035
        %v3037 = vpop.f32.mrf.mxu0
        %v3038 = vadd.f32 %v2868, %v3037
        %v3039 = vpop.f32.mrf.mxu0
        %v3040 = vadd.f32 %v2864, %v3039
        %v3041 = vpop.f32.mrf.mxu0
        %v3042 = vadd.f32 %v2868, %v3041
        %3043 = vmatprep.mubr.bf16.mxu0 0
        %3044 = vmatmul.mubr.bf16.gmra.mxu0 %v2833
        %v3045 = vpop.f32.mrf.mxu0
        %v3046 = vadd.f32 %v2864, %v3045
        %v3047 = vpop.f32.mrf.mxu0
        %v3048 = vadd.f32 %v2868, %v3047
        %v3049 = vpop.f32.mrf.mxu0
        %v3050 = vadd.f32 %v2864, %v3049
        %v3051 = vpop.f32.mrf.mxu0
        %v3052 = vadd.f32 %v2868, %v3051
        %3053 = vmatprep.mubr.bf16.mxu0 0
        %3054 = vmatmul.mubr.bf16.gmra.mxu0 %v2834
        %v3055 = vpop.f32.mrf.mxu0
        %v3056 = vadd.f32 %v2864, %v3055
        %v3057 = vpop.f32.mrf.mxu0
        %v3058 = vadd.f32 %v2868, %v3057
        %v3059 = vpop.f32.mrf.mxu0
        %v3060 = vadd.f32 %v2864, %v3059
        %v3061 = vpop.f32.mrf.mxu0
        %v3062 = vadd.f32 %v2868, %v3061
        %3063 = vmatprep.mubr.bf16.mxu0 0
        %3064 = vmatmul.mubr.bf16.gmra.mxu0 %v2835
        %v3065 = vpop.f32.mrf.mxu0
        %v3066 = vadd.f32 %v2864, %v3065
        %v3067 = vpop.f32.mrf.mxu0
        %v3068 = vadd.f32 %v2868, %v3067
        %v3069 = vpop.f32.mrf.mxu0
        %v3070 = vadd.f32 %v2864, %v3069
        %v3071 = vpop.f32.mrf.mxu0
        %v3072 = vadd.f32 %v2868, %v3071
        %3073 = vmatprep.mubr.bf16.mxu0 0
        %3074 = vmatmul.mubr.bf16.gmra.mxu0 %v2836
        %v3075 = vpop.f32.mrf.mxu0
        %v3076 = vadd.f32 %v2864, %v3075
        %v3077 = vpop.f32.mrf.mxu0
        %v3078 = vadd.f32 %v2868, %v3077
        %v3079 = vpop.f32.mrf.mxu0
        %v3080 = vadd.f32 %v2864, %v3079
        %v3081 = vpop.f32.mrf.mxu0
        %v3082 = vadd.f32 %v2868, %v3081
        %3083 = vmatprep.mubr.bf16.mxu0 0
        %3084 = vmatmul.mubr.bf16.gmra.mxu0 %v2837
        %v3085 = vpop.f32.mrf.mxu0
        %v3086 = vadd.f32 %v2864, %v3085
        %v3087 = vpop.f32.mrf.mxu0
        %v3088 = vadd.f32 %v2868, %v3087
        %v3089 = vpop.f32.mrf.mxu0
        %v3090 = vadd.f32 %v2864, %v3089
        %v3091 = vpop.f32.mrf.mxu0
        %v3092 = vadd.f32 %v2868, %v3091
        %3093 = vmatprep.mubr.bf16.mxu0 0
        %3094 = vmatmul.mubr.bf16.gmra.mxu0 %v2838
        %v3095 = vpop.f32.mrf.mxu0
        %v3096 = vadd.f32 %v2864, %v3095
        %v3097 = vpop.f32.mrf.mxu0
        %v3098 = vadd.f32 %v2868, %v3097
        %v3099 = vpop.f32.mrf.mxu0
        %v3100 = vadd.f32 %v2864, %v3099
        %v3101 = vpop.f32.mrf.mxu0
        %v3102 = vadd.f32 %v2868, %v3101
        %3103 = vmatprep.mubr.bf16.mxu0 0
        %3104 = vmatmul.mubr.bf16.gmra.mxu0 %v2839
        %v3105 = vpop.f32.mrf.mxu0
        %v3106 = vadd.f32 %v2864, %v3105
        %v3107 = vpop.f32.mrf.mxu0
        %v3108 = vadd.f32 %v2868, %v3107
        %v3109 = vpop.f32.mrf.mxu0
        %v3110 = vadd.f32 %v2864, %v3109
        %v3111 = vpop.f32.mrf.mxu0
        %v3112 = vadd.f32 %v2868, %v3111
        %3113 = vmatprep.mubr.bf16.mxu0 0
        %3114 = vmatmul.mubr.bf16.gmra.mxu0 %v2840
        %v3115 = vpop.f32.mrf.mxu0
        %v3116 = vadd.f32 %v2864, %v3115
        %v3117 = vpop.f32.mrf.mxu0
        %v3118 = vadd.f32 %v2868, %v3117
        %v3119 = vpop.f32.mrf.mxu0
        %v3120 = vadd.f32 %v2864, %v3119
        %v3121 = vpop.f32.mrf.mxu0
        %v3122 = vadd.f32 %v2868, %v3121
        %3123 = vmatprep.mubr.bf16.mxu0 0
        %3124 = vmatmul.mubr.bf16.gmra.mxu0 %v2841
        %v3125 = vpop.f32.mrf.mxu0
        %v3126 = vadd.f32 %v2864, %v3125
        %v3127 = vpop.f32.mrf.mxu0
        %v3128 = vadd.f32 %v2868, %v3127
        %v3129 = vpop.f32.mrf.mxu0
        %v3130 = vadd.f32 %v2864, %v3129
        %v3131 = vpop.f32.mrf.mxu0
        %v3132 = vadd.f32 %v2868, %v3131
        %3133 = vmatprep.mubr.bf16.mxu0 0
        %3134 = vmatmul.mubr.bf16.gmra.mxu0 %v2842
        %v3135 = vpop.f32.mrf.mxu0
        %v3136 = vadd.f32 %v2864, %v3135
        %v3137 = vpop.f32.mrf.mxu0
        %v3138 = vadd.f32 %v2868, %v3137
        %v3139 = vpop.f32.mrf.mxu0
        %v3140 = vadd.f32 %v2864, %v3139
        %v3141 = vpop.f32.mrf.mxu0
        %v3142 = vadd.f32 %v2868, %v3141
        %3143 = vdwg.mxu0
        %v3144 = vxor.u32 %v2986, 2147483648
        %v3145 = vxor.u32 %v2988, 2147483648
        %v3146 = vxor.u32 %v2990, 2147483648
        %v3147 = vxor.u32 %v2992, 2147483648
        %v3148 = vxor.u32 %v2996, 2147483648
        %v3149 = vxor.u32 %v2998, 2147483648
        %v3150 = vxor.u32 %v3000, 2147483648
        %v3151 = vxor.u32 %v3002, 2147483648
        %v3152 = vxor.u32 %v3006, 2147483648
        %v3153 = vxor.u32 %v3008, 2147483648
        %v3154 = vxor.u32 %v3010, 2147483648
        %v3155 = vxor.u32 %v3012, 2147483648
        %v3156 = vxor.u32 %v3016, 2147483648
        %v3157 = vxor.u32 %v3018, 2147483648
        %v3158 = vxor.u32 %v3020, 2147483648
        %v3159 = vxor.u32 %v3022, 2147483648
        %v3160 = vxor.u32 %v3026, 2147483648
        %v3161 = vxor.u32 %v3028, 2147483648
        %v3162 = vxor.u32 %v3030, 2147483648
        %v3163 = vxor.u32 %v3032, 2147483648
        %v3164 = vxor.u32 %v3036, 2147483648
        %v3165 = vxor.u32 %v3038, 2147483648
        %v3166 = vxor.u32 %v3040, 2147483648
        %v3167 = vxor.u32 %v3042, 2147483648
        %v3168 = vxor.u32 %v3046, 2147483648
        %v3169 = vxor.u32 %v3048, 2147483648
        %v3170 = vxor.u32 %v3050, 2147483648
        %v3171 = vxor.u32 %v3052, 2147483648
        %v3172 = vxor.u32 %v3056, 2147483648
        %v3173 = vxor.u32 %v3058, 2147483648
        %v3174 = vxor.u32 %v3060, 2147483648
        %v3175 = vxor.u32 %v3062, 2147483648
        %v3176 = vxor.u32 %v3066, 2147483648
        %v3177 = vxor.u32 %v3068, 2147483648
        %v3178 = vxor.u32 %v3070, 2147483648
        %v3179 = vxor.u32 %v3072, 2147483648
        %v3180 = vxor.u32 %v3076, 2147483648
        %v3181 = vxor.u32 %v3078, 2147483648
        %v3182 = vxor.u32 %v3080, 2147483648
        %v3183 = vxor.u32 %v3082, 2147483648
        %v3184 = vxor.u32 %v3086, 2147483648
        %v3185 = vxor.u32 %v3088, 2147483648
        %v3186 = vxor.u32 %v3090, 2147483648
        %v3187 = vxor.u32 %v3092, 2147483648
        %v3188 = vxor.u32 %v3096, 2147483648
        %v3189 = vxor.u32 %v3098, 2147483648
        %v3190 = vxor.u32 %v3100, 2147483648
        %v3191 = vxor.u32 %v3102, 2147483648
        %v3192 = vxor.u32 %v3106, 2147483648
        %v3193 = vxor.u32 %v3108, 2147483648
        %v3194 = vxor.u32 %v3110, 2147483648
        %v3195 = vxor.u32 %v3112, 2147483648
        %v3196 = vxor.u32 %v3116, 2147483648
        %v3197 = vxor.u32 %v3118, 2147483648
        %v3198 = vxor.u32 %v3120, 2147483648
        %v3199 = vxor.u32 %v3122, 2147483648
        %v3200 = vxor.u32 %v3126, 2147483648
        %v3201 = vxor.u32 %v3128, 2147483648
        %v3202 = vxor.u32 %v3130, 2147483648
        %v3203 = vxor.u32 %v3132, 2147483648
        %v3204 = vxor.u32 %v3136, 2147483648
        %v3205 = vxor.u32 %v3138, 2147483648
        %v3206 = vxor.u32 %v3140, 2147483648
        %v3207 = vxor.u32 %v3142, 2147483648
        %v3208 = vmul.f32 %v3144, 1.442695
        %v3209 = vpow.pop %v3208
        %v3210 = vmul.f32 %v3145, 1.442695
        %v3211 = vpow.pop %v3210
        %v3212 = vmul.f32 %v3146, 1.442695
        %v3213 = vpow.pop %v3212
        %v3214 = vmul.f32 %v3147, 1.442695
        %v3215 = vpow.pop %v3214
        %v3216 = vmul.f32 %v3148, 1.442695
        %v3217 = vpow.pop %v3216
        %v3218 = vmul.f32 %v3149, 1.442695
        %v3219 = vpow.pop %v3218
        %v3220 = vmul.f32 %v3150, 1.442695
        %v3221 = vpow.pop %v3220
        %v3222 = vmul.f32 %v3151, 1.442695
        %v3223 = vpow.pop %v3222
        %v3224 = vmul.f32 %v3152, 1.442695
        %v3225 = vpow.pop %v3224
        %v3226 = vmul.f32 %v3153, 1.442695
        %v3227 = vpow.pop %v3226
        %v3228 = vmul.f32 %v3154, 1.442695
        %v3229 = vpow.pop %v3228
        %v3230 = vmul.f32 %v3155, 1.442695
        %v3231 = vpow.pop %v3230
        %v3232 = vmul.f32 %v3156, 1.442695
        %v3233 = vpow.pop %v3232
        %v3234 = vmul.f32 %v3157, 1.442695
        %v3235 = vpow.pop %v3234
        %v3236 = vmul.f32 %v3158, 1.442695
        %v3237 = vpow.pop %v3236
        %v3238 = vmul.f32 %v3159, 1.442695
        %v3239 = vpow.pop %v3238
        %v3240 = vmul.f32 %v3160, 1.442695
        %v3241 = vpow.pop %v3240
        %v3242 = vmul.f32 %v3161, 1.442695
        %v3243 = vpow.pop %v3242
        %v3244 = vmul.f32 %v3162, 1.442695
        %v3245 = vpow.pop %v3244
        %v3246 = vmul.f32 %v3163, 1.442695
        %v3247 = vpow.pop %v3246
        %v3248 = vmul.f32 %v3164, 1.442695
        %v3249 = vpow.pop %v3248
        %v3250 = vmul.f32 %v3165, 1.442695
        %v3251 = vpow.pop %v3250
        %v3252 = vmul.f32 %v3166, 1.442695
        %v3253 = vpow.pop %v3252
        %v3254 = vmul.f32 %v3167, 1.442695
        %v3255 = vpow.pop %v3254
        %v3256 = vmul.f32 %v3168, 1.442695
        %v3257 = vpow.pop %v3256
        %v3258 = vmul.f32 %v3169, 1.442695
        %v3259 = vpow.pop %v3258
        %v3260 = vmul.f32 %v3170, 1.442695
        %v3261 = vpow.pop %v3260
        %v3262 = vmul.f32 %v3171, 1.442695
        %v3263 = vpow.pop %v3262
        %v3264 = vmul.f32 %v3172, 1.442695
        %v3265 = vpow.pop %v3264
        %v3266 = vmul.f32 %v3173, 1.442695
        %v3267 = vpow.pop %v3266
        %v3268 = vmul.f32 %v3174, 1.442695
        %v3269 = vpow.pop %v3268
        %v3270 = vmul.f32 %v3175, 1.442695
        %v3271 = vpow.pop %v3270
        %v3272 = vmul.f32 %v3176, 1.442695
        %v3273 = vpow.pop %v3272
        %v3274 = vmul.f32 %v3177, 1.442695
        %v3275 = vpow.pop %v3274
        %v3276 = vmul.f32 %v3178, 1.442695
        %v3277 = vpow.pop %v3276
        %v3278 = vmul.f32 %v3179, 1.442695
        %v3279 = vpow.pop %v3278
        %v3280 = vmul.f32 %v3180, 1.442695
        %v3281 = vpow.pop %v3280
        %v3282 = vmul.f32 %v3181, 1.442695
        %v3283 = vpow.pop %v3282
        %v3284 = vmul.f32 %v3182, 1.442695
        %v3285 = vpow.pop %v3284
        %v3286 = vmul.f32 %v3183, 1.442695
        %v3287 = vpow.pop %v3286
        %v3288 = vmul.f32 %v3184, 1.442695
        %v3289 = vpow.pop %v3288
        %v3290 = vmul.f32 %v3185, 1.442695
        %v3291 = vpow.pop %v3290
        %v3292 = vmul.f32 %v3186, 1.442695
        %v3293 = vpow.pop %v3292
        %v3294 = vmul.f32 %v3187, 1.442695
        %v3295 = vpow.pop %v3294
        %v3296 = vmul.f32 %v3188, 1.442695
        %v3297 = vpow.pop %v3296
        %v3298 = vmul.f32 %v3189, 1.442695
        %v3299 = vpow.pop %v3298
        %v3300 = vmul.f32 %v3190, 1.442695
        %v3301 = vpow.pop %v3300
        %v3302 = vmul.f32 %v3191, 1.442695
        %v3303 = vpow.pop %v3302
        %v3304 = vmul.f32 %v3192, 1.442695
        %v3305 = vpow.pop %v3304
        %v3306 = vmul.f32 %v3193, 1.442695
        %v3307 = vpow.pop %v3306
        %v3308 = vmul.f32 %v3194, 1.442695
        %v3309 = vpow.pop %v3308
        %v3310 = vmul.f32 %v3195, 1.442695
        %v3311 = vpow.pop %v3310
        %v3312 = vmul.f32 %v3196, 1.442695
        %v3313 = vpow.pop %v3312
        %v3314 = vmul.f32 %v3197, 1.442695
        %v3315 = vpow.pop %v3314
        %v3316 = vmul.f32 %v3198, 1.442695
        %v3317 = vpow.pop %v3316
        %v3318 = vmul.f32 %v3199, 1.442695
        %v3319 = vpow.pop %v3318
        %v3320 = vmul.f32 %v3200, 1.442695
        %v3321 = vpow.pop %v3320
        %v3322 = vmul.f32 %v3201, 1.442695
        %v3323 = vpow.pop %v3322
        %v3324 = vmul.f32 %v3202, 1.442695
        %v3325 = vpow.pop %v3324
        %v3326 = vmul.f32 %v3203, 1.442695
        %v3327 = vpow.pop %v3326
        %v3328 = vmul.f32 %v3204, 1.442695
        %v3329 = vpow.pop %v3328
        %v3330 = vmul.f32 %v3205, 1.442695
        %v3331 = vpow.pop %v3330
        %v3332 = vmul.f32 %v3206, 1.442695
        %v3333 = vpow.pop %v3332
        %v3334 = vmul.f32 %v3207, 1.442695
        %v3335 = vpow.pop %v3334
        %v3336 = vadd.f32 %v3209, 1.0
        %v3337 = vadd.f32 %v3211, 1.0
        %v3338 = vadd.f32 %v3213, 1.0
        %v3339 = vadd.f32 %v3215, 1.0
        %v3340 = vadd.f32 %v3217, 1.0
        %v3341 = vadd.f32 %v3219, 1.0
        %v3342 = vadd.f32 %v3221, 1.0
        %v3343 = vadd.f32 %v3223, 1.0
        %v3344 = vadd.f32 %v3225, 1.0
        %v3345 = vadd.f32 %v3227, 1.0
        %v3346 = vadd.f32 %v3229, 1.0
        %v3347 = vadd.f32 %v3231, 1.0
        %v3348 = vadd.f32 %v3233, 1.0
        %v3349 = vadd.f32 %v3235, 1.0
        %v3350 = vadd.f32 %v3237, 1.0
        %v3351 = vadd.f32 %v3239, 1.0
        %v3352 = vadd.f32 %v3241, 1.0
        %v3353 = vadd.f32 %v3243, 1.0
        %v3354 = vadd.f32 %v3245, 1.0
        %v3355 = vadd.f32 %v3247, 1.0
        %v3356 = vadd.f32 %v3249, 1.0
        %v3357 = vadd.f32 %v3251, 1.0
        %v3358 = vadd.f32 %v3253, 1.0
        %v3359 = vadd.f32 %v3255, 1.0
        %v3360 = vadd.f32 %v3257, 1.0
        %v3361 = vadd.f32 %v3259, 1.0
        %v3362 = vadd.f32 %v3261, 1.0
        %v3363 = vadd.f32 %v3263, 1.0
        %v3364 = vadd.f32 %v3265, 1.0
        %v3365 = vadd.f32 %v3267, 1.0
        %v3366 = vadd.f32 %v3269, 1.0
        %v3367 = vadd.f32 %v3271, 1.0
        %v3368 = vadd.f32 %v3273, 1.0
        %v3369 = vadd.f32 %v3275, 1.0
        %v3370 = vadd.f32 %v3277, 1.0
        %v3371 = vadd.f32 %v3279, 1.0
        %v3372 = vadd.f32 %v3281, 1.0
        %v3373 = vadd.f32 %v3283, 1.0
        %v3374 = vadd.f32 %v3285, 1.0
        %v3375 = vadd.f32 %v3287, 1.0
        %v3376 = vadd.f32 %v3289, 1.0
        %v3377 = vadd.f32 %v3291, 1.0
        %v3378 = vadd.f32 %v3293, 1.0
        %v3379 = vadd.f32 %v3295, 1.0
        %v3380 = vadd.f32 %v3297, 1.0
        %v3381 = vadd.f32 %v3299, 1.0
        %v3382 = vadd.f32 %v3301, 1.0
        %v3383 = vadd.f32 %v3303, 1.0
        %v3384 = vadd.f32 %v3305, 1.0
        %v3385 = vadd.f32 %v3307, 1.0
        %v3386 = vadd.f32 %v3309, 1.0
        %v3387 = vadd.f32 %v3311, 1.0
        %v3388 = vadd.f32 %v3313, 1.0
        %v3389 = vadd.f32 %v3315, 1.0
        %v3390 = vadd.f32 %v3317, 1.0
        %v3391 = vadd.f32 %v3319, 1.0
        %v3392 = vadd.f32 %v3321, 1.0
        %v3393 = vadd.f32 %v3323, 1.0
        %v3394 = vadd.f32 %v3325, 1.0
        %v3395 = vadd.f32 %v3327, 1.0
        %v3396 = vadd.f32 %v3329, 1.0
        %v3397 = vadd.f32 %v3331, 1.0
        %v3398 = vadd.f32 %v3333, 1.0
        %v3399 = vadd.f32 %v3335, 1.0
        %v3400 = vrcp.pop %v3336
        %v3401 = vmul.f32 1.0, %v3400
        %v3402 = vrcp.pop %v3337
        %v3403 = vmul.f32 1.0, %v3402
        %v3404 = vrcp.pop %v3338
        %v3405 = vmul.f32 1.0, %v3404
        %v3406 = vrcp.pop %v3339
        %v3407 = vmul.f32 1.0, %v3406
        %v3408 = vrcp.pop %v3340
        %v3409 = vmul.f32 1.0, %v3408
        %v3410 = vrcp.pop %v3341
        %v3411 = vmul.f32 1.0, %v3410
        %v3412 = vrcp.pop %v3342
        %v3413 = vmul.f32 1.0, %v3412
        %v3414 = vrcp.pop %v3343
        %v3415 = vmul.f32 1.0, %v3414
        %v3416 = vrcp.pop %v3344
        %v3417 = vmul.f32 1.0, %v3416
        %v3418 = vrcp.pop %v3345
        %v3419 = vmul.f32 1.0, %v3418
        %v3420 = vrcp.pop %v3346
        %v3421 = vmul.f32 1.0, %v3420
        %v3422 = vrcp.pop %v3347
        %v3423 = vmul.f32 1.0, %v3422
        %v3424 = vrcp.pop %v3348
        %v3425 = vmul.f32 1.0, %v3424
        %v3426 = vrcp.pop %v3349
        %v3427 = vmul.f32 1.0, %v3426
        %v3428 = vrcp.pop %v3350
        %v3429 = vmul.f32 1.0, %v3428
        %v3430 = vrcp.pop %v3351
        %v3431 = vmul.f32 1.0, %v3430
        %v3432 = vrcp.pop %v3352
        %v3433 = vmul.f32 1.0, %v3432
        %v3434 = vrcp.pop %v3353
        %v3435 = vmul.f32 1.0, %v3434
        %v3436 = vrcp.pop %v3354
        %v3437 = vmul.f32 1.0, %v3436
        %v3438 = vrcp.pop %v3355
        %v3439 = vmul.f32 1.0, %v3438
        %v3440 = vrcp.pop %v3356
        %v3441 = vmul.f32 1.0, %v3440
        %v3442 = vrcp.pop %v3357
        %v3443 = vmul.f32 1.0, %v3442
        %v3444 = vrcp.pop %v3358
        %v3445 = vmul.f32 1.0, %v3444
        %v3446 = vrcp.pop %v3359
        %v3447 = vmul.f32 1.0, %v3446
        %v3448 = vrcp.pop %v3360
        %v3449 = vmul.f32 1.0, %v3448
        %v3450 = vrcp.pop %v3361
        %v3451 = vmul.f32 1.0, %v3450
        %v3452 = vrcp.pop %v3362
        %v3453 = vmul.f32 1.0, %v3452
        %v3454 = vrcp.pop %v3363
        %v3455 = vmul.f32 1.0, %v3454
        %v3456 = vrcp.pop %v3364
        %v3457 = vmul.f32 1.0, %v3456
        %v3458 = vrcp.pop %v3365
        %v3459 = vmul.f32 1.0, %v3458
        %v3460 = vrcp.pop %v3366
        %v3461 = vmul.f32 1.0, %v3460
        %v3462 = vrcp.pop %v3367
        %v3463 = vmul.f32 1.0, %v3462
        %v3464 = vrcp.pop %v3368
        %v3465 = vmul.f32 1.0, %v3464
        %v3466 = vrcp.pop %v3369
        %v3467 = vmul.f32 1.0, %v3466
        %v3468 = vrcp.pop %v3370
        %v3469 = vmul.f32 1.0, %v3468
        %v3470 = vrcp.pop %v3371
        %v3471 = vmul.f32 1.0, %v3470
        %v3472 = vrcp.pop %v3372
        %v3473 = vmul.f32 1.0, %v3472
        %v3474 = vrcp.pop %v3373
        %v3475 = vmul.f32 1.0, %v3474
        %v3476 = vrcp.pop %v3374
        %v3477 = vmul.f32 1.0, %v3476
        %v3478 = vrcp.pop %v3375
        %v3479 = vmul.f32 1.0, %v3478
        %v3480 = vrcp.pop %v3376
        %v3481 = vmul.f32 1.0, %v3480
        %v3482 = vrcp.pop %v3377
        %v3483 = vmul.f32 1.0, %v3482
        %v3484 = vrcp.pop %v3378
        %v3485 = vmul.f32 1.0, %v3484
        %v3486 = vrcp.pop %v3379
        %v3487 = vmul.f32 1.0, %v3486
        %v3488 = vrcp.pop %v3380
        %v3489 = vmul.f32 1.0, %v3488
        %v3490 = vrcp.pop %v3381
        %v3491 = vmul.f32 1.0, %v3490
        %v3492 = vrcp.pop %v3382
        %v3493 = vmul.f32 1.0, %v3492
        %v3494 = vrcp.pop %v3383
        %v3495 = vmul.f32 1.0, %v3494
        %v3496 = vrcp.pop %v3384
        %v3497 = vmul.f32 1.0, %v3496
        %v3498 = vrcp.pop %v3385
        %v3499 = vmul.f32 1.0, %v3498
        %v3500 = vrcp.pop %v3386
        %v3501 = vmul.f32 1.0, %v3500
        %v3502 = vrcp.pop %v3387
        %v3503 = vmul.f32 1.0, %v3502
        %v3504 = vrcp.pop %v3388
        %v3505 = vmul.f32 1.0, %v3504
        %v3506 = vrcp.pop %v3389
        %v3507 = vmul.f32 1.0, %v3506
        %v3508 = vrcp.pop %v3390
        %v3509 = vmul.f32 1.0, %v3508
        %v3510 = vrcp.pop %v3391
        %v3511 = vmul.f32 1.0, %v3510
        %v3512 = vrcp.pop %v3392
        %v3513 = vmul.f32 1.0, %v3512
        %v3514 = vrcp.pop %v3393
        %v3515 = vmul.f32 1.0, %v3514
        %v3516 = vrcp.pop %v3394
        %v3517 = vmul.f32 1.0, %v3516
        %v3518 = vrcp.pop %v3395
        %v3519 = vmul.f32 1.0, %v3518
        %v3520 = vrcp.pop %v3396
        %v3521 = vmul.f32 1.0, %v3520
        %v3522 = vrcp.pop %v3397
        %v3523 = vmul.f32 1.0, %v3522
        %v3524 = vrcp.pop %v3398
        %v3525 = vmul.f32 1.0, %v3524
        %v3526 = vrcp.pop %v3399
        %v3527 = vmul.f32 1.0, %v3526
        %3528 = vst [vmem:[%s399] sm:$0xff] %v3401
        %3529 = vst [vmem:[%s399 + $0x8] sm:$0xff] %v3403
        %3530 = vst [vmem:[%s399 + $0x10] sm:$0xff] %v3405
        %3531 = vst [vmem:[%s399 + $0x18] sm:$0xff] %v3407
        %3532 = vst [vmem:[%s399 + $0x20] sm:$0xff] %v3409
        %3533 = vst [vmem:[%s399 + $0x28] sm:$0xff] %v3411
        %3534 = vst [vmem:[%s399 + $0x30] sm:$0xff] %v3413
        %3535 = vst [vmem:[%s399 + $0x38] sm:$0xff] %v3415
        %3536 = vst [vmem:[%s399 + $0x40] sm:$0xff] %v3417
        %3537 = vst [vmem:[%s399 + $0x48] sm:$0xff] %v3419
        %3538 = vst [vmem:[%s399 + $0x50] sm:$0xff] %v3421
        %3539 = vst [vmem:[%s399 + $0x58] sm:$0xff] %v3423
        %3540 = vst [vmem:[%s399 + $0x60] sm:$0xff] %v3425
        %3541 = vst [vmem:[%s399 + $0x68] sm:$0xff] %v3427
        %3542 = vst [vmem:[%s399 + $0x70] sm:$0xff] %v3429
        %3543 = vst [vmem:[%s399 + $0x78] sm:$0xff] %v3431
        %3544 = vst [vmem:[%s399 + $0x80] sm:$0xff] %v3433
        %3545 = vst [vmem:[%s399 + $0x88] sm:$0xff] %v3435
        %3546 = vst [vmem:[%s399 + $0x90] sm:$0xff] %v3437
        %3547 = vst [vmem:[%s399 + $0x98] sm:$0xff] %v3439
        %3548 = vst [vmem:[%s399 + $0xa0] sm:$0xff] %v3441
        %3549 = vst [vmem:[%s399 + $0xa8] sm:$0xff] %v3443
        %3550 = vst [vmem:[%s399 + $0xb0] sm:$0xff] %v3445
        %3551 = vst [vmem:[%s399 + $0xb8] sm:$0xff] %v3447
        %3552 = vst [vmem:[%s399 + $0xc0] sm:$0xff] %v3449
        %3553 = vst [vmem:[%s399 + $0xc8] sm:$0xff] %v3451
        %3554 = vst [vmem:[%s399 + $0xd0] sm:$0xff] %v3453
        %3555 = vst [vmem:[%s399 + $0xd8] sm:$0xff] %v3455
        %3556 = vst [vmem:[%s399 + $0xe0] sm:$0xff] %v3457
        %3557 = vst [vmem:[%s399 + $0xe8] sm:$0xff] %v3459
        %3558 = vst [vmem:[%s399 + $0xf0] sm:$0xff] %v3461
        %3559 = vst [vmem:[%s399 + $0xf8] sm:$0xff] %v3463
        %3560 = vst [vmem:[%s399 + $0x100] sm:$0xff] %v3465
        %3561 = vst [vmem:[%s399 + $0x108] sm:$0xff] %v3467
        %3562 = vst [vmem:[%s399 + $0x110] sm:$0xff] %v3469
        %3563 = vst [vmem:[%s399 + $0x118] sm:$0xff] %v3471
        %3564 = vst [vmem:[%s399 + $0x120] sm:$0xff] %v3473
        %3565 = vst [vmem:[%s399 + $0x128] sm:$0xff] %v3475
        %3566 = vst [vmem:[%s399 + $0x130] sm:$0xff] %v3477
        %3567 = vst [vmem:[%s399 + $0x138] sm:$0xff] %v3479
        %3568 = vst [vmem:[%s399 + $0x140] sm:$0xff] %v3481
        %3569 = vst [vmem:[%s399 + $0x148] sm:$0xff] %v3483
        %3570 = vst [vmem:[%s399 + $0x150] sm:$0xff] %v3485
        %3571 = vst [vmem:[%s399 + $0x158] sm:$0xff] %v3487
        %3572 = vst [vmem:[%s399 + $0x160] sm:$0xff] %v3489
        %3573 = vst [vmem:[%s399 + $0x168] sm:$0xff] %v3491
        %3574 = vst [vmem:[%s399 + $0x170] sm:$0xff] %v3493
        %3575 = vst [vmem:[%s399 + $0x178] sm:$0xff] %v3495
        %3576 = vst [vmem:[%s399 + $0x180] sm:$0xff] %v3497
        %3577 = vst [vmem:[%s399 + $0x188] sm:$0xff] %v3499
        %3578 = vst [vmem:[%s399 + $0x190] sm:$0xff] %v3501
        %3579 = vst [vmem:[%s399 + $0x198] sm:$0xff] %v3503
        %3580 = vst [vmem:[%s399 + $0x1a0] sm:$0xff] %v3505
        %3581 = vst [vmem:[%s399 + $0x1a8] sm:$0xff] %v3507
        %3582 = vst [vmem:[%s399 + $0x1b0] sm:$0xff] %v3509
        %3583 = vst [vmem:[%s399 + $0x1b8] sm:$0xff] %v3511
        %3584 = vst [vmem:[%s399 + $0x1c0] sm:$0xff] %v3513
        %3585 = vst [vmem:[%s399 + $0x1c8] sm:$0xff] %v3515
        %3586 = vst [vmem:[%s399 + $0x1d0] sm:$0xff] %v3517
        %3587 = vst [vmem:[%s399 + $0x1d8] sm:$0xff] %v3519
        %3588 = vst [vmem:[%s399 + $0x1e0] sm:$0xff] %v3521
        %3589 = vst [vmem:[%s399 + $0x1e8] sm:$0xff] %v3523
        %3590 = vst [vmem:[%s399 + $0x1f0] sm:$0xff] %v3525
        %3591 = vst [vmem:[%s399 + $0x1f8] sm:$0xff] %v3527
        %3592 = vst [vmem:[%s427] sm:$0xff] %v1971
        %3593 = vst [vmem:[%s427 + $0x18] sm:$0xff] %v1972
        %3594 = vst [vmem:[%s427 + $0x30] sm:$0xff] %v1973
        %3595 = vst [vmem:[%s427 + $0x48] sm:$0xff] %v1974
        %3596 = vst [vmem:[%s427 + $0x60] sm:$0xff] %v1975
        %3597 = vst [vmem:[%s427 + $0x78] sm:$0xff] %v1976
        %3598 = vst [vmem:[%s427 + $0x90] sm:$0xff] %v1977
        %3599 = vst [vmem:[%s427 + $0xa8] sm:$0xff] %v1978
        %3600 = vst [vmem:[%s427 + $0xc0] sm:$0xff] %v1979
        %3601 = vst [vmem:[%s427 + $0xd8] sm:$0xff] %v1980
        %3602 = vst [vmem:[%s427 + $0xf0] sm:$0xff] %v1981
        %3603 = vst [vmem:[%s427 + $0x108] sm:$0xff] %v1982
        %3604 = vst [vmem:[%s427 + $0x120] sm:$0xff] %v1983
        %3605 = vst [vmem:[%s427 + $0x138] sm:$0xff] %v1984
        %3606 = vst [vmem:[%s427 + $0x150] sm:$0xff] %v1985
        %3607 = vst [vmem:[%s427 + $0x168] sm:$0xff] %v1986
        %3608 = vst [vmem:[%s427 + $0x180] sm:$0xff] %v1987
        %3609 = vst [vmem:[%s427 + $0x198] sm:$0xff] %v1988
        %3610 = vst [vmem:[%s427 + $0x1b0] sm:$0xff] %v1989
        %3611 = vst [vmem:[%s427 + $0x1c8] sm:$0xff] %v1990
        %3612 = vst [vmem:[%s427 + $0x1e0] sm:$0xff] %v1991
        %3613 = vst [vmem:[%s427 + $0x1f8] sm:$0xff] %v1992
        %3614 = vst [vmem:[%s427 + $0x210] sm:$0xff] %v1993
        %3615 = vst [vmem:[%s427 + $0x228] sm:$0xff] %v1994
        %3616 = vst [vmem:[%s427 + $0x240] sm:$0xff] %v1995
        %3617 = vst [vmem:[%s427 + $0x258] sm:$0xff] %v1996
        %3618 = vst [vmem:[%s427 + $0x270] sm:$0xff] %v1997
        %3619 = vst [vmem:[%s427 + $0x288] sm:$0xff] %v1998
        %3620 = vst [vmem:[%s427 + $0x2a0] sm:$0xff] %v1999
        %3621 = vst [vmem:[%s427 + $0x2b8] sm:$0xff] %v2000
        %3622 = vst [vmem:[%s427 + $0x2d0] sm:$0xff] %v2001
        %3623 = vst [vmem:[%s427 + $0x2e8] sm:$0xff] %v2002
        %3624 = vst [vmem:[%s427 + $0x8] sm:$0xff] %v1685
        %3625 = vst [vmem:[%s427 + $0x20] sm:$0xff] %v1689
        %3626 = vst [vmem:[%s427 + $0x38] sm:$0xff] %v1695
        %3627 = vst [vmem:[%s427 + $0x50] sm:$0xff] %v1699
        %3628 = vst [vmem:[%s427 + $0x68] sm:$0xff] %v1705
        %3629 = vst [vmem:[%s427 + $0x80] sm:$0xff] %v1709
        %3630 = vst [vmem:[%s427 + $0x98] sm:$0xff] %v1715
        %3631 = vst [vmem:[%s427 + $0xb0] sm:$0xff] %v1719
        %3632 = vst [vmem:[%s427 + $0xc8] sm:$0xff] %v1725
        %3633 = vst [vmem:[%s427 + $0xe0] sm:$0xff] %v1729
        %3634 = vst [vmem:[%s427 + $0xf8] sm:$0xff] %v1735
        %3635 = vst [vmem:[%s427 + $0x110] sm:$0xff] %v1739
        %3636 = vst [vmem:[%s427 + $0x128] sm:$0xff] %v1745
        %3637 = vst [vmem:[%s427 + $0x140] sm:$0xff] %v1749
        %3638 = vst [vmem:[%s427 + $0x158] sm:$0xff] %v1755
        %3639 = vst [vmem:[%s427 + $0x170] sm:$0xff] %v1759
        %3640 = vst [vmem:[%s427 + $0x188] sm:$0xff] %v1765
        %3641 = vst [vmem:[%s427 + $0x1a0] sm:$0xff] %v1769
        %3642 = vst [vmem:[%s427 + $0x1b8] sm:$0xff] %v1775
        %3643 = vst [vmem:[%s427 + $0x1d0] sm:$0xff] %v1779
        %3644 = vst [vmem:[%s427 + $0x1e8] sm:$0xff] %v1785
        %3645 = vst [vmem:[%s427 + $0x200] sm:$0xff] %v1789
        %3646 = vst [vmem:[%s427 + $0x218] sm:$0xff] %v1795
        %3647 = vst [vmem:[%s427 + $0x230] sm:$0xff] %v1799
        %3648 = vst [vmem:[%s427 + $0x248] sm:$0xff] %v1805
        %3649 = vst [vmem:[%s427 + $0x260] sm:$0xff] %v1809
        %3650 = vst [vmem:[%s427 + $0x278] sm:$0xff] %v1815
        %3651 = vst [vmem:[%s427 + $0x290] sm:$0xff] %v1819
        %3652 = vst [vmem:[%s427 + $0x2a8] sm:$0xff] %v1825
        %3653 = vst [vmem:[%s427 + $0x2c0] sm:$0xff] %v1829
        %3654 = vst [vmem:[%s427 + $0x2d8] sm:$0xff] %v1835
        %3655 = vst [vmem:[%s427 + $0x2f0] sm:$0xff] %v1839
        %3656 = vst [vmem:[%s427 + $0x10] sm:$0xff] %v1687
        %3657 = vst [vmem:[%s427 + $0x28] sm:$0xff] %v1691
        %3658 = vst [vmem:[%s427 + $0x40] sm:$0xff] %v1697
        %3659 = vst [vmem:[%s427 + $0x58] sm:$0xff] %v1701
        %3660 = vst [vmem:[%s427 + $0x70] sm:$0xff] %v1707
        %3661 = vst [vmem:[%s427 + $0x88] sm:$0xff] %v1711
        %3662 = vst [vmem:[%s427 + $0xa0] sm:$0xff] %v1717
        %3663 = vst [vmem:[%s427 + $0xb8] sm:$0xff] %v1721
        %3664 = vst [vmem:[%s427 + $0xd0] sm:$0xff] %v1727
        %3665 = vst [vmem:[%s427 + $0xe8] sm:$0xff] %v1731
        %3666 = vst [vmem:[%s427 + $0x100] sm:$0xff] %v1737
        %3667 = vst [vmem:[%s427 + $0x118] sm:$0xff] %v1741
        %3668 = vst [vmem:[%s427 + $0x130] sm:$0xff] %v1747
        %3669 = vst [vmem:[%s427 + $0x148] sm:$0xff] %v1751
        %3670 = vst [vmem:[%s427 + $0x160] sm:$0xff] %v1757
        %3671 = vst [vmem:[%s427 + $0x178] sm:$0xff] %v1761
        %3672 = vst [vmem:[%s427 + $0x190] sm:$0xff] %v1767
        %3673 = vst [vmem:[%s427 + $0x1a8] sm:$0xff] %v1771
        %3674 = vst [vmem:[%s427 + $0x1c0] sm:$0xff] %v1777
        %3675 = vst [vmem:[%s427 + $0x1d8] sm:$0xff] %v1781
        %3676 = vst [vmem:[%s427 + $0x1f0] sm:$0xff] %v1787
        %3677 = vst [vmem:[%s427 + $0x208] sm:$0xff] %v1791
        %3678 = vst [vmem:[%s427 + $0x220] sm:$0xff] %v1797
        %3679 = vst [vmem:[%s427 + $0x238] sm:$0xff] %v1801
        %3680 = vst [vmem:[%s427 + $0x250] sm:$0xff] %v1807
        %3681 = vst [vmem:[%s427 + $0x268] sm:$0xff] %v1811
        %3682 = vst [vmem:[%s427 + $0x280] sm:$0xff] %v1817
        %3683 = vst [vmem:[%s427 + $0x298] sm:$0xff] %v1821
        %3684 = vst [vmem:[%s427 + $0x2b0] sm:$0xff] %v1827
        %3685 = vst [vmem:[%s427 + $0x2c8] sm:$0xff] %v1831
        %3686 = vst [vmem:[%s427 + $0x2e0] sm:$0xff] %v1837
        %3687 = vst [vmem:[%s427 + $0x2f8] sm:$0xff] %v1841
        %s3688 = sand.u32 %s254, 1
        %s3689 = scalar_lea.sflag [#allocation3], %s3688
        %s3690 = sand.u32 %s254, 1
        %s3691 = smul.addr %s3690, 512
        %s3692 = scalar_lea.vmem [#allocation2], %s3691
        %s3693 = smul.u32 32, %s26
        %p3694 = scmp.lt.s32.totalorder %s3693, 63
        %s3695 = scalar_select %p3694, %s3693, 63
        %s3696 = smul.addr %s3695, 3
        %s3697 = smul.addr %s3696, 8
        %s3698 = scalar_lea.vmem %s11, %s3697
        // Predicated region
        $region61: #{_causal_vae_forward_impl.1} parent=59 // pred_check
          %p3699 = pneg %p264
        $region62: #{_causal_vae_forward_impl.1} parent=59 // pred_check_branch
          %3701 = sbr.rel (%p3699) target = $region64
        $region63: #{_causal_vae_forward_impl.1} parent=59 // pred_region
          %s3702 = smul.u32 32, %s26
          %s3704 = ssub.s32 8192, 8192
          %3705 = vsyncadd %s3689, %s3704
          %s3706 = smul.addr %s3702, 2
          %s3707 = smul.addr %s3706, 128
          %s3708 = scalar_lea.hbm %s10, %s3707
          %s3709 = sshll.u32 %s3692, 4
          %s3710 = int_to_ptr.vmem [resolvable:$true] %s3709
          %3715 = dma.vmem_to_hbm [thread:$0]  %s3710, 8192, %s3708, %s3689, 256, 256, 16
        $region64: #{_causal_vae_forward_impl.1} parent=59 // pred_fallthru
          _
        // Predicated region
        $region65: #{_causal_vae_forward_impl.1} parent=59 // pred_check
          %p3716 = pneg %p290
        $region66: #{_causal_vae_forward_impl.1} parent=59 // pred_check_branch
          %3718 = sbr.rel (%p3716) target = $region68
        $region67: #{_causal_vae_forward_impl.1} parent=59 // pred_region
          %s3719 = smul.u32 32, %s26
        $region68: #{_causal_vae_forward_impl.1} parent=59 // pred_fallthru
          _
      $region60: #{_causal_vae_forward_impl.1} parent=5 // pred_fallthru
        _
      %p3720 = scmp.le.s32.totalorder 2, %s21
      // Predicated region
      $region69: #{_causal_vae_forward_impl.1} parent=5 // pred_check
        %p3721 = pneg %p3720
      $region70: #{_causal_vae_forward_impl.1} parent=5 // pred_check_branch
        %3723 = sbr.rel (%p3721) target = $region72
      $region71: #{_causal_vae_forward_impl.1} parent=5 // pred_region
        %s3724 = ssub.s32 %s21, 2
        // Predicated region
        $region73: #{_causal_vae_forward_impl.1} parent=71 // pred_check
          %p3725 = pneg %p270
        $region74: #{_causal_vae_forward_impl.1} parent=71 // pred_check_branch
          %3727 = sbr.rel (%p3725) target = $region76
        $region75: #{_causal_vae_forward_impl.1} parent=71 // pred_region
          %s3728 = sand.u32 %s255, 1
          %s3729 = scalar_lea.sflag [#allocation3], %s3728
          %s3730 = sand.u32 %s255, 1
          %s3731 = smul.addr %s3730, 512
          %s3732 = scalar_lea.vmem [#allocation2], %s3731
          %3733 = dma.done %s3729, 8192
        $region76: #{_causal_vae_forward_impl.1} parent=71 // pred_fallthru
          _
        // Predicated region
        $region77: #{_causal_vae_forward_impl.1} parent=71 // pred_check
          %p3734 = pneg %p296
        $region78: #{_causal_vae_forward_impl.1} parent=71 // pred_check_branch
          %3736 = sbr.rel (%p3734) target = $region80
        $region79: #{_causal_vae_forward_impl.1} parent=71 // pred_region
          %s3737 = smul.u32 32, %s27
          %p3738 = scmp.lt.s32.totalorder %s3737, 63
          %s3739 = scalar_select %p3738, %s3737, 63
          %s3740 = smul.addr %s3739, 3
          %s3741 = smul.addr %s3740, 8
          %s3742 = scalar_lea.vmem %s11, %s3741
        $region80: #{_causal_vae_forward_impl.1} parent=71 // pred_fallthru
          _
      $region72: #{_causal_vae_forward_impl.1} parent=5 // pred_fallthru
        _
    $region6: #{_causal_vae_forward_impl.1} parent=1 // loop_footer
      %s25 = sadd.s32 1, %s21
    $region7: #{_causal_vae_forward_impl.1} parent=1 // loop_footer_branch
      %20 = sbr.rel target = $region3
    $region8: #{_causal_vae_forward_impl.1} parent=1 // loop_exit
      _
    %3743 = vsyncpa [#allocation3], 1
    %s3744 = scalar_lea.sflag [#allocation3], 1
    %3745 = vsyncpa %s3744, 1

</llo_original>
